<compile_context>
chip_gen: v5e
topology: v5e:2x2
jax: 0.10.0
libtpu: 0.0.40
codegen_flags: <defaults>
</compile_context>

<pallas_src>
import functools

import jax
import jax.numpy as jnp
from jax.experimental import pallas as pl
from jax.experimental.pallas import tpu as pltpu

LOSS_TYPE = {'ce_loss': {'ce_loss0': 1.0}}
BASE_LOSS_DICT = {'ce_loss': 0}


def _round_up(x, m):
    return (x + m - 1) // m * m


# ----------------------------------------------------------------------------
# Fused kernel (per batch element):
#   normalize (FMA) -> 3x3 conv as 9 shifted-slice matmuls -> +bias -> ReLU
#   -> masked global average pool -> linear head -> lane-dense logits row
# ----------------------------------------------------------------------------
def _fused_backbone_kernel(H, W, C, inv_hw,
                           x_ref, scale_ref, shift_ref, mask_ref,
                           wconv_ref, bconv_ref, wcls_ref, bcls_ref, out_ref):
    # x_ref block: (1, (H+3)*(W+2), C) raw image, halo-padded with the value
    #              that normalizes to exactly 0 (so zero-padding semantics of
    #              the original "normalize then pad" pipeline are preserved).
    # Conv output is computed on an (H, W+2) grid; the 2 junk columns per row
    # are excluded from the GAP via mask_ref.
    Wp = W + 2
    P = H * Wp                                     # rows of the conv matmul
    hid_p = wconv_ref.shape[1]                     # HID padded to 128

    acc = jnp.zeros((P, hid_p), jnp.float32)
    for t in range(9):                             # static unrolled taps
        dy, dx = t // 3, t % 3
        s = dy * Wp + dx                           # static shifted-slice start
        # normalize the tap slice in-kernel: one FMA, VPU work hidden under MXU
        xt = x_ref[0, s:s + P, :] * scale_ref[...] + shift_ref[...]   # (P, C)
        acc = acc + jnp.dot(xt, wconv_ref[t * C:(t + 1) * C, :],
                            preferred_element_type=jnp.float32)

    h = jnp.maximum(acc + bconv_ref[...], 0.0)                        # ReLU
    # masked GAP: junk columns (w >= W) zeroed, divide by true HW
    g = jnp.sum(h * mask_ref[...], axis=0, keepdims=True) * inv_hw    # (1,HIDp)
    logits = jnp.dot(g, wcls_ref[...],
                     preferred_element_type=jnp.float32) + bcls_ref[...]
    out_ref[0] = logits                                               # (1,NCp)


def backbone_classifier(img_nchw, normalize, params):
    """Normalize + stand-in backbone classifier, one pallas_call."""
    B, C, H, W = img_nchw.shape
    mean = jnp.asarray(normalize['mean'], jnp.float32)
    std = jnp.asarray(normalize['std'], jnp.float32)
    div = float(normalize['div_value'])

    # (x/div - mean)/std  ==  x*scale + shift
    scale = (1.0 / (div * std)).reshape(1, C)
    shift = (-mean / std).reshape(1, C)

    # NCHW -> NHWC, halo pad (1 top, 2 bottom, 1 left, 1 right) with the
    # raw-space value that maps to 0 after normalization, flatten spatial.
    x = jnp.transpose(img_nchw, (0, 2, 3, 1)).astype(jnp.float32)
    pad_val = (mean * div).reshape(1, 1, 1, C)
    Hp, Wp = H + 3, W + 2          # extra bottom row keeps all tap slices in-bounds
    xp = jnp.broadcast_to(pad_val, (B, Hp, Wp, C))
    xp = xp.at[:, 1:H + 1, 1:W + 1, :].set(x)
    xp = xp.reshape(B, Hp * Wp, C)

    # GAP validity mask over the flattened (h, w) conv-output rows: w < W
    P = H * Wp
    col = jnp.arange(P, dtype=jnp.int32) % Wp
    gap_mask = (col < W).astype(jnp.float32).reshape(P, 1)

    # Pad weights once (wrapper-side) to lane-dense, MXU-friendly shapes.
    conv_w = params['conv_w'].astype(jnp.float32)        # (9*C, HID)
    conv_b = params['conv_b'].astype(jnp.float32)        # (HID,)
    cls_w = params['cls_w'].astype(jnp.float32)          # (HID, NC)
    cls_b = params['cls_b'].astype(jnp.float32)          # (NC,)
    KC, HID = conv_w.shape
    NC = cls_w.shape[1]
    HID_P = _round_up(HID, 128)
    NC_P = _round_up(NC, 128)
    conv_w_p = jnp.zeros((KC, HID_P), jnp.float32).at[:, :HID].set(conv_w)
    conv_b_p = jnp.zeros((1, HID_P), jnp.float32).at[:, :HID].set(conv_b)
    cls_w_p = jnp.zeros((HID_P, NC_P), jnp.float32).at[:HID, :NC].set(cls_w)
    cls_b_p = jnp.zeros((1, NC_P), jnp.float32).at[:, :NC].set(cls_b)

    kernel = functools.partial(_fused_backbone_kernel, H, W, C,
                               float(1.0 / (H * W)))

    out = pl.pallas_call(
        kernel,
        out_shape=jax.ShapeDtypeStruct((B, 1, NC_P), jnp.float32),
        grid_spec=pltpu.PrefetchScalarGridSpec(
            num_scalar_prefetch=0,
            grid=(B,),
            in_specs=[
                pl.BlockSpec((1, Hp * Wp, C), lambda b: (b, 0, 0)),   # image
                pl.BlockSpec((1, C), lambda b: (0, 0)),               # scale
                pl.BlockSpec((1, C), lambda b: (0, 0)),               # shift
                pl.BlockSpec((P, 1), lambda b: (0, 0)),               # GAP mask
                pl.BlockSpec((KC, HID_P), lambda b: (0, 0)),          # conv W
                pl.BlockSpec((1, HID_P), lambda b: (0, 0)),           # conv b
                pl.BlockSpec((HID_P, NC_P), lambda b: (0, 0)),        # cls W
                pl.BlockSpec((1, NC_P), lambda b: (0, 0)),            # cls b
            ],
            out_specs=pl.BlockSpec((1, 1, NC_P), lambda b: (b, 0, 0)),
        ),
        compiler_params=pltpu.CompilerParams(
            dimension_semantics=("parallel",)),     # both v7x TCs get work
    )(xp, scale, shift, gap_mask, conv_w_p, conv_b_p, cls_w_p, cls_b_p)

    return out.reshape(B, NC_P)[:, :NC]


# ----------------------------------------------------------------------------
# BaseModel.forward equivalent
# ----------------------------------------------------------------------------
def base_model_forward(params, configer, data_dict):
    img = data_dict['img']                     # NCHW, like the PyTorch module
    label = data_dict['label']                 # (B, 1) int32

    normalize = configer['data.normalize']
    out = backbone_classifier(img, normalize, params)

    out_dict = {'out': out}
    label_dict = {'out': label[:, 0]}
    loss_dict = {}
    valid_loss_dict = LOSS_TYPE[configer['loss.loss_type']]
    if 'ce_loss' in valid_loss_dict:   # matches the PyTorch code exactly
        loss_dict['ce_loss'] = dict(
            params=[out, label[:, 0]],
            type=jnp.array([BASE_LOSS_DICT['ce_loss']], jnp.int32),
            weight=jnp.array([valid_loss_dict['ce_loss']], jnp.float32))
    return out_dict, label_dict, loss_dict


# ----------------------------------------------------------------------------
# Deterministic parameter init (stand-in backbone)
# ----------------------------------------------------------------------------
def init_params(key, in_ch, hidden, num_classes):
    k1, k2, k3, k4 = jax.random.split(key, 4)
    # conv weight laid out to match tap ordering: (3,3,C,hidden)->(9*C,hidden)
    conv_w = 0.1 * jax.random.normal(k1, (3, 3, in_ch, hidden), jnp.float32)
    conv_w = conv_w.reshape(9 * in_ch, hidden)
    conv_b = 0.01 * jax.random.normal(k2, (hidden,), jnp.float32)
    cls_w = 0.1 * jax.random.normal(k3, (hidden, num_classes), jnp.float32)
    cls_b = 0.01 * jax.random.normal(k4, (num_classes,), jnp.float32)
    return dict(conv_w=conv_w, conv_b=conv_b, cls_w=cls_w, cls_b=cls_b)


# ----------------------------------------------------------------------------
# Pure-JAX reference of the stand-in forward (for a correctness check)
# ----------------------------------------------------------------------------
def _reference_logits(img_nchw, normalize, params):
    B, C, H, W = img_nchw.shape
    mean = jnp.asarray(normalize['mean'], jnp.float32).reshape(1, 1, 1, C)
    std = jnp.asarray(normalize['std'], jnp.float32).reshape(1, 1, 1, C)
    div = float(normalize['div_value'])
    x = jnp.transpose(img_nchw, (0, 2, 3, 1)).astype(jnp.float32)
    xn = (x / div - mean) / std
    xpad = jnp.pad(xn, ((0, 0), (1, 1), (1, 1), (0, 0)))
    cols = [xpad[:, dy:dy + H, dx:dx + W, :]
            for dy in range(3) for dx in range(3)]
    patches = jnp.stack(cols, axis=3).reshape(B, H * W, 9 * C)
    h = jnp.maximum(
        jnp.einsum('bpk,kh->bph', patches, params['conv_w'],
                   precision=jax.lax.Precision.HIGHEST) + params['conv_b'],
        0.0)
    g = jnp.mean(h, axis=1)
    return jnp.dot(g, params['cls_w'],
                   precision=jax.lax.Precision.HIGHEST) + params['cls_b']


if __name__ == "__main__":
    B, C, H, W = 2, 4, 16, 16
    HIDDEN, NUM_CLASSES = 32, 8

    key = jax.random.PRNGKey(0)
    k_img, k_lab, k_par = jax.random.split(key, 3)

    img = 255.0 * jax.random.uniform(k_img, (B, C, H, W), jnp.float32)
    label = jax.random.randint(k_lab, (B, 1), 0, NUM_CLASSES, jnp.int32)

    configer = {
        'data.normalize': {
            'div_value': 255.0,
            'mean': [0.485, 0.456, 0.406, 0.449],
            'std': [0.229, 0.224, 0.225, 0.226],
        },
        'loss.loss_type': 'ce_loss',
        'data.num_classes': [NUM_CLASSES],
    }
    params = init_params(k_par, C, HIDDEN, NUM_CLASSES)

    data_dict = {'img': img, 'label': label}
    out_dict, label_dict, loss_dict = base_model_forward(params, configer,
                                                         data_dict)
    jax.block_until_ready(out_dict['out'])
    jax.block_until_ready(label_dict['out'])

    assert out_dict['out'].shape == (B, NUM_CLASSES)
    assert label_dict['out'].shape == (B,)

    # numerical sanity check against the pure-JAX reference
    ref = jax.block_until_ready(
        _reference_logits(img, configer['data.normalize'], params))
    assert jnp.allclose(out_dict['out'], ref, rtol=5e-2, atol=5e-2), (
        "Pallas output diverges from pure-JAX reference")

    print("KERNEL_OK")
</pallas_src>

<mosaic_0001>
module attributes {stable_mosaic.version = 11 : i64} {
  func.func @_fused_backbone_kernel(%arg0: i32, %arg1: memref<1x342x4xf32, #tpu.memory_space<vmem>>, %arg2: memref<1x4xf32, #tpu.memory_space<vmem>>, %arg3: memref<1x4xf32, #tpu.memory_space<vmem>>, %arg4: memref<288x1xf32, #tpu.memory_space<vmem>>, %arg5: memref<36x128xf32, #tpu.memory_space<vmem>>, %arg6: memref<1x128xf32, #tpu.memory_space<vmem>>, %arg7: memref<128x128xf32, #tpu.memory_space<vmem>>, %arg8: memref<1x128xf32, #tpu.memory_space<vmem>>, %arg9: memref<1x1x128xf32, #tpu.memory_space<vmem>>) attributes {dimension_semantics = [#tpu.dimension_semantics<parallel>], iteration_bounds = array<i64: 2>, scalar_prefetch = 0 : i64, scratch_operands = 0 : i64, tpu.core_type = #tpu.core_type<tc>, window_params = [{transform_indices = @transform_0, window_bounds = array<i64: 1, 342, 4>}, {pipeline_mode = #tpu.pipeline_mode<synchronous>, transform_indices = @transform_1, window_bounds = array<i64: 1, 4>}, {pipeline_mode = #tpu.pipeline_mode<synchronous>, transform_indices = @transform_2, window_bounds = array<i64: 1, 4>}, {pipeline_mode = #tpu.pipeline_mode<synchronous>, transform_indices = @transform_3, window_bounds = array<i64: 288, 1>}, {pipeline_mode = #tpu.pipeline_mode<synchronous>, transform_indices = @transform_4, window_bounds = array<i64: 36, 128>}, {pipeline_mode = #tpu.pipeline_mode<synchronous>, transform_indices = @transform_5, window_bounds = array<i64: 1, 128>}, {pipeline_mode = #tpu.pipeline_mode<synchronous>, transform_indices = @transform_6, window_bounds = array<i64: 128, 128>}, {pipeline_mode = #tpu.pipeline_mode<synchronous>, transform_indices = @transform_7, window_bounds = array<i64: 1, 128>}, {transform_indices = @transform_8, window_bounds = array<i64: 1, 1, 128>}]} {
    %cst = arith.constant 0.000000e+00 : f32
    %0 = vector.broadcast %cst : f32 to vector<288x128xf32>
    %c0 = arith.constant 0 : index
    %c0_0 = arith.constant 0 : index
    %c0_1 = arith.constant 0 : index
    %1 = vector.load %arg1[%c0, %c0_0, %c0_1] : memref<1x342x4xf32, #tpu.memory_space<vmem>>, vector<1x288x4xf32>
    %2 = vector.shape_cast %1 : vector<1x288x4xf32> to vector<288x4xf32>
    %c0_2 = arith.constant 0 : index
    %c0_3 = arith.constant 0 : index
    %3 = vector.load %arg2[%c0_2, %c0_3] : memref<1x4xf32, #tpu.memory_space<vmem>>, vector<1x4xf32>
    %4 = vector.broadcast %3 : vector<1x4xf32> to vector<288x4xf32>
    %5 = arith.mulf %2, %4 : vector<288x4xf32>
    %c0_4 = arith.constant 0 : index
    %c0_5 = arith.constant 0 : index
    %6 = vector.load %arg3[%c0_4, %c0_5] : memref<1x4xf32, #tpu.memory_space<vmem>>, vector<1x4xf32>
    %7 = vector.broadcast %6 : vector<1x4xf32> to vector<288x4xf32>
    %8 = arith.addf %5, %7 : vector<288x4xf32>
    %c0_6 = arith.constant 0 : index
    %c0_7 = arith.constant 0 : index
    %9 = vector.load %arg5[%c0_6, %c0_7] : memref<36x128xf32, #tpu.memory_space<vmem>>, vector<4x128xf32>
    %cst_8 = arith.constant dense<0.000000e+00> : vector<288x128xf32>
    %10 = tpu.matmul %8, %9, %cst_8 {dimension_numbers = #tpu.dot_dimension_numbers<[1], [0], [0], [1], [0, 0, 1, 1], [], []>} : vector<288x4xf32>, vector<4x128xf32>, vector<288x128xf32> -> vector<288x128xf32>
    %11 = arith.addf %0, %10 : vector<288x128xf32>
    %c0_9 = arith.constant 0 : index
    %c1 = arith.constant 1 : index
    %c0_10 = arith.constant 0 : index
    %12 = vector.load %arg1[%c0_9, %c1, %c0_10] : memref<1x342x4xf32, #tpu.memory_space<vmem>>, vector<1x288x4xf32>
    %13 = vector.shape_cast %12 : vector<1x288x4xf32> to vector<288x4xf32>
    %c0_11 = arith.constant 0 : index
    %c0_12 = arith.constant 0 : index
    %14 = vector.load %arg2[%c0_11, %c0_12] : memref<1x4xf32, #tpu.memory_space<vmem>>, vector<1x4xf32>
    %15 = vector.broadcast %14 : vector<1x4xf32> to vector<288x4xf32>
    %16 = arith.mulf %13, %15 : vector<288x4xf32>
    %c0_13 = arith.constant 0 : index
    %c0_14 = arith.constant 0 : index
    %17 = vector.load %arg3[%c0_13, %c0_14] : memref<1x4xf32, #tpu.memory_space<vmem>>, vector<1x4xf32>
    %18 = vector.broadcast %17 : vector<1x4xf32> to vector<288x4xf32>
    %19 = arith.addf %16, %18 : vector<288x4xf32>
    %c4 = arith.constant 4 : index
    %c0_15 = arith.constant 0 : index
    %20 = vector.load %arg5[%c4, %c0_15] : memref<36x128xf32, #tpu.memory_space<vmem>>, vector<4x128xf32>
    %cst_16 = arith.constant dense<0.000000e+00> : vector<288x128xf32>
    %21 = tpu.matmul %19, %20, %cst_16 {dimension_numbers = #tpu.dot_dimension_numbers<[1], [0], [0], [1], [0, 0, 1, 1], [], []>} : vector<288x4xf32>, vector<4x128xf32>, vector<288x128xf32> -> vector<288x128xf32>
    %22 = arith.addf %11, %21 : vector<288x128xf32>
    %c0_17 = arith.constant 0 : index
    %c2 = arith.constant 2 : index
    %c0_18 = arith.constant 0 : index
    %23 = vector.load %arg1[%c0_17, %c2, %c0_18] : memref<1x342x4xf32, #tpu.memory_space<vmem>>, vector<1x288x4xf32>
    %24 = vector.shape_cast %23 : vector<1x288x4xf32> to vector<288x4xf32>
    %c0_19 = arith.constant 0 : index
    %c0_20 = arith.constant 0 : index
    %25 = vector.load %arg2[%c0_19, %c0_20] : memref<1x4xf32, #tpu.memory_space<vmem>>, vector<1x4xf32>
    %26 = vector.broadcast %25 : vector<1x4xf32> to vector<288x4xf32>
    %27 = arith.mulf %24, %26 : vector<288x4xf32>
    %c0_21 = arith.constant 0 : index
    %c0_22 = arith.constant 0 : index
    %28 = vector.load %arg3[%c0_21, %c0_22] : memref<1x4xf32, #tpu.memory_space<vmem>>, vector<1x4xf32>
    %29 = vector.broadcast %28 : vector<1x4xf32> to vector<288x4xf32>
    %30 = arith.addf %27, %29 : vector<288x4xf32>
    %c8 = arith.constant 8 : index
    %c0_23 = arith.constant 0 : index
    %31 = vector.load %arg5[%c8, %c0_23] : memref<36x128xf32, #tpu.memory_space<vmem>>, vector<4x128xf32>
    %cst_24 = arith.constant dense<0.000000e+00> : vector<288x128xf32>
    %32 = tpu.matmul %30, %31, %cst_24 {dimension_numbers = #tpu.dot_dimension_numbers<[1], [0], [0], [1], [0, 0, 1, 1], [], []>} : vector<288x4xf32>, vector<4x128xf32>, vector<288x128xf32> -> vector<288x128xf32>
    %33 = arith.addf %22, %32 : vector<288x128xf32>
    %c0_25 = arith.constant 0 : index
    %c18 = arith.constant 18 : index
    %c0_26 = arith.constant 0 : index
    %34 = vector.load %arg1[%c0_25, %c18, %c0_26] : memref<1x342x4xf32, #tpu.memory_space<vmem>>, vector<1x288x4xf32>
    %35 = vector.shape_cast %34 : vector<1x288x4xf32> to vector<288x4xf32>
    %c0_27 = arith.constant 0 : index
    %c0_28 = arith.constant 0 : index
    %36 = vector.load %arg2[%c0_27, %c0_28] : memref<1x4xf32, #tpu.memory_space<vmem>>, vector<1x4xf32>
    %37 = vector.broadcast %36 : vector<1x4xf32> to vector<288x4xf32>
    %38 = arith.mulf %35, %37 : vector<288x4xf32>
    %c0_29 = arith.constant 0 : index
    %c0_30 = arith.constant 0 : index
    %39 = vector.load %arg3[%c0_29, %c0_30] : memref<1x4xf32, #tpu.memory_space<vmem>>, vector<1x4xf32>
    %40 = vector.broadcast %39 : vector<1x4xf32> to vector<288x4xf32>
    %41 = arith.addf %38, %40 : vector<288x4xf32>
    %c12 = arith.constant 12 : index
    %c0_31 = arith.constant 0 : index
    %42 = vector.load %arg5[%c12, %c0_31] : memref<36x128xf32, #tpu.memory_space<vmem>>, vector<4x128xf32>
    %cst_32 = arith.constant dense<0.000000e+00> : vector<288x128xf32>
    %43 = tpu.matmul %41, %42, %cst_32 {dimension_numbers = #tpu.dot_dimension_numbers<[1], [0], [0], [1], [0, 0, 1, 1], [], []>} : vector<288x4xf32>, vector<4x128xf32>, vector<288x128xf32> -> vector<288x128xf32>
    %44 = arith.addf %33, %43 : vector<288x128xf32>
    %c0_33 = arith.constant 0 : index
    %c19 = arith.constant 19 : index
    %c0_34 = arith.constant 0 : index
    %45 = vector.load %arg1[%c0_33, %c19, %c0_34] : memref<1x342x4xf32, #tpu.memory_space<vmem>>, vector<1x288x4xf32>
    %46 = vector.shape_cast %45 : vector<1x288x4xf32> to vector<288x4xf32>
    %c0_35 = arith.constant 0 : index
    %c0_36 = arith.constant 0 : index
    %47 = vector.load %arg2[%c0_35, %c0_36] : memref<1x4xf32, #tpu.memory_space<vmem>>, vector<1x4xf32>
    %48 = vector.broadcast %47 : vector<1x4xf32> to vector<288x4xf32>
    %49 = arith.mulf %46, %48 : vector<288x4xf32>
    %c0_37 = arith.constant 0 : index
    %c0_38 = arith.constant 0 : index
    %50 = vector.load %arg3[%c0_37, %c0_38] : memref<1x4xf32, #tpu.memory_space<vmem>>, vector<1x4xf32>
    %51 = vector.broadcast %50 : vector<1x4xf32> to vector<288x4xf32>
    %52 = arith.addf %49, %51 : vector<288x4xf32>
    %c16 = arith.constant 16 : index
    %c0_39 = arith.constant 0 : index
    %53 = vector.load %arg5[%c16, %c0_39] : memref<36x128xf32, #tpu.memory_space<vmem>>, vector<4x128xf32>
    %cst_40 = arith.constant dense<0.000000e+00> : vector<288x128xf32>
    %54 = tpu.matmul %52, %53, %cst_40 {dimension_numbers = #tpu.dot_dimension_numbers<[1], [0], [0], [1], [0, 0, 1, 1], [], []>} : vector<288x4xf32>, vector<4x128xf32>, vector<288x128xf32> -> vector<288x128xf32>
    %55 = arith.addf %44, %54 : vector<288x128xf32>
    %c0_41 = arith.constant 0 : index
    %c20 = arith.constant 20 : index
    %c0_42 = arith.constant 0 : index
    %56 = vector.load %arg1[%c0_41, %c20, %c0_42] : memref<1x342x4xf32, #tpu.memory_space<vmem>>, vector<1x288x4xf32>
    %57 = vector.shape_cast %56 : vector<1x288x4xf32> to vector<288x4xf32>
    %c0_43 = arith.constant 0 : index
    %c0_44 = arith.constant 0 : index
    %58 = vector.load %arg2[%c0_43, %c0_44] : memref<1x4xf32, #tpu.memory_space<vmem>>, vector<1x4xf32>
    %59 = vector.broadcast %58 : vector<1x4xf32> to vector<288x4xf32>
    %60 = arith.mulf %57, %59 : vector<288x4xf32>
    %c0_45 = arith.constant 0 : index
    %c0_46 = arith.constant 0 : index
    %61 = vector.load %arg3[%c0_45, %c0_46] : memref<1x4xf32, #tpu.memory_space<vmem>>, vector<1x4xf32>
    %62 = vector.broadcast %61 : vector<1x4xf32> to vector<288x4xf32>
    %63 = arith.addf %60, %62 : vector<288x4xf32>
    %c20_47 = arith.constant 20 : index
    %c0_48 = arith.constant 0 : index
    %64 = vector.load %arg5[%c20_47, %c0_48] : memref<36x128xf32, #tpu.memory_space<vmem>>, vector<4x128xf32>
    %cst_49 = arith.constant dense<0.000000e+00> : vector<288x128xf32>
    %65 = tpu.matmul %63, %64, %cst_49 {dimension_numbers = #tpu.dot_dimension_numbers<[1], [0], [0], [1], [0, 0, 1, 1], [], []>} : vector<288x4xf32>, vector<4x128xf32>, vector<288x128xf32> -> vector<288x128xf32>
    %66 = arith.addf %55, %65 : vector<288x128xf32>
    %c0_50 = arith.constant 0 : index
    %c36 = arith.constant 36 : index
    %c0_51 = arith.constant 0 : index
    %67 = vector.load %arg1[%c0_50, %c36, %c0_51] : memref<1x342x4xf32, #tpu.memory_space<vmem>>, vector<1x288x4xf32>
    %68 = vector.shape_cast %67 : vector<1x288x4xf32> to vector<288x4xf32>
    %c0_52 = arith.constant 0 : index
    %c0_53 = arith.constant 0 : index
    %69 = vector.load %arg2[%c0_52, %c0_53] : memref<1x4xf32, #tpu.memory_space<vmem>>, vector<1x4xf32>
    %70 = vector.broadcast %69 : vector<1x4xf32> to vector<288x4xf32>
    %71 = arith.mulf %68, %70 : vector<288x4xf32>
    %c0_54 = arith.constant 0 : index
    %c0_55 = arith.constant 0 : index
    %72 = vector.load %arg3[%c0_54, %c0_55] : memref<1x4xf32, #tpu.memory_space<vmem>>, vector<1x4xf32>
    %73 = vector.broadcast %72 : vector<1x4xf32> to vector<288x4xf32>
    %74 = arith.addf %71, %73 : vector<288x4xf32>
    %c24 = arith.constant 24 : index
    %c0_56 = arith.constant 0 : index
    %75 = vector.load %arg5[%c24, %c0_56] : memref<36x128xf32, #tpu.memory_space<vmem>>, vector<4x128xf32>
    %cst_57 = arith.constant dense<0.000000e+00> : vector<288x128xf32>
    %76 = tpu.matmul %74, %75, %cst_57 {dimension_numbers = #tpu.dot_dimension_numbers<[1], [0], [0], [1], [0, 0, 1, 1], [], []>} : vector<288x4xf32>, vector<4x128xf32>, vector<288x128xf32> -> vector<288x128xf32>
    %77 = arith.addf %66, %76 : vector<288x128xf32>
    %c0_58 = arith.constant 0 : index
    %c37 = arith.constant 37 : index
    %c0_59 = arith.constant 0 : index
    %78 = vector.load %arg1[%c0_58, %c37, %c0_59] : memref<1x342x4xf32, #tpu.memory_space<vmem>>, vector<1x288x4xf32>
    %79 = vector.shape_cast %78 : vector<1x288x4xf32> to vector<288x4xf32>
    %c0_60 = arith.constant 0 : index
    %c0_61 = arith.constant 0 : index
    %80 = vector.load %arg2[%c0_60, %c0_61] : memref<1x4xf32, #tpu.memory_space<vmem>>, vector<1x4xf32>
    %81 = vector.broadcast %80 : vector<1x4xf32> to vector<288x4xf32>
    %82 = arith.mulf %79, %81 : vector<288x4xf32>
    %c0_62 = arith.constant 0 : index
    %c0_63 = arith.constant 0 : index
    %83 = vector.load %arg3[%c0_62, %c0_63] : memref<1x4xf32, #tpu.memory_space<vmem>>, vector<1x4xf32>
    %84 = vector.broadcast %83 : vector<1x4xf32> to vector<288x4xf32>
    %85 = arith.addf %82, %84 : vector<288x4xf32>
    %c28 = arith.constant 28 : index
    %c0_64 = arith.constant 0 : index
    %86 = vector.load %arg5[%c28, %c0_64] : memref<36x128xf32, #tpu.memory_space<vmem>>, vector<4x128xf32>
    %cst_65 = arith.constant dense<0.000000e+00> : vector<288x128xf32>
    %87 = tpu.matmul %85, %86, %cst_65 {dimension_numbers = #tpu.dot_dimension_numbers<[1], [0], [0], [1], [0, 0, 1, 1], [], []>} : vector<288x4xf32>, vector<4x128xf32>, vector<288x128xf32> -> vector<288x128xf32>
    %88 = arith.addf %77, %87 : vector<288x128xf32>
    %c0_66 = arith.constant 0 : index
    %c38 = arith.constant 38 : index
    %c0_67 = arith.constant 0 : index
    %89 = vector.load %arg1[%c0_66, %c38, %c0_67] : memref<1x342x4xf32, #tpu.memory_space<vmem>>, vector<1x288x4xf32>
    %90 = vector.shape_cast %89 : vector<1x288x4xf32> to vector<288x4xf32>
    %c0_68 = arith.constant 0 : index
    %c0_69 = arith.constant 0 : index
    %91 = vector.load %arg2[%c0_68, %c0_69] : memref<1x4xf32, #tpu.memory_space<vmem>>, vector<1x4xf32>
    %92 = vector.broadcast %91 : vector<1x4xf32> to vector<288x4xf32>
    %93 = arith.mulf %90, %92 : vector<288x4xf32>
    %c0_70 = arith.constant 0 : index
    %c0_71 = arith.constant 0 : index
    %94 = vector.load %arg3[%c0_70, %c0_71] : memref<1x4xf32, #tpu.memory_space<vmem>>, vector<1x4xf32>
    %95 = vector.broadcast %94 : vector<1x4xf32> to vector<288x4xf32>
    %96 = arith.addf %93, %95 : vector<288x4xf32>
    %c32 = arith.constant 32 : index
    %c0_72 = arith.constant 0 : index
    %97 = vector.load %arg5[%c32, %c0_72] : memref<36x128xf32, #tpu.memory_space<vmem>>, vector<4x128xf32>
    %cst_73 = arith.constant dense<0.000000e+00> : vector<288x128xf32>
    %98 = tpu.matmul %96, %97, %cst_73 {dimension_numbers = #tpu.dot_dimension_numbers<[1], [0], [0], [1], [0, 0, 1, 1], [], []>} : vector<288x4xf32>, vector<4x128xf32>, vector<288x128xf32> -> vector<288x128xf32>
    %99 = arith.addf %88, %98 : vector<288x128xf32>
    %c0_74 = arith.constant 0 : index
    %c0_75 = arith.constant 0 : index
    %100 = vector.load %arg6[%c0_74, %c0_75] : memref<1x128xf32, #tpu.memory_space<vmem>>, vector<1x128xf32>
    %101 = vector.broadcast %100 : vector<1x128xf32> to vector<288x128xf32>
    %102 = arith.addf %99, %101 : vector<288x128xf32>
    %cst_76 = arith.constant 0.000000e+00 : f32
    %103 = vector.broadcast %cst_76 : f32 to vector<288x128xf32>
    %104 = arith.maximumf %102, %103 : vector<288x128xf32>
    %c0_77 = arith.constant 0 : index
    %c0_78 = arith.constant 0 : index
    %105 = vector.load %arg4[%c0_77, %c0_78] : memref<288x1xf32, #tpu.memory_space<vmem>>, vector<288x1xf32>
    %106 = vector.broadcast %105 : vector<288x1xf32> to vector<288x128xf32>
    %107 = arith.mulf %104, %106 : vector<288x128xf32>
    %cst_79 = arith.constant dense<0.000000e+00> : vector<128xf32>
    %108 = vector.multi_reduction <add>, %107, %cst_79 [0] : vector<288x128xf32> to vector<128xf32>
    %109 = vector.shape_cast %108 : vector<128xf32> to vector<1x128xf32>
    %cst_80 = arith.constant 3.906250e-03 : f32
    %110 = vector.broadcast %cst_80 : f32 to vector<1x128xf32>
    %111 = arith.mulf %109, %110 : vector<1x128xf32>
    %c0_81 = arith.constant 0 : index
    %c0_82 = arith.constant 0 : index
    %112 = vector.load %arg7[%c0_81, %c0_82] : memref<128x128xf32, #tpu.memory_space<vmem>>, vector<128x128xf32>
    %cst_83 = arith.constant dense<0.000000e+00> : vector<1x128xf32>
    %113 = tpu.matmul %111, %112, %cst_83 {dimension_numbers = #tpu.dot_dimension_numbers<[1], [0], [0], [1], [0, 0, 1, 1], [], []>} : vector<1x128xf32>, vector<128x128xf32>, vector<1x128xf32> -> vector<1x128xf32>
    %c0_84 = arith.constant 0 : index
    %c0_85 = arith.constant 0 : index
    %114 = vector.load %arg8[%c0_84, %c0_85] : memref<1x128xf32, #tpu.memory_space<vmem>>, vector<1x128xf32>
    %115 = arith.addf %113, %114 : vector<1x128xf32>
    %c0_86 = arith.constant 0 : index
    %c0_87 = arith.constant 0 : index
    %c0_88 = arith.constant 0 : index
    %116 = vector.load %arg9[%c0_86, %c0_87, %c0_88] : memref<1x1x128xf32, #tpu.memory_space<vmem>>, vector<1x1x128xf32>
    %117 = vector.shape_cast %116 : vector<1x1x128xf32> to vector<1x128xf32>
    %118 = vector.shape_cast %115 : vector<1x128xf32> to vector<1x1x128xf32>
    tpu.vector_store %arg9[%c0_86, %c0_87, %c0_88], %118 {strides = array<i32>} : memref<1x1x128xf32, #tpu.memory_space<vmem>>, vector<1x1x128xf32>,
    return
  }
  func.func @transform_0(%arg0: i32) -> (i32, i32, i32) {
    %c0_i32 = arith.constant 0 : i32
    %c0_i32_0 = arith.constant 0 : i32
    %c0_i32_1 = arith.constant 0 : i32
    return %arg0, %c0_i32, %c0_i32_0 : i32, i32, i32
  }
  func.func @transform_1(%arg0: i32) -> (i32, i32) {
    %c0_i32 = arith.constant 0 : i32
    %c0_i32_0 = arith.constant 0 : i32
    %c0_i32_1 = arith.constant 0 : i32
    return %c0_i32, %c0_i32_0 : i32, i32
  }
  func.func @transform_2(%arg0: i32) -> (i32, i32) {
    %c0_i32 = arith.constant 0 : i32
    %c0_i32_0 = arith.constant 0 : i32
    %c0_i32_1 = arith.constant 0 : i32
    return %c0_i32, %c0_i32_0 : i32, i32
  }
  func.func @transform_3(%arg0: i32) -> (i32, i32) {
    %c0_i32 = arith.constant 0 : i32
    %c0_i32_0 = arith.constant 0 : i32
    %c0_i32_1 = arith.constant 0 : i32
    return %c0_i32, %c0_i32_0 : i32, i32
  }
  func.func @transform_4(%arg0: i32) -> (i32, i32) {
    %c0_i32 = arith.constant 0 : i32
    %c0_i32_0 = arith.constant 0 : i32
    %c0_i32_1 = arith.constant 0 : i32
    return %c0_i32, %c0_i32_0 : i32, i32
  }
  func.func @transform_5(%arg0: i32) -> (i32, i32) {
    %c0_i32 = arith.constant 0 : i32
    %c0_i32_0 = arith.constant 0 : i32
    %c0_i32_1 = arith.constant 0 : i32
    return %c0_i32, %c0_i32_0 : i32, i32
  }
  func.func @transform_6(%arg0: i32) -> (i32, i32) {
    %c0_i32 = arith.constant 0 : i32
    %c0_i32_0 = arith.constant 0 : i32
    %c0_i32_1 = arith.constant 0 : i32
    return %c0_i32, %c0_i32_0 : i32, i32
  }
  func.func @transform_7(%arg0: i32) -> (i32, i32) {
    %c0_i32 = arith.constant 0 : i32
    %c0_i32_0 = arith.constant 0 : i32
    %c0_i32_1 = arith.constant 0 : i32
    return %c0_i32, %c0_i32_0 : i32, i32
  }
  func.func @transform_8(%arg0: i32) -> (i32, i32, i32) {
    %c0_i32 = arith.constant 0 : i32
    %c0_i32_0 = arith.constant 0 : i32
    %c0_i32_1 = arith.constant 0 : i32
    return %arg0, %c0_i32, %c0_i32_0 : i32, i32, i32
  }
}

</mosaic_0001>

<llo_original>
// kernel: tpu_custom_call.1
$region0: #{tpu_custom_call.1}
  #allocation0 [shape = 'u32[]', space=smem, size = 0x4, offset = 0x4, fixed_abs, tag = 'smem constant byte address 0x4 - core index']
  #allocation1 [shape = 'u32[72,128]{1,0:T(1,128)}', space=vmem, size = 0x9000, scoped, tag = 'internal scratch']
  %s0 = inlined_call_operand.vmem [shape: f32[2,342,4], index: 0, kind: input, shape index: {}]
  %s1 = inlined_call_operand.vmem [shape: f32[1,4], index: 1, kind: input, shape index: {}]
  %s2 = inlined_call_operand.vmem [shape: f32[1,4], index: 2, kind: input, shape index: {}]
  %s3 = inlined_call_operand.vmem [shape: f32[288,1], index: 3, kind: input, shape index: {}]
  %s4 = inlined_call_operand.vmem [shape: f32[36,128], index: 4, kind: input, shape index: {}]
  %s5 = inlined_call_operand.vmem [shape: f32[1,128], index: 5, kind: input, shape index: {}]
  %s6 = inlined_call_operand.vmem [shape: f32[128,128], index: 6, kind: input, shape index: {}]
  %s7 = inlined_call_operand.vmem [shape: f32[1,128], index: 7, kind: input, shape index: {}]
  %s8 = inlined_call_operand.hbm [shape: f32[2,1,128], index: 8, kind: output, shape index: {}]
  %s9 = sld [smem:[#allocation0]]
  $region65: #{tpu_custom_call.1} parent=0
    _
  %s11 = ssub.s32 1, %s9
  %s12 = scalar_select 0, %s11, %s9
  $region1: #{tpu_custom_call.1} parent=0
    #allocation2 [shape = 'u8[1024]{0}', space=vmem, size = 0x400, scoped, tag = 'output window, operand 0']
    #allocation3 [shape = 's32[2]{0}', space=sflag, size = 0x8, scoped, tag = 'scoped memory for tpu_custom_call.1']
    %13 = vsyncpa [#allocation3], 0
    %s14 = scalar_lea.sflag [#allocation3], 1
    %15 = vsyncpa %s14, 0
    loop: start=0, step=1, limit=4
    $region2: #{tpu_custom_call.1} parent=1 // loop_pre_header
      _
    $region3: #{tpu_custom_call.1} parent=1 // loop_header
      %s17 = sphi 0, %s21
      %p18 = scmp.ge.s32.totalorder %s17, 4
      %s27 = sphi 0, %s29
      %s30 = sphi 0, %s27
      %s31 = sphi 0, %s30
      %s47 = sphi 0, %s31
      %s51 = sphi 0, %s51
      %s53 = sphi 0, %s51
      %s54 = sphi 0, %s53
      %s68 = sphi 0, %s54
      %s72 = sphi 0, %s72
      %s74 = sphi 0, %s72
      %s75 = sphi 0, %s74
      %s89 = sphi 0, %s75
      %s93 = sphi 0, %s93
      %s95 = sphi 0, %s93
      %s96 = sphi 0, %s95
      %s110 = sphi 0, %s96
      %s114 = sphi 0, %s114
      %s116 = sphi 0, %s114
      %s117 = sphi 0, %s116
      %s131 = sphi 0, %s117
      %s135 = sphi 0, %s135
      %s137 = sphi 0, %s135
      %s138 = sphi 0, %s137
      %s152 = sphi 0, %s138
      %s156 = sphi 0, %s156
      %s158 = sphi 0, %s156
      %s159 = sphi 0, %s158
      %s173 = sphi 0, %s159
      %s177 = sphi 0, %s177
      %s179 = sphi 0, %s177
      %s180 = sphi 0, %s179
      %s194 = sphi 0, %s180
      %s200 = sphi 0, %s202
      %s203 = sphi 0, %s200
      %s204 = sphi 0, %s203
      %s220 = sphi 0, %s204
    $region4: #{tpu_custom_call.1} parent=1 // loop_header_branch
      %20 = sbr.rel (%p18) target = $region8
    $region5: #{tpu_custom_call.1} parent=1 // loop_body
      %s22 = ssub.s32 %s17, 1
      %s23 = ssub.s32 %s17, 2
      %s24 = sadd.s32 %s17, 1
      %s25 = ssub.s32 %s17, %s24
      %p26 = scmp.eq.s32.totalorder %s25, 0
      %s28 = sadd.s32 %s27, 1
      %s29 = scalar_select %p26, %s27, %s28
      %p32 = pneg %p26
      %p33 = scmp.eq.s32.totalorder %s17, 1
      %p34 = por %p32, %p33
      %p35 = scmp.ne.s32.totalorder %s27, %s30
      %p36 = scmp.eq.s32.totalorder %s17, 0
      %p37 = por %p35, %p36
      %p38 = scmp.ne.s32.totalorder %s27, %s30
      %p39 = scmp.eq.s32.totalorder %s22, 1
      %p40 = por %p38, %p39
      %p41 = scmp.ne.s32.totalorder %s30, %s31
      %p42 = scmp.eq.s32.totalorder %s22, 0
      %p43 = por %p41, %p42
      %p44 = scmp.ne.s32.totalorder %s30, %s31
      %p45 = scmp.eq.s32.totalorder %s23, 1
      %p46 = por %p44, %p45
      %p48 = scmp.ne.s32.totalorder %s31, %s47
      %p49 = scmp.eq.s32.totalorder %s23, 0
      %p50 = por %p48, %p49
      %s52 = sadd.s32 %s51, 1
      %p55 = scmp.eq.s32.totalorder %s17, 1
      %p56 = scmp.ne.s32.totalorder %s51, %s53
      %p57 = scmp.eq.s32.totalorder %s17, 0
      %p58 = por %p56, %p57
      %p59 = scmp.ne.s32.totalorder %s51, %s53
      %p60 = scmp.eq.s32.totalorder %s22, 1
      %p61 = por %p59, %p60
      %p62 = scmp.ne.s32.totalorder %s53, %s54
      %p63 = scmp.eq.s32.totalorder %s22, 0
      %p64 = por %p62, %p63
      %p65 = scmp.ne.s32.totalorder %s53, %s54
      %p66 = scmp.eq.s32.totalorder %s23, 1
      %p67 = por %p65, %p66
      %p69 = scmp.ne.s32.totalorder %s54, %s68
      %p70 = scmp.eq.s32.totalorder %s23, 0
      %p71 = por %p69, %p70
      %s73 = sadd.s32 %s72, 1
      %p76 = scmp.eq.s32.totalorder %s17, 1
      %p77 = scmp.ne.s32.totalorder %s72, %s74
      %p78 = scmp.eq.s32.totalorder %s17, 0
      %p79 = por %p77, %p78
      %p80 = scmp.ne.s32.totalorder %s72, %s74
      %p81 = scmp.eq.s32.totalorder %s22, 1
      %p82 = por %p80, %p81
      %p83 = scmp.ne.s32.totalorder %s74, %s75
      %p84 = scmp.eq.s32.totalorder %s22, 0
      %p85 = por %p83, %p84
      %p86 = scmp.ne.s32.totalorder %s74, %s75
      %p87 = scmp.eq.s32.totalorder %s23, 1
      %p88 = por %p86, %p87
      %p90 = scmp.ne.s32.totalorder %s75, %s89
      %p91 = scmp.eq.s32.totalorder %s23, 0
      %p92 = por %p90, %p91
      %s94 = sadd.s32 %s93, 1
      %p97 = scmp.eq.s32.totalorder %s17, 1
      %p98 = scmp.ne.s32.totalorder %s93, %s95
      %p99 = scmp.eq.s32.totalorder %s17, 0
      %p100 = por %p98, %p99
      %p101 = scmp.ne.s32.totalorder %s93, %s95
      %p102 = scmp.eq.s32.totalorder %s22, 1
      %p103 = por %p101, %p102
      %p104 = scmp.ne.s32.totalorder %s95, %s96
      %p105 = scmp.eq.s32.totalorder %s22, 0
      %p106 = por %p104, %p105
      %p107 = scmp.ne.s32.totalorder %s95, %s96
      %p108 = scmp.eq.s32.totalorder %s23, 1
      %p109 = por %p107, %p108
      %p111 = scmp.ne.s32.totalorder %s96, %s110
      %p112 = scmp.eq.s32.totalorder %s23, 0
      %p113 = por %p111, %p112
      %s115 = sadd.s32 %s114, 1
      %p118 = scmp.eq.s32.totalorder %s17, 1
      %p119 = scmp.ne.s32.totalorder %s114, %s116
      %p120 = scmp.eq.s32.totalorder %s17, 0
      %p121 = por %p119, %p120
      %p122 = scmp.ne.s32.totalorder %s114, %s116
      %p123 = scmp.eq.s32.totalorder %s22, 1
      %p124 = por %p122, %p123
      %p125 = scmp.ne.s32.totalorder %s116, %s117
      %p126 = scmp.eq.s32.totalorder %s22, 0
      %p127 = por %p125, %p126
      %p128 = scmp.ne.s32.totalorder %s116, %s117
      %p129 = scmp.eq.s32.totalorder %s23, 1
      %p130 = por %p128, %p129
      %p132 = scmp.ne.s32.totalorder %s117, %s131
      %p133 = scmp.eq.s32.totalorder %s23, 0
      %p134 = por %p132, %p133
      %s136 = sadd.s32 %s135, 1
      %p139 = scmp.eq.s32.totalorder %s17, 1
      %p140 = scmp.ne.s32.totalorder %s135, %s137
      %p141 = scmp.eq.s32.totalorder %s17, 0
      %p142 = por %p140, %p141
      %p143 = scmp.ne.s32.totalorder %s135, %s137
      %p144 = scmp.eq.s32.totalorder %s22, 1
      %p145 = por %p143, %p144
      %p146 = scmp.ne.s32.totalorder %s137, %s138
      %p147 = scmp.eq.s32.totalorder %s22, 0
      %p148 = por %p146, %p147
      %p149 = scmp.ne.s32.totalorder %s137, %s138
      %p150 = scmp.eq.s32.totalorder %s23, 1
      %p151 = por %p149, %p150
      %p153 = scmp.ne.s32.totalorder %s138, %s152
      %p154 = scmp.eq.s32.totalorder %s23, 0
      %p155 = por %p153, %p154
      %s157 = sadd.s32 %s156, 1
      %p160 = scmp.eq.s32.totalorder %s17, 1
      %p161 = scmp.ne.s32.totalorder %s156, %s158
      %p162 = scmp.eq.s32.totalorder %s17, 0
      %p163 = por %p161, %p162
      %p164 = scmp.ne.s32.totalorder %s156, %s158
      %p165 = scmp.eq.s32.totalorder %s22, 1
      %p166 = por %p164, %p165
      %p167 = scmp.ne.s32.totalorder %s158, %s159
      %p168 = scmp.eq.s32.totalorder %s22, 0
      %p169 = por %p167, %p168
      %p170 = scmp.ne.s32.totalorder %s158, %s159
      %p171 = scmp.eq.s32.totalorder %s23, 1
      %p172 = por %p170, %p171
      %p174 = scmp.ne.s32.totalorder %s159, %s173
      %p175 = scmp.eq.s32.totalorder %s23, 0
      %p176 = por %p174, %p175
      %s178 = sadd.s32 %s177, 1
      %p181 = scmp.eq.s32.totalorder %s17, 1
      %p182 = scmp.ne.s32.totalorder %s177, %s179
      %p183 = scmp.eq.s32.totalorder %s17, 0
      %p184 = por %p182, %p183
      %p185 = scmp.ne.s32.totalorder %s177, %s179
      %p186 = scmp.eq.s32.totalorder %s22, 1
      %p187 = por %p185, %p186
      %p188 = scmp.ne.s32.totalorder %s179, %s180
      %p189 = scmp.eq.s32.totalorder %s22, 0
      %p190 = por %p188, %p189
      %p191 = scmp.ne.s32.totalorder %s179, %s180
      %p192 = scmp.eq.s32.totalorder %s23, 1
      %p193 = por %p191, %p192
      %p195 = scmp.ne.s32.totalorder %s180, %s194
      %p196 = scmp.eq.s32.totalorder %s23, 0
      %p197 = por %p195, %p196
      %s198 = ssub.s32 %s17, %s24
      %p199 = scmp.eq.s32.totalorder %s198, 0
      %s201 = sadd.s32 %s200, 1
      %s202 = scalar_select %p199, %s200, %s201
      %p205 = pneg %p199
      %p206 = scmp.eq.s32.totalorder %s17, 1
      %p207 = por %p205, %p206
      %p208 = scmp.ne.s32.totalorder %s200, %s203
      %p209 = scmp.eq.s32.totalorder %s17, 0
      %p210 = por %p208, %p209
      %p211 = scmp.ne.s32.totalorder %s200, %s203
      %p212 = scmp.eq.s32.totalorder %s22, 1
      %p213 = por %p211, %p212
      %p214 = scmp.ne.s32.totalorder %s203, %s204
      %p215 = scmp.eq.s32.totalorder %s22, 0
      %p216 = por %p214, %p215
      %p217 = scmp.ne.s32.totalorder %s203, %s204
      %p218 = scmp.eq.s32.totalorder %s23, 1
      %p219 = por %p217, %p218
      %p221 = scmp.ne.s32.totalorder %s204, %s220
      %p222 = scmp.eq.s32.totalorder %s23, 0
      %p223 = por %p221, %p222
      %p224 = scmp.le.s32.totalorder 1, %s17
      %p225 = scmp.lt.s32.totalorder %s17, 3
      %p226 = pnand %p224, %p225
      %p227 = pneg %p226
      // Predicated region
      $region9: #{tpu_custom_call.1} parent=5 // pred_check
        _
      $region10: #{tpu_custom_call.1} parent=5 // pred_check_branch
        %229 = sbr.rel (%p226) target = $region12
      $region11: #{tpu_custom_call.1} parent=5 // pred_region
        %s230 = ssub.s32 %s17, 1
        // Predicated region
        $region13: #{tpu_custom_call.1} parent=11 // pred_check
          %p231 = pneg %p64
        $region14: #{tpu_custom_call.1} parent=11 // pred_check_branch
          %233 = sbr.rel (%p231) target = $region16
        $region15: #{tpu_custom_call.1} parent=11 // pred_region
          _
        $region16: #{tpu_custom_call.1} parent=11 // pred_fallthru
          _
        // Predicated region
        $region17: #{tpu_custom_call.1} parent=11 // pred_check
          %p234 = pneg %p85
        $region18: #{tpu_custom_call.1} parent=11 // pred_check_branch
          %236 = sbr.rel (%p234) target = $region20
        $region19: #{tpu_custom_call.1} parent=11 // pred_region
          _
        $region20: #{tpu_custom_call.1} parent=11 // pred_fallthru
          _
        // Predicated region
        $region21: #{tpu_custom_call.1} parent=11 // pred_check
          %p237 = pneg %p106
        $region22: #{tpu_custom_call.1} parent=11 // pred_check_branch
          %239 = sbr.rel (%p237) target = $region24
        $region23: #{tpu_custom_call.1} parent=11 // pred_region
          _
        $region24: #{tpu_custom_call.1} parent=11 // pred_fallthru
          _
        // Predicated region
        $region25: #{tpu_custom_call.1} parent=11 // pred_check
          %p240 = pneg %p127
        $region26: #{tpu_custom_call.1} parent=11 // pred_check_branch
          %242 = sbr.rel (%p240) target = $region28
        $region27: #{tpu_custom_call.1} parent=11 // pred_region
          _
        $region28: #{tpu_custom_call.1} parent=11 // pred_fallthru
          _
        // Predicated region
        $region29: #{tpu_custom_call.1} parent=11 // pred_check
          %p243 = pneg %p148
        $region30: #{tpu_custom_call.1} parent=11 // pred_check_branch
          %245 = sbr.rel (%p243) target = $region32
        $region31: #{tpu_custom_call.1} parent=11 // pred_region
          _
        $region32: #{tpu_custom_call.1} parent=11 // pred_fallthru
          _
        // Predicated region
        $region33: #{tpu_custom_call.1} parent=11 // pred_check
          %p246 = pneg %p169
        $region34: #{tpu_custom_call.1} parent=11 // pred_check_branch
          %248 = sbr.rel (%p246) target = $region36
        $region35: #{tpu_custom_call.1} parent=11 // pred_region
          _
        $region36: #{tpu_custom_call.1} parent=11 // pred_fallthru
          _
        // Predicated region
        $region37: #{tpu_custom_call.1} parent=11 // pred_check
          %p249 = pneg %p190
        $region38: #{tpu_custom_call.1} parent=11 // pred_check_branch
          %251 = sbr.rel (%p249) target = $region40
        $region39: #{tpu_custom_call.1} parent=11 // pred_region
          _
        $region40: #{tpu_custom_call.1} parent=11 // pred_fallthru
          _
      $region12: #{tpu_custom_call.1} parent=5 // pred_fallthru
        _
      %p252 = scmp.lt.s32.totalorder %s17, 2
      // Predicated region
      $region41: #{tpu_custom_call.1} parent=5 // pred_check
        %p253 = pneg %p252
      $region42: #{tpu_custom_call.1} parent=5 // pred_check_branch
        %255 = sbr.rel (%p253) target = $region44
      $region43: #{tpu_custom_call.1} parent=5 // pred_region
        // Predicated region
        $region45: #{tpu_custom_call.1} parent=43 // pred_check
          %p256 = pneg %p37
        $region46: #{tpu_custom_call.1} parent=43 // pred_check_branch
          %258 = sbr.rel (%p256) target = $region48
        $region47: #{tpu_custom_call.1} parent=43 // pred_region
          %p259 = scmp.lt.s32.totalorder %s17, 1
          %s260 = scalar_select %p259, %s17, 1
          %s261 = smul.addr %s260, 43
          %s262 = smul.addr %s261, 8
          %s263 = scalar_lea.vmem %s0, %s262
        $region48: #{tpu_custom_call.1} parent=43 // pred_fallthru
          _
      $region44: #{tpu_custom_call.1} parent=5 // pred_fallthru
        _
      %p264 = scmp.le.s32.totalorder 1, %s17
      %p265 = scmp.lt.s32.totalorder %s17, 3
      %p266 = pnand %p264, %p265
      %p267 = pneg %p266
      // Predicated region
      $region49: #{tpu_custom_call.1} parent=5 // pred_check
        _
      $region50: #{tpu_custom_call.1} parent=5 // pred_check_branch
        %269 = sbr.rel (%p266) target = $region52
      $region51: #{tpu_custom_call.1} parent=5 // pred_region
        %s270 = ssub.s32 %s17, 1
        %p271 = scmp.lt.s32.totalorder %s22, 1
        %s272 = scalar_select %p271, %s22, 1
        %s273 = smul.addr %s272, 43
        %s274 = smul.addr %s273, 8
        %s275 = scalar_lea.vmem %s0, %s274
        %p276 = pneg %p43
        %p277 = pneg %p40
        %p278 = pneg %p64
        %p279 = pneg %p61
        %p280 = pneg %p85
        %p281 = pneg %p82
        %p282 = pneg %p106
        %p283 = pneg %p103
        %p284 = pneg %p127
        %p285 = pneg %p124
        %p286 = pneg %p148
        %p287 = pneg %p145
        %p288 = pneg %p169
        %p289 = pneg %p166
        %p290 = pneg %p190
        %p291 = pneg %p187
        %p292 = pneg %p216
        %p293 = pneg %p213
        %s294 = sand.u32 %s203, 1
        %s295 = scalar_lea.sflag [#allocation3], %s294
        %s296 = sand.u32 %s203, 1
        %s297 = scalar_lea.vmem [#allocation2], %s296
        %p298 = scmp.lt.s32.totalorder %s22, 1
        %s299 = scalar_select %p298, %s22, 1
        %s300 = smul.addr %s299, 43
        %s301 = smul.addr %s300, 8
        %s302 = scalar_lea.vmem %s0, %s301
        %v303 = vld [vmem:[%s302] sm:$0xff]
        %v304 = vld [vmem:[%s302 + $0x8] sm:$0xff]
        %v305 = vld [vmem:[%s302 + $0x10] sm:$0xff]
        %v306 = vld [vmem:[%s302 + $0x18] sm:$0xff]
        %v307 = vld [vmem:[%s302 + $0x20] sm:$0xff]
        %v308 = vld [vmem:[%s302 + $0x28] sm:$0xff]
        %v309 = vld [vmem:[%s302 + $0x30] sm:$0xff]
        %v310 = vld [vmem:[%s302 + $0x38] sm:$0xff]
        %v311 = vld [vmem:[%s302 + $0x40] sm:$0xff]
        %v312 = vld [vmem:[%s302 + $0x48] sm:$0xff]
        %v313 = vld [vmem:[%s302 + $0x50] sm:$0xff]
        %v314 = vld [vmem:[%s302 + $0x58] sm:$0xff]
        %v315 = vld [vmem:[%s302 + $0x60] sm:$0xff]
        %v316 = vld [vmem:[%s302 + $0x68] sm:$0xff]
        %v317 = vld [vmem:[%s302 + $0x70] sm:$0xff]
        %v318 = vld [vmem:[%s302 + $0x78] sm:$0xff]
        %v319 = vld [vmem:[%s302 + $0x80] sm:$0xff]
        %v320 = vld [vmem:[%s302 + $0x88] sm:$0xff]
        %v321 = vld [vmem:[%s302 + $0x90] sm:$0xff]
        %v322 = vld [vmem:[%s302 + $0x98] sm:$0xff]
        %v323 = vld [vmem:[%s302 + $0xa0] sm:$0xff]
        %v324 = vld [vmem:[%s302 + $0xa8] sm:$0xff]
        %v325 = vld [vmem:[%s302 + $0xb0] sm:$0xff]
        %v326 = vld [vmem:[%s302 + $0xb8] sm:$0xff]
        %v327 = vld [vmem:[%s302 + $0xc0] sm:$0xff]
        %v328 = vld [vmem:[%s302 + $0xc8] sm:$0xff]
        %v329 = vld [vmem:[%s302 + $0xd0] sm:$0xff]
        %v330 = vld [vmem:[%s302 + $0xd8] sm:$0xff]
        %v331 = vld [vmem:[%s302 + $0xe0] sm:$0xff]
        %v332 = vld [vmem:[%s302 + $0xe8] sm:$0xff]
        %v333 = vld [vmem:[%s302 + $0xf0] sm:$0xff]
        %v334 = vld [vmem:[%s302 + $0xf8] sm:$0xff]
        %v335 = vld [vmem:[%s302 + $0x100] sm:$0xff]
        %v336 = vld [vmem:[%s302 + $0x108] sm:$0xff]
        %v337 = vld [vmem:[%s302 + $0x110] sm:$0xff]
        %v338 = vld [vmem:[%s302 + $0x118] sm:$0xff]
        %v339 = vld [vmem:[%s1] sm:$0x1]
        %v341 = vperm.slane %v339, 0
        %v343 = vmul.f32 %v303, %v341
        %v344 = vmul.f32 %v304, %v341
        %v345 = vmul.f32 %v305, %v341
        %v346 = vmul.f32 %v306, %v341
        %v347 = vmul.f32 %v307, %v341
        %v348 = vmul.f32 %v308, %v341
        %v349 = vmul.f32 %v309, %v341
        %v350 = vmul.f32 %v310, %v341
        %v351 = vmul.f32 %v311, %v341
        %v352 = vmul.f32 %v312, %v341
        %v353 = vmul.f32 %v313, %v341
        %v354 = vmul.f32 %v314, %v341
        %v355 = vmul.f32 %v315, %v341
        %v356 = vmul.f32 %v316, %v341
        %v357 = vmul.f32 %v317, %v341
        %v358 = vmul.f32 %v318, %v341
        %v359 = vmul.f32 %v319, %v341
        %v360 = vmul.f32 %v320, %v341
        %v361 = vmul.f32 %v321, %v341
        %v362 = vmul.f32 %v322, %v341
        %v363 = vmul.f32 %v323, %v341
        %v364 = vmul.f32 %v324, %v341
        %v365 = vmul.f32 %v325, %v341
        %v366 = vmul.f32 %v326, %v341
        %v367 = vmul.f32 %v327, %v341
        %v368 = vmul.f32 %v328, %v341
        %v369 = vmul.f32 %v329, %v341
        %v370 = vmul.f32 %v330, %v341
        %v371 = vmul.f32 %v331, %v341
        %v372 = vmul.f32 %v332, %v341
        %v373 = vmul.f32 %v333, %v341
        %v374 = vmul.f32 %v334, %v341
        %v375 = vmul.f32 %v335, %v341
        %v376 = vmul.f32 %v336, %v341
        %v377 = vmul.f32 %v337, %v341
        %v378 = vmul.f32 %v338, %v341
        %v379 = vld [vmem:[%s2] sm:$0x1]
        %v381 = vperm.slane %v379, 0
        %v383 = vadd.f32 %v343, %v381
        %v384 = vadd.f32 %v344, %v381
        %v385 = vadd.f32 %v345, %v381
        %v386 = vadd.f32 %v346, %v381
        %v387 = vadd.f32 %v347, %v381
        %v388 = vadd.f32 %v348, %v381
        %v389 = vadd.f32 %v349, %v381
        %v390 = vadd.f32 %v350, %v381
        %v391 = vadd.f32 %v351, %v381
        %v392 = vadd.f32 %v352, %v381
        %v393 = vadd.f32 %v353, %v381
        %v394 = vadd.f32 %v354, %v381
        %v395 = vadd.f32 %v355, %v381
        %v396 = vadd.f32 %v356, %v381
        %v397 = vadd.f32 %v357, %v381
        %v398 = vadd.f32 %v358, %v381
        %v399 = vadd.f32 %v359, %v381
        %v400 = vadd.f32 %v360, %v381
        %v401 = vadd.f32 %v361, %v381
        %v402 = vadd.f32 %v362, %v381
        %v403 = vadd.f32 %v363, %v381
        %v404 = vadd.f32 %v364, %v381
        %v405 = vadd.f32 %v365, %v381
        %v406 = vadd.f32 %v366, %v381
        %v407 = vadd.f32 %v367, %v381
        %v408 = vadd.f32 %v368, %v381
        %v409 = vadd.f32 %v369, %v381
        %v410 = vadd.f32 %v370, %v381
        %v411 = vadd.f32 %v371, %v381
        %v412 = vadd.f32 %v372, %v381
        %v413 = vadd.f32 %v373, %v381
        %v414 = vadd.f32 %v374, %v381
        %v415 = vadd.f32 %v375, %v381
        %v416 = vadd.f32 %v376, %v381
        %v417 = vadd.f32 %v377, %v381
        %v418 = vadd.f32 %v378, %v381
        %v419 = vld [vmem:[%s4] sm:$0xf]
        %v420 = vld [vmem:[%s302 + $0x1] sm:$0xff]
        %v421 = vld [vmem:[%s302 + $0x9] sm:$0xff]
        %v422 = vld [vmem:[%s302 + $0x11] sm:$0xff]
        %v423 = vld [vmem:[%s302 + $0x19] sm:$0xff]
        %v424 = vld [vmem:[%s302 + $0x21] sm:$0xff]
        %v425 = vld [vmem:[%s302 + $0x29] sm:$0xff]
        %v426 = vld [vmem:[%s302 + $0x31] sm:$0xff]
        %v427 = vld [vmem:[%s302 + $0x39] sm:$0xff]
        %v428 = vld [vmem:[%s302 + $0x41] sm:$0xff]
        %v429 = vld [vmem:[%s302 + $0x49] sm:$0xff]
        %v430 = vld [vmem:[%s302 + $0x51] sm:$0xff]
        %v431 = vld [vmem:[%s302 + $0x59] sm:$0xff]
        %v432 = vld [vmem:[%s302 + $0x61] sm:$0xff]
        %v433 = vld [vmem:[%s302 + $0x69] sm:$0xff]
        %v434 = vld [vmem:[%s302 + $0x71] sm:$0xff]
        %v435 = vld [vmem:[%s302 + $0x79] sm:$0xff]
        %v436 = vld [vmem:[%s302 + $0x81] sm:$0xff]
        %v437 = vld [vmem:[%s302 + $0x89] sm:$0xff]
        %v438 = vld [vmem:[%s302 + $0x91] sm:$0xff]
        %v439 = vld [vmem:[%s302 + $0x99] sm:$0xff]
        %v440 = vld [vmem:[%s302 + $0xa1] sm:$0xff]
        %v441 = vld [vmem:[%s302 + $0xa9] sm:$0xff]
        %v442 = vld [vmem:[%s302 + $0xb1] sm:$0xff]
        %v443 = vld [vmem:[%s302 + $0xb9] sm:$0xff]
        %v444 = vld [vmem:[%s302 + $0xc1] sm:$0xff]
        %v445 = vld [vmem:[%s302 + $0xc9] sm:$0xff]
        %v446 = vld [vmem:[%s302 + $0xd1] sm:$0xff]
        %v447 = vld [vmem:[%s302 + $0xd9] sm:$0xff]
        %v448 = vld [vmem:[%s302 + $0xe1] sm:$0xff]
        %v449 = vld [vmem:[%s302 + $0xe9] sm:$0xff]
        %v450 = vld [vmem:[%s302 + $0xf1] sm:$0xff]
        %v451 = vld [vmem:[%s302 + $0xf9] sm:$0xff]
        %v452 = vld [vmem:[%s302 + $0x101] sm:$0xff]
        %v453 = vld [vmem:[%s302 + $0x109] sm:$0xff]
        %v454 = vld [vmem:[%s302 + $0x111] sm:$0xff]
        %v455 = vld [vmem:[%s302 + $0x119] sm:$0xff]
        %v456 = vmul.f32 %v420, %v341
        %v457 = vmul.f32 %v421, %v341
        %v458 = vmul.f32 %v422, %v341
        %v459 = vmul.f32 %v423, %v341
        %v460 = vmul.f32 %v424, %v341
        %v461 = vmul.f32 %v425, %v341
        %v462 = vmul.f32 %v426, %v341
        %v463 = vmul.f32 %v427, %v341
        %v464 = vmul.f32 %v428, %v341
        %v465 = vmul.f32 %v429, %v341
        %v466 = vmul.f32 %v430, %v341
        %v467 = vmul.f32 %v431, %v341
        %v468 = vmul.f32 %v432, %v341
        %v469 = vmul.f32 %v433, %v341
        %v470 = vmul.f32 %v434, %v341
        %v471 = vmul.f32 %v435, %v341
        %v472 = vmul.f32 %v436, %v341
        %v473 = vmul.f32 %v437, %v341
        %v474 = vmul.f32 %v438, %v341
        %v475 = vmul.f32 %v439, %v341
        %v476 = vmul.f32 %v440, %v341
        %v477 = vmul.f32 %v441, %v341
        %v478 = vmul.f32 %v442, %v341
        %v479 = vmul.f32 %v443, %v341
        %v480 = vmul.f32 %v444, %v341
        %v481 = vmul.f32 %v445, %v341
        %v482 = vmul.f32 %v446, %v341
        %v483 = vmul.f32 %v447, %v341
        %v484 = vmul.f32 %v448, %v341
        %v485 = vmul.f32 %v449, %v341
        %v486 = vmul.f32 %v450, %v341
        %v487 = vmul.f32 %v451, %v341
        %v488 = vmul.f32 %v452, %v341
        %v489 = vmul.f32 %v453, %v341
        %v490 = vmul.f32 %v454, %v341
        %v491 = vmul.f32 %v455, %v341
        %v492 = vadd.f32 %v456, %v381
        %v493 = vadd.f32 %v457, %v381
        %v494 = vadd.f32 %v458, %v381
        %v495 = vadd.f32 %v459, %v381
        %v496 = vadd.f32 %v460, %v381
        %v497 = vadd.f32 %v461, %v381
        %v498 = vadd.f32 %v462, %v381
        %v499 = vadd.f32 %v463, %v381
        %v500 = vadd.f32 %v464, %v381
        %v501 = vadd.f32 %v465, %v381
        %v502 = vadd.f32 %v466, %v381
        %v503 = vadd.f32 %v467, %v381
        %v504 = vadd.f32 %v468, %v381
        %v505 = vadd.f32 %v469, %v381
        %v506 = vadd.f32 %v470, %v381
        %v507 = vadd.f32 %v471, %v381
        %v508 = vadd.f32 %v472, %v381
        %v509 = vadd.f32 %v473, %v381
        %v510 = vadd.f32 %v474, %v381
        %v511 = vadd.f32 %v475, %v381
        %v512 = vadd.f32 %v476, %v381
        %v513 = vadd.f32 %v477, %v381
        %v514 = vadd.f32 %v478, %v381
        %v515 = vadd.f32 %v479, %v381
        %v516 = vadd.f32 %v480, %v381
        %v517 = vadd.f32 %v481, %v381
        %v518 = vadd.f32 %v482, %v381
        %v519 = vadd.f32 %v483, %v381
        %v520 = vadd.f32 %v484, %v381
        %v521 = vadd.f32 %v485, %v381
        %v522 = vadd.f32 %v486, %v381
        %v523 = vadd.f32 %v487, %v381
        %v524 = vadd.f32 %v488, %v381
        %v525 = vadd.f32 %v489, %v381
        %v526 = vadd.f32 %v490, %v381
        %v527 = vadd.f32 %v491, %v381
        %v528 = vld [vmem:[%s4 + $0x4] sm:$0xf]
        %vm529 = vcmask 31744
        %v531 = vsel %vm529, %v492, 0
        %v534 = vsel %vm529, %v493, 0
        %v537 = vsel %vm529, %v494, 0
        %v540 = vsel %vm529, %v495, 0
        %v543 = vsel %vm529, %v496, 0
        %v546 = vsel %vm529, %v497, 0
        %v549 = vsel %vm529, %v498, 0
        %v552 = vsel %vm529, %v499, 0
        %v555 = vsel %vm529, %v500, 0
        %v558 = vsel %vm529, %v501, 0
        %v561 = vsel %vm529, %v502, 0
        %v564 = vsel %vm529, %v503, 0
        %v567 = vsel %vm529, %v504, 0
        %v570 = vsel %vm529, %v505, 0
        %v573 = vsel %vm529, %v506, 0
        %v576 = vsel %vm529, %v507, 0
        %v579 = vsel %vm529, %v508, 0
        %v582 = vsel %vm529, %v509, 0
        %v585 = vsel %vm529, %v510, 0
        %v588 = vsel %vm529, %v511, 0
        %v591 = vsel %vm529, %v512, 0
        %v594 = vsel %vm529, %v513, 0
        %v597 = vsel %vm529, %v514, 0
        %v600 = vsel %vm529, %v515, 0
        %v603 = vsel %vm529, %v516, 0
        %v606 = vsel %vm529, %v517, 0
        %v609 = vsel %vm529, %v518, 0
        %v612 = vsel %vm529, %v519, 0
        %v615 = vsel %vm529, %v520, 0
        %v618 = vsel %vm529, %v521, 0
        %v621 = vsel %vm529, %v522, 0
        %v624 = vsel %vm529, %v523, 0
        %v627 = vsel %vm529, %v524, 0
        %v630 = vsel %vm529, %v525, 0
        %v633 = vsel %vm529, %v526, 0
        %v636 = vsel %vm529, %v527, 0
        %vm638 = vcmask 1043456
        %v640 = vsel %vm638, %v528, 0
        %642 = vmatpush.msra.mxu0 0.0
        %643 = vmatpush.msra.mxu0 0.0
        %644 = vmatpush.msra.mxu0 0.0
        %645 = vmatpush.msra.mxu0 0.0
        %646 = vmatpush.msra.mxu0 0.0
        %647 = vmatpush.msra.mxu0 0.0
        %648 = vmatpush.msra.mxu0 0.0
        %649 = vmatpush.msra.mxu0 0.0
        %650 = vmatpush.msra.mxu0 0.0
        %651 = vmatpush.msra.mxu0 0.0
        %652 = vmatpush.msra.mxu0 0.0
        %653 = vmatpush.msra.mxu0 0.0
        %654 = vmatpush.msra.mxu0 0.0
        %655 = vmatpush.msra.mxu0 0.0
        %656 = vmatpush.msra.mxu0 0.0
        %657 = vmatpush.msra.mxu0 %v640
        %658 = vmatmul.f32.gmra.mxu0 %v531
        %v659 = vpop.f32.mrf.mxu0
        %v660 = vadd.f32 0.0, %v659
        %661 = vmatmul.f32.gmra.mxu0 %v534
        %v662 = vpop.f32.mrf.mxu0
        %v663 = vadd.f32 0.0, %v662
        %664 = vmatmul.f32.gmra.mxu0 %v537
        %v665 = vpop.f32.mrf.mxu0
        %v666 = vadd.f32 0.0, %v665
        %667 = vmatmul.f32.gmra.mxu0 %v540
        %v668 = vpop.f32.mrf.mxu0
        %v669 = vadd.f32 0.0, %v668
        %670 = vmatmul.f32.gmra.mxu0 %v543
        %v671 = vpop.f32.mrf.mxu0
        %v672 = vadd.f32 0.0, %v671
        %673 = vmatmul.f32.gmra.mxu0 %v546
        %v674 = vpop.f32.mrf.mxu0
        %v675 = vadd.f32 0.0, %v674
        %676 = vmatmul.f32.gmra.mxu0 %v549
        %v677 = vpop.f32.mrf.mxu0
        %v678 = vadd.f32 0.0, %v677
        %679 = vmatmul.f32.gmra.mxu0 %v552
        %v680 = vpop.f32.mrf.mxu0
        %v681 = vadd.f32 0.0, %v680
        %682 = vmatmul.f32.gmra.mxu0 %v555
        %v683 = vpop.f32.mrf.mxu0
        %v684 = vadd.f32 0.0, %v683
        %685 = vmatmul.f32.gmra.mxu0 %v558
        %v686 = vpop.f32.mrf.mxu0
        %v687 = vadd.f32 0.0, %v686
        %688 = vmatmul.f32.gmra.mxu0 %v561
        %v689 = vpop.f32.mrf.mxu0
        %v690 = vadd.f32 0.0, %v689
        %691 = vmatmul.f32.gmra.mxu0 %v564
        %v692 = vpop.f32.mrf.mxu0
        %v693 = vadd.f32 0.0, %v692
        %694 = vmatmul.f32.gmra.mxu0 %v567
        %v695 = vpop.f32.mrf.mxu0
        %v696 = vadd.f32 0.0, %v695
        %697 = vmatmul.f32.gmra.mxu0 %v570
        %v698 = vpop.f32.mrf.mxu0
        %v699 = vadd.f32 0.0, %v698
        %700 = vmatmul.f32.gmra.mxu0 %v573
        %v701 = vpop.f32.mrf.mxu0
        %v702 = vadd.f32 0.0, %v701
        %703 = vmatmul.f32.gmra.mxu0 %v576
        %v704 = vpop.f32.mrf.mxu0
        %v705 = vadd.f32 0.0, %v704
        %706 = vmatmul.f32.gmra.mxu0 %v579
        %v707 = vpop.f32.mrf.mxu0
        %v708 = vadd.f32 0.0, %v707
        %709 = vmatmul.f32.gmra.mxu0 %v582
        %v710 = vpop.f32.mrf.mxu0
        %v711 = vadd.f32 0.0, %v710
        %712 = vmatmul.f32.gmra.mxu0 %v585
        %v713 = vpop.f32.mrf.mxu0
        %v714 = vadd.f32 0.0, %v713
        %715 = vmatmul.f32.gmra.mxu0 %v588
        %v716 = vpop.f32.mrf.mxu0
        %v717 = vadd.f32 0.0, %v716
        %718 = vmatmul.f32.gmra.mxu0 %v591
        %v719 = vpop.f32.mrf.mxu0
        %v720 = vadd.f32 0.0, %v719
        %721 = vmatmul.f32.gmra.mxu0 %v594
        %v722 = vpop.f32.mrf.mxu0
        %v723 = vadd.f32 0.0, %v722
        %724 = vmatmul.f32.gmra.mxu0 %v597
        %v725 = vpop.f32.mrf.mxu0
        %v726 = vadd.f32 0.0, %v725
        %727 = vmatmul.f32.gmra.mxu0 %v600
        %v728 = vpop.f32.mrf.mxu0
        %v729 = vadd.f32 0.0, %v728
        %730 = vmatmul.f32.gmra.mxu0 %v603
        %v731 = vpop.f32.mrf.mxu0
        %v732 = vadd.f32 0.0, %v731
        %733 = vmatmul.f32.gmra.mxu0 %v606
        %v734 = vpop.f32.mrf.mxu0
        %v735 = vadd.f32 0.0, %v734
        %736 = vmatmul.f32.gmra.mxu0 %v609
        %v737 = vpop.f32.mrf.mxu0
        %v738 = vadd.f32 0.0, %v737
        %739 = vmatmul.f32.gmra.mxu0 %v612
        %v740 = vpop.f32.mrf.mxu0
        %v741 = vadd.f32 0.0, %v740
        %742 = vmatmul.f32.gmra.mxu0 %v615
        %v743 = vpop.f32.mrf.mxu0
        %v744 = vadd.f32 0.0, %v743
        %745 = vmatmul.f32.gmra.mxu0 %v618
        %v746 = vpop.f32.mrf.mxu0
        %v747 = vadd.f32 0.0, %v746
        %748 = vmatmul.f32.gmra.mxu0 %v621
        %v749 = vpop.f32.mrf.mxu0
        %v750 = vadd.f32 0.0, %v749
        %751 = vmatmul.f32.gmra.mxu0 %v624
        %v752 = vpop.f32.mrf.mxu0
        %v753 = vadd.f32 0.0, %v752
        %754 = vmatmul.f32.gmra.mxu0 %v627
        %v755 = vpop.f32.mrf.mxu0
        %v756 = vadd.f32 0.0, %v755
        %757 = vmatmul.f32.gmra.mxu0 %v630
        %v758 = vpop.f32.mrf.mxu0
        %v759 = vadd.f32 0.0, %v758
        %760 = vmatmul.f32.gmra.mxu0 %v633
        %v761 = vpop.f32.mrf.mxu0
        %v762 = vadd.f32 0.0, %v761
        %763 = vmatmul.f32.gmra.mxu0 %v636
        %v764 = vpop.f32.mrf.mxu0
        %v765 = vadd.f32 0.0, %v764
        %766 = vdwg.mxu0
        %v768 = vsel %vm529, %v383, 0
        %v771 = vsel %vm529, %v384, 0
        %v774 = vsel %vm529, %v385, 0
        %v777 = vsel %vm529, %v386, 0
        %v780 = vsel %vm529, %v387, 0
        %v783 = vsel %vm529, %v388, 0
        %v786 = vsel %vm529, %v389, 0
        %v789 = vsel %vm529, %v390, 0
        %v792 = vsel %vm529, %v391, 0
        %v795 = vsel %vm529, %v392, 0
        %v798 = vsel %vm529, %v393, 0
        %v801 = vsel %vm529, %v394, 0
        %v804 = vsel %vm529, %v395, 0
        %v807 = vsel %vm529, %v396, 0
        %v810 = vsel %vm529, %v397, 0
        %v813 = vsel %vm529, %v398, 0
        %v816 = vsel %vm529, %v399, 0
        %v819 = vsel %vm529, %v400, 0
        %v822 = vsel %vm529, %v401, 0
        %v825 = vsel %vm529, %v402, 0
        %v828 = vsel %vm529, %v403, 0
        %v831 = vsel %vm529, %v404, 0
        %v834 = vsel %vm529, %v405, 0
        %v837 = vsel %vm529, %v406, 0
        %v840 = vsel %vm529, %v407, 0
        %v843 = vsel %vm529, %v408, 0
        %v846 = vsel %vm529, %v409, 0
        %v849 = vsel %vm529, %v410, 0
        %v852 = vsel %vm529, %v411, 0
        %v855 = vsel %vm529, %v412, 0
        %v858 = vsel %vm529, %v413, 0
        %v861 = vsel %vm529, %v414, 0
        %v864 = vsel %vm529, %v415, 0
        %v867 = vsel %vm529, %v416, 0
        %v870 = vsel %vm529, %v417, 0
        %v873 = vsel %vm529, %v418, 0
        %v876 = vsel %vm638, %v419, 0
        %878 = vmatpush.msra.mxu0 0.0
        %879 = vmatpush.msra.mxu0 0.0
        %880 = vmatpush.msra.mxu0 0.0
        %881 = vmatpush.msra.mxu0 0.0
        %882 = vmatpush.msra.mxu0 0.0
        %883 = vmatpush.msra.mxu0 0.0
        %884 = vmatpush.msra.mxu0 0.0
        %885 = vmatpush.msra.mxu0 0.0
        %886 = vmatpush.msra.mxu0 0.0
        %887 = vmatpush.msra.mxu0 0.0
        %888 = vmatpush.msra.mxu0 0.0
        %889 = vmatpush.msra.mxu0 0.0
        %890 = vmatpush.msra.mxu0 0.0
        %891 = vmatpush.msra.mxu0 0.0
        %892 = vmatpush.msra.mxu0 0.0
        %893 = vmatpush.msra.mxu0 %v876
        %894 = vmatmul.f32.gmra.mxu0 %v768
        %v895 = vpop.f32.mrf.mxu0
        %v896 = vadd.f32 %v660, %v895
        %897 = vmatmul.f32.gmra.mxu0 %v771
        %v898 = vpop.f32.mrf.mxu0
        %v899 = vadd.f32 %v663, %v898
        %900 = vmatmul.f32.gmra.mxu0 %v774
        %v901 = vpop.f32.mrf.mxu0
        %v902 = vadd.f32 %v666, %v901
        %903 = vmatmul.f32.gmra.mxu0 %v777
        %v904 = vpop.f32.mrf.mxu0
        %v905 = vadd.f32 %v669, %v904
        %906 = vmatmul.f32.gmra.mxu0 %v780
        %v907 = vpop.f32.mrf.mxu0
        %v908 = vadd.f32 %v672, %v907
        %909 = vmatmul.f32.gmra.mxu0 %v783
        %v910 = vpop.f32.mrf.mxu0
        %v911 = vadd.f32 %v675, %v910
        %912 = vmatmul.f32.gmra.mxu0 %v786
        %v913 = vpop.f32.mrf.mxu0
        %v914 = vadd.f32 %v678, %v913
        %915 = vmatmul.f32.gmra.mxu0 %v789
        %v916 = vpop.f32.mrf.mxu0
        %v917 = vadd.f32 %v681, %v916
        %918 = vmatmul.f32.gmra.mxu0 %v792
        %v919 = vpop.f32.mrf.mxu0
        %v920 = vadd.f32 %v684, %v919
        %921 = vmatmul.f32.gmra.mxu0 %v795
        %v922 = vpop.f32.mrf.mxu0
        %v923 = vadd.f32 %v687, %v922
        %924 = vmatmul.f32.gmra.mxu0 %v798
        %v925 = vpop.f32.mrf.mxu0
        %v926 = vadd.f32 %v690, %v925
        %927 = vmatmul.f32.gmra.mxu0 %v801
        %v928 = vpop.f32.mrf.mxu0
        %v929 = vadd.f32 %v693, %v928
        %930 = vmatmul.f32.gmra.mxu0 %v804
        %v931 = vpop.f32.mrf.mxu0
        %v932 = vadd.f32 %v696, %v931
        %933 = vmatmul.f32.gmra.mxu0 %v807
        %v934 = vpop.f32.mrf.mxu0
        %v935 = vadd.f32 %v699, %v934
        %936 = vmatmul.f32.gmra.mxu0 %v810
        %v937 = vpop.f32.mrf.mxu0
        %v938 = vadd.f32 %v702, %v937
        %939 = vmatmul.f32.gmra.mxu0 %v813
        %v940 = vpop.f32.mrf.mxu0
        %v941 = vadd.f32 %v705, %v940
        %942 = vmatmul.f32.gmra.mxu0 %v816
        %v943 = vpop.f32.mrf.mxu0
        %v944 = vadd.f32 %v708, %v943
        %945 = vmatmul.f32.gmra.mxu0 %v819
        %v946 = vpop.f32.mrf.mxu0
        %v947 = vadd.f32 %v711, %v946
        %948 = vmatmul.f32.gmra.mxu0 %v822
        %v949 = vpop.f32.mrf.mxu0
        %v950 = vadd.f32 %v714, %v949
        %951 = vmatmul.f32.gmra.mxu0 %v825
        %v952 = vpop.f32.mrf.mxu0
        %v953 = vadd.f32 %v717, %v952
        %954 = vmatmul.f32.gmra.mxu0 %v828
        %v955 = vpop.f32.mrf.mxu0
        %v956 = vadd.f32 %v720, %v955
        %957 = vmatmul.f32.gmra.mxu0 %v831
        %v958 = vpop.f32.mrf.mxu0
        %v959 = vadd.f32 %v723, %v958
        %960 = vmatmul.f32.gmra.mxu0 %v834
        %v961 = vpop.f32.mrf.mxu0
        %v962 = vadd.f32 %v726, %v961
        %963 = vmatmul.f32.gmra.mxu0 %v837
        %v964 = vpop.f32.mrf.mxu0
        %v965 = vadd.f32 %v729, %v964
        %966 = vmatmul.f32.gmra.mxu0 %v840
        %v967 = vpop.f32.mrf.mxu0
        %v968 = vadd.f32 %v732, %v967
        %969 = vmatmul.f32.gmra.mxu0 %v843
        %v970 = vpop.f32.mrf.mxu0
        %v971 = vadd.f32 %v735, %v970
        %972 = vmatmul.f32.gmra.mxu0 %v846
        %v973 = vpop.f32.mrf.mxu0
        %v974 = vadd.f32 %v738, %v973
        %975 = vmatmul.f32.gmra.mxu0 %v849
        %v976 = vpop.f32.mrf.mxu0
        %v977 = vadd.f32 %v741, %v976
        %978 = vmatmul.f32.gmra.mxu0 %v852
        %v979 = vpop.f32.mrf.mxu0
        %v980 = vadd.f32 %v744, %v979
        %981 = vmatmul.f32.gmra.mxu0 %v855
        %v982 = vpop.f32.mrf.mxu0
        %v983 = vadd.f32 %v747, %v982
        %984 = vmatmul.f32.gmra.mxu0 %v858
        %v985 = vpop.f32.mrf.mxu0
        %v986 = vadd.f32 %v750, %v985
        %987 = vmatmul.f32.gmra.mxu0 %v861
        %v988 = vpop.f32.mrf.mxu0
        %v989 = vadd.f32 %v753, %v988
        %990 = vmatmul.f32.gmra.mxu0 %v864
        %v991 = vpop.f32.mrf.mxu0
        %v992 = vadd.f32 %v756, %v991
        %993 = vmatmul.f32.gmra.mxu0 %v867
        %v994 = vpop.f32.mrf.mxu0
        %v995 = vadd.f32 %v759, %v994
        %996 = vmatmul.f32.gmra.mxu0 %v870
        %v997 = vpop.f32.mrf.mxu0
        %v998 = vadd.f32 %v762, %v997
        %999 = vmatmul.f32.gmra.mxu0 %v873
        %v1000 = vpop.f32.mrf.mxu0
        %v1001 = vadd.f32 %v765, %v1000
        %1002 = vdwg.mxu0
        %v1003 = vld [vmem:[%s302 + $0x2] sm:$0xff]
        %v1004 = vld [vmem:[%s302 + $0xa] sm:$0xff]
        %v1005 = vld [vmem:[%s302 + $0x12] sm:$0xff]
        %v1006 = vld [vmem:[%s302 + $0x1a] sm:$0xff]
        %v1007 = vld [vmem:[%s302 + $0x22] sm:$0xff]
        %v1008 = vld [vmem:[%s302 + $0x2a] sm:$0xff]
        %v1009 = vld [vmem:[%s302 + $0x32] sm:$0xff]
        %v1010 = vld [vmem:[%s302 + $0x3a] sm:$0xff]
        %v1011 = vld [vmem:[%s302 + $0x42] sm:$0xff]
        %v1012 = vld [vmem:[%s302 + $0x4a] sm:$0xff]
        %v1013 = vld [vmem:[%s302 + $0x52] sm:$0xff]
        %v1014 = vld [vmem:[%s302 + $0x5a] sm:$0xff]
        %v1015 = vld [vmem:[%s302 + $0x62] sm:$0xff]
        %v1016 = vld [vmem:[%s302 + $0x6a] sm:$0xff]
        %v1017 = vld [vmem:[%s302 + $0x72] sm:$0xff]
        %v1018 = vld [vmem:[%s302 + $0x7a] sm:$0xff]
        %v1019 = vld [vmem:[%s302 + $0x82] sm:$0xff]
        %v1020 = vld [vmem:[%s302 + $0x8a] sm:$0xff]
        %v1021 = vld [vmem:[%s302 + $0x92] sm:$0xff]
        %v1022 = vld [vmem:[%s302 + $0x9a] sm:$0xff]
        %v1023 = vld [vmem:[%s302 + $0xa2] sm:$0xff]
        %v1024 = vld [vmem:[%s302 + $0xaa] sm:$0xff]
        %v1025 = vld [vmem:[%s302 + $0xb2] sm:$0xff]
        %v1026 = vld [vmem:[%s302 + $0xba] sm:$0xff]
        %v1027 = vld [vmem:[%s302 + $0xc2] sm:$0xff]
        %v1028 = vld [vmem:[%s302 + $0xca] sm:$0xff]
        %v1029 = vld [vmem:[%s302 + $0xd2] sm:$0xff]
        %v1030 = vld [vmem:[%s302 + $0xda] sm:$0xff]
        %v1031 = vld [vmem:[%s302 + $0xe2] sm:$0xff]
        %v1032 = vld [vmem:[%s302 + $0xea] sm:$0xff]
        %v1033 = vld [vmem:[%s302 + $0xf2] sm:$0xff]
        %v1034 = vld [vmem:[%s302 + $0xfa] sm:$0xff]
        %v1035 = vld [vmem:[%s302 + $0x102] sm:$0xff]
        %v1036 = vld [vmem:[%s302 + $0x10a] sm:$0xff]
        %v1037 = vld [vmem:[%s302 + $0x112] sm:$0xff]
        %v1038 = vld [vmem:[%s302 + $0x11a] sm:$0xff]
        %v1039 = vmul.f32 %v1003, %v341
        %v1040 = vmul.f32 %v1004, %v341
        %v1041 = vmul.f32 %v1005, %v341
        %v1042 = vmul.f32 %v1006, %v341
        %v1043 = vmul.f32 %v1007, %v341
        %v1044 = vmul.f32 %v1008, %v341
        %v1045 = vmul.f32 %v1009, %v341
        %v1046 = vmul.f32 %v1010, %v341
        %v1047 = vmul.f32 %v1011, %v341
        %v1048 = vmul.f32 %v1012, %v341
        %v1049 = vmul.f32 %v1013, %v341
        %v1050 = vmul.f32 %v1014, %v341
        %v1051 = vmul.f32 %v1015, %v341
        %v1052 = vmul.f32 %v1016, %v341
        %v1053 = vmul.f32 %v1017, %v341
        %v1054 = vmul.f32 %v1018, %v341
        %v1055 = vmul.f32 %v1019, %v341
        %v1056 = vmul.f32 %v1020, %v341
        %v1057 = vmul.f32 %v1021, %v341
        %v1058 = vmul.f32 %v1022, %v341
        %v1059 = vmul.f32 %v1023, %v341
        %v1060 = vmul.f32 %v1024, %v341
        %v1061 = vmul.f32 %v1025, %v341
        %v1062 = vmul.f32 %v1026, %v341
        %v1063 = vmul.f32 %v1027, %v341
        %v1064 = vmul.f32 %v1028, %v341
        %v1065 = vmul.f32 %v1029, %v341
        %v1066 = vmul.f32 %v1030, %v341
        %v1067 = vmul.f32 %v1031, %v341
        %v1068 = vmul.f32 %v1032, %v341
        %v1069 = vmul.f32 %v1033, %v341
        %v1070 = vmul.f32 %v1034, %v341
        %v1071 = vmul.f32 %v1035, %v341
        %v1072 = vmul.f32 %v1036, %v341
        %v1073 = vmul.f32 %v1037, %v341
        %v1074 = vmul.f32 %v1038, %v341
        %v1075 = vadd.f32 %v1039, %v381
        %v1076 = vadd.f32 %v1040, %v381
        %v1077 = vadd.f32 %v1041, %v381
        %v1078 = vadd.f32 %v1042, %v381
        %v1079 = vadd.f32 %v1043, %v381
        %v1080 = vadd.f32 %v1044, %v381
        %v1081 = vadd.f32 %v1045, %v381
        %v1082 = vadd.f32 %v1046, %v381
        %v1083 = vadd.f32 %v1047, %v381
        %v1084 = vadd.f32 %v1048, %v381
        %v1085 = vadd.f32 %v1049, %v381
        %v1086 = vadd.f32 %v1050, %v381
        %v1087 = vadd.f32 %v1051, %v381
        %v1088 = vadd.f32 %v1052, %v381
        %v1089 = vadd.f32 %v1053, %v381
        %v1090 = vadd.f32 %v1054, %v381
        %v1091 = vadd.f32 %v1055, %v381
        %v1092 = vadd.f32 %v1056, %v381
        %v1093 = vadd.f32 %v1057, %v381
        %v1094 = vadd.f32 %v1058, %v381
        %v1095 = vadd.f32 %v1059, %v381
        %v1096 = vadd.f32 %v1060, %v381
        %v1097 = vadd.f32 %v1061, %v381
        %v1098 = vadd.f32 %v1062, %v381
        %v1099 = vadd.f32 %v1063, %v381
        %v1100 = vadd.f32 %v1064, %v381
        %v1101 = vadd.f32 %v1065, %v381
        %v1102 = vadd.f32 %v1066, %v381
        %v1103 = vadd.f32 %v1067, %v381
        %v1104 = vadd.f32 %v1068, %v381
        %v1105 = vadd.f32 %v1069, %v381
        %v1106 = vadd.f32 %v1070, %v381
        %v1107 = vadd.f32 %v1071, %v381
        %v1108 = vadd.f32 %v1072, %v381
        %v1109 = vadd.f32 %v1073, %v381
        %v1110 = vadd.f32 %v1074, %v381
        %v1111 = vld [vmem:[%s4 + $0x8] sm:$0xf]
        %v1113 = vsel %vm529, %v1075, 0
        %v1116 = vsel %vm529, %v1076, 0
        %v1119 = vsel %vm529, %v1077, 0
        %v1122 = vsel %vm529, %v1078, 0
        %v1125 = vsel %vm529, %v1079, 0
        %v1128 = vsel %vm529, %v1080, 0
        %v1131 = vsel %vm529, %v1081, 0
        %v1134 = vsel %vm529, %v1082, 0
        %v1137 = vsel %vm529, %v1083, 0
        %v1140 = vsel %vm529, %v1084, 0
        %v1143 = vsel %vm529, %v1085, 0
        %v1146 = vsel %vm529, %v1086, 0
        %v1149 = vsel %vm529, %v1087, 0
        %v1152 = vsel %vm529, %v1088, 0
        %v1155 = vsel %vm529, %v1089, 0
        %v1158 = vsel %vm529, %v1090, 0
        %v1161 = vsel %vm529, %v1091, 0
        %v1164 = vsel %vm529, %v1092, 0
        %v1167 = vsel %vm529, %v1093, 0
        %v1170 = vsel %vm529, %v1094, 0
        %v1173 = vsel %vm529, %v1095, 0
        %v1176 = vsel %vm529, %v1096, 0
        %v1179 = vsel %vm529, %v1097, 0
        %v1182 = vsel %vm529, %v1098, 0
        %v1185 = vsel %vm529, %v1099, 0
        %v1188 = vsel %vm529, %v1100, 0
        %v1191 = vsel %vm529, %v1101, 0
        %v1194 = vsel %vm529, %v1102, 0
        %v1197 = vsel %vm529, %v1103, 0
        %v1200 = vsel %vm529, %v1104, 0
        %v1203 = vsel %vm529, %v1105, 0
        %v1206 = vsel %vm529, %v1106, 0
        %v1209 = vsel %vm529, %v1107, 0
        %v1212 = vsel %vm529, %v1108, 0
        %v1215 = vsel %vm529, %v1109, 0
        %v1218 = vsel %vm529, %v1110, 0
        %v1221 = vsel %vm638, %v1111, 0
        %1223 = vmatpush.msra.mxu0 0.0
        %1224 = vmatpush.msra.mxu0 0.0
        %1225 = vmatpush.msra.mxu0 0.0
        %1226 = vmatpush.msra.mxu0 0.0
        %1227 = vmatpush.msra.mxu0 0.0
        %1228 = vmatpush.msra.mxu0 0.0
        %1229 = vmatpush.msra.mxu0 0.0
        %1230 = vmatpush.msra.mxu0 0.0
        %1231 = vmatpush.msra.mxu0 0.0
        %1232 = vmatpush.msra.mxu0 0.0
        %1233 = vmatpush.msra.mxu0 0.0
        %1234 = vmatpush.msra.mxu0 0.0
        %1235 = vmatpush.msra.mxu0 0.0
        %1236 = vmatpush.msra.mxu0 0.0
        %1237 = vmatpush.msra.mxu0 0.0
        %1238 = vmatpush.msra.mxu0 %v1221
        %1239 = vmatmul.f32.gmra.mxu0 %v1113
        %v1240 = vpop.f32.mrf.mxu0
        %v1241 = vadd.f32 0.0, %v1240
        %1242 = vmatmul.f32.gmra.mxu0 %v1116
        %v1243 = vpop.f32.mrf.mxu0
        %v1244 = vadd.f32 0.0, %v1243
        %1245 = vmatmul.f32.gmra.mxu0 %v1119
        %v1246 = vpop.f32.mrf.mxu0
        %v1247 = vadd.f32 0.0, %v1246
        %1248 = vmatmul.f32.gmra.mxu0 %v1122
        %v1249 = vpop.f32.mrf.mxu0
        %v1250 = vadd.f32 0.0, %v1249
        %1251 = vmatmul.f32.gmra.mxu0 %v1125
        %v1252 = vpop.f32.mrf.mxu0
        %v1253 = vadd.f32 0.0, %v1252
        %1254 = vmatmul.f32.gmra.mxu0 %v1128
        %v1255 = vpop.f32.mrf.mxu0
        %v1256 = vadd.f32 0.0, %v1255
        %1257 = vmatmul.f32.gmra.mxu0 %v1131
        %v1258 = vpop.f32.mrf.mxu0
        %v1259 = vadd.f32 0.0, %v1258
        %1260 = vmatmul.f32.gmra.mxu0 %v1134
        %v1261 = vpop.f32.mrf.mxu0
        %v1262 = vadd.f32 0.0, %v1261
        %1263 = vmatmul.f32.gmra.mxu0 %v1137
        %v1264 = vpop.f32.mrf.mxu0
        %v1265 = vadd.f32 0.0, %v1264
        %1266 = vmatmul.f32.gmra.mxu0 %v1140
        %v1267 = vpop.f32.mrf.mxu0
        %v1268 = vadd.f32 0.0, %v1267
        %1269 = vmatmul.f32.gmra.mxu0 %v1143
        %v1270 = vpop.f32.mrf.mxu0
        %v1271 = vadd.f32 0.0, %v1270
        %1272 = vmatmul.f32.gmra.mxu0 %v1146
        %v1273 = vpop.f32.mrf.mxu0
        %v1274 = vadd.f32 0.0, %v1273
        %1275 = vmatmul.f32.gmra.mxu0 %v1149
        %v1276 = vpop.f32.mrf.mxu0
        %v1277 = vadd.f32 0.0, %v1276
        %1278 = vmatmul.f32.gmra.mxu0 %v1152
        %v1279 = vpop.f32.mrf.mxu0
        %v1280 = vadd.f32 0.0, %v1279
        %1281 = vmatmul.f32.gmra.mxu0 %v1155
        %v1282 = vpop.f32.mrf.mxu0
        %v1283 = vadd.f32 0.0, %v1282
        %1284 = vmatmul.f32.gmra.mxu0 %v1158
        %v1285 = vpop.f32.mrf.mxu0
        %v1286 = vadd.f32 0.0, %v1285
        %1287 = vmatmul.f32.gmra.mxu0 %v1161
        %v1288 = vpop.f32.mrf.mxu0
        %v1289 = vadd.f32 0.0, %v1288
        %1290 = vmatmul.f32.gmra.mxu0 %v1164
        %v1291 = vpop.f32.mrf.mxu0
        %v1292 = vadd.f32 0.0, %v1291
        %1293 = vmatmul.f32.gmra.mxu0 %v1167
        %v1294 = vpop.f32.mrf.mxu0
        %v1295 = vadd.f32 0.0, %v1294
        %1296 = vmatmul.f32.gmra.mxu0 %v1170
        %v1297 = vpop.f32.mrf.mxu0
        %v1298 = vadd.f32 0.0, %v1297
        %1299 = vmatmul.f32.gmra.mxu0 %v1173
        %v1300 = vpop.f32.mrf.mxu0
        %v1301 = vadd.f32 0.0, %v1300
        %1302 = vmatmul.f32.gmra.mxu0 %v1176
        %v1303 = vpop.f32.mrf.mxu0
        %v1304 = vadd.f32 0.0, %v1303
        %1305 = vmatmul.f32.gmra.mxu0 %v1179
        %v1306 = vpop.f32.mrf.mxu0
        %v1307 = vadd.f32 0.0, %v1306
        %1308 = vmatmul.f32.gmra.mxu0 %v1182
        %v1309 = vpop.f32.mrf.mxu0
        %v1310 = vadd.f32 0.0, %v1309
        %1311 = vmatmul.f32.gmra.mxu0 %v1185
        %v1312 = vpop.f32.mrf.mxu0
        %v1313 = vadd.f32 0.0, %v1312
        %1314 = vmatmul.f32.gmra.mxu0 %v1188
        %v1315 = vpop.f32.mrf.mxu0
        %v1316 = vadd.f32 0.0, %v1315
        %1317 = vmatmul.f32.gmra.mxu0 %v1191
        %v1318 = vpop.f32.mrf.mxu0
        %v1319 = vadd.f32 0.0, %v1318
        %1320 = vmatmul.f32.gmra.mxu0 %v1194
        %v1321 = vpop.f32.mrf.mxu0
        %v1322 = vadd.f32 0.0, %v1321
        %1323 = vmatmul.f32.gmra.mxu0 %v1197
        %v1324 = vpop.f32.mrf.mxu0
        %v1325 = vadd.f32 0.0, %v1324
        %1326 = vmatmul.f32.gmra.mxu0 %v1200
        %v1327 = vpop.f32.mrf.mxu0
        %v1328 = vadd.f32 0.0, %v1327
        %1329 = vmatmul.f32.gmra.mxu0 %v1203
        %v1330 = vpop.f32.mrf.mxu0
        %v1331 = vadd.f32 0.0, %v1330
        %1332 = vmatmul.f32.gmra.mxu0 %v1206
        %v1333 = vpop.f32.mrf.mxu0
        %v1334 = vadd.f32 0.0, %v1333
        %1335 = vmatmul.f32.gmra.mxu0 %v1209
        %v1336 = vpop.f32.mrf.mxu0
        %v1337 = vadd.f32 0.0, %v1336
        %1338 = vmatmul.f32.gmra.mxu0 %v1212
        %v1339 = vpop.f32.mrf.mxu0
        %v1340 = vadd.f32 0.0, %v1339
        %1341 = vmatmul.f32.gmra.mxu0 %v1215
        %v1342 = vpop.f32.mrf.mxu0
        %v1343 = vadd.f32 0.0, %v1342
        %1344 = vmatmul.f32.gmra.mxu0 %v1218
        %v1345 = vpop.f32.mrf.mxu0
        %v1346 = vadd.f32 0.0, %v1345
        %1347 = vdwg.mxu0
        %v1348 = vadd.f32 %v896, %v1241
        %v1349 = vadd.f32 %v899, %v1244
        %v1350 = vadd.f32 %v902, %v1247
        %v1351 = vadd.f32 %v905, %v1250
        %v1352 = vadd.f32 %v908, %v1253
        %v1353 = vadd.f32 %v911, %v1256
        %v1354 = vadd.f32 %v914, %v1259
        %v1355 = vadd.f32 %v917, %v1262
        %v1356 = vadd.f32 %v920, %v1265
        %v1357 = vadd.f32 %v923, %v1268
        %v1358 = vadd.f32 %v926, %v1271
        %v1359 = vadd.f32 %v929, %v1274
        %v1360 = vadd.f32 %v932, %v1277
        %v1361 = vadd.f32 %v935, %v1280
        %v1362 = vadd.f32 %v938, %v1283
        %v1363 = vadd.f32 %v941, %v1286
        %v1364 = vadd.f32 %v944, %v1289
        %v1365 = vadd.f32 %v947, %v1292
        %v1366 = vadd.f32 %v950, %v1295
        %v1367 = vadd.f32 %v953, %v1298
        %v1368 = vadd.f32 %v956, %v1301
        %v1369 = vadd.f32 %v959, %v1304
        %v1370 = vadd.f32 %v962, %v1307
        %v1371 = vadd.f32 %v965, %v1310
        %v1372 = vadd.f32 %v968, %v1313
        %v1373 = vadd.f32 %v971, %v1316
        %v1374 = vadd.f32 %v974, %v1319
        %v1375 = vadd.f32 %v977, %v1322
        %v1376 = vadd.f32 %v980, %v1325
        %v1377 = vadd.f32 %v983, %v1328
        %v1378 = vadd.f32 %v986, %v1331
        %v1379 = vadd.f32 %v989, %v1334
        %v1380 = vadd.f32 %v992, %v1337
        %v1381 = vadd.f32 %v995, %v1340
        %v1382 = vadd.f32 %v998, %v1343
        %v1383 = vadd.f32 %v1001, %v1346
        %v1384 = vld [vmem:[%s302 + $0x12] sm:$0xff]
        %v1385 = vld [vmem:[%s302 + $0x1a] sm:$0xff]
        %v1386 = vld [vmem:[%s302 + $0x22] sm:$0xff]
        %v1387 = vld [vmem:[%s302 + $0x2a] sm:$0xff]
        %v1388 = vld [vmem:[%s302 + $0x32] sm:$0xff]
        %v1389 = vld [vmem:[%s302 + $0x3a] sm:$0xff]
        %v1390 = vld [vmem:[%s302 + $0x42] sm:$0xff]
        %v1391 = vld [vmem:[%s302 + $0x4a] sm:$0xff]
        %v1392 = vld [vmem:[%s302 + $0x52] sm:$0xff]
        %v1393 = vld [vmem:[%s302 + $0x5a] sm:$0xff]
        %v1394 = vld [vmem:[%s302 + $0x62] sm:$0xff]
        %v1395 = vld [vmem:[%s302 + $0x6a] sm:$0xff]
        %v1396 = vld [vmem:[%s302 + $0x72] sm:$0xff]
        %v1397 = vld [vmem:[%s302 + $0x7a] sm:$0xff]
        %v1398 = vld [vmem:[%s302 + $0x82] sm:$0xff]
        %v1399 = vld [vmem:[%s302 + $0x8a] sm:$0xff]
        %v1400 = vld [vmem:[%s302 + $0x92] sm:$0xff]
        %v1401 = vld [vmem:[%s302 + $0x9a] sm:$0xff]
        %v1402 = vld [vmem:[%s302 + $0xa2] sm:$0xff]
        %v1403 = vld [vmem:[%s302 + $0xaa] sm:$0xff]
        %v1404 = vld [vmem:[%s302 + $0xb2] sm:$0xff]
        %v1405 = vld [vmem:[%s302 + $0xba] sm:$0xff]
        %v1406 = vld [vmem:[%s302 + $0xc2] sm:$0xff]
        %v1407 = vld [vmem:[%s302 + $0xca] sm:$0xff]
        %v1408 = vld [vmem:[%s302 + $0xd2] sm:$0xff]
        %v1409 = vld [vmem:[%s302 + $0xda] sm:$0xff]
        %v1410 = vld [vmem:[%s302 + $0xe2] sm:$0xff]
        %v1411 = vld [vmem:[%s302 + $0xea] sm:$0xff]
        %v1412 = vld [vmem:[%s302 + $0xf2] sm:$0xff]
        %v1413 = vld [vmem:[%s302 + $0xfa] sm:$0xff]
        %v1414 = vld [vmem:[%s302 + $0x102] sm:$0xff]
        %v1415 = vld [vmem:[%s302 + $0x10a] sm:$0xff]
        %v1416 = vld [vmem:[%s302 + $0x112] sm:$0xff]
        %v1417 = vld [vmem:[%s302 + $0x11a] sm:$0xff]
        %v1418 = vld [vmem:[%s302 + $0x122] sm:$0xff]
        %v1419 = vld [vmem:[%s302 + $0x12a] sm:$0xff]
        %v1420 = vmul.f32 %v1384, %v341
        %v1421 = vmul.f32 %v1385, %v341
        %v1422 = vmul.f32 %v1386, %v341
        %v1423 = vmul.f32 %v1387, %v341
        %v1424 = vmul.f32 %v1388, %v341
        %v1425 = vmul.f32 %v1389, %v341
        %v1426 = vmul.f32 %v1390, %v341
        %v1427 = vmul.f32 %v1391, %v341
        %v1428 = vmul.f32 %v1392, %v341
        %v1429 = vmul.f32 %v1393, %v341
        %v1430 = vmul.f32 %v1394, %v341
        %v1431 = vmul.f32 %v1395, %v341
        %v1432 = vmul.f32 %v1396, %v341
        %v1433 = vmul.f32 %v1397, %v341
        %v1434 = vmul.f32 %v1398, %v341
        %v1435 = vmul.f32 %v1399, %v341
        %v1436 = vmul.f32 %v1400, %v341
        %v1437 = vmul.f32 %v1401, %v341
        %v1438 = vmul.f32 %v1402, %v341
        %v1439 = vmul.f32 %v1403, %v341
        %v1440 = vmul.f32 %v1404, %v341
        %v1441 = vmul.f32 %v1405, %v341
        %v1442 = vmul.f32 %v1406, %v341
        %v1443 = vmul.f32 %v1407, %v341
        %v1444 = vmul.f32 %v1408, %v341
        %v1445 = vmul.f32 %v1409, %v341
        %v1446 = vmul.f32 %v1410, %v341
        %v1447 = vmul.f32 %v1411, %v341
        %v1448 = vmul.f32 %v1412, %v341
        %v1449 = vmul.f32 %v1413, %v341
        %v1450 = vmul.f32 %v1414, %v341
        %v1451 = vmul.f32 %v1415, %v341
        %v1452 = vmul.f32 %v1416, %v341
        %v1453 = vmul.f32 %v1417, %v341
        %v1454 = vmul.f32 %v1418, %v341
        %v1455 = vmul.f32 %v1419, %v341
        %v1456 = vadd.f32 %v1420, %v381
        %v1457 = vadd.f32 %v1421, %v381
        %v1458 = vadd.f32 %v1422, %v381
        %v1459 = vadd.f32 %v1423, %v381
        %v1460 = vadd.f32 %v1424, %v381
        %v1461 = vadd.f32 %v1425, %v381
        %v1462 = vadd.f32 %v1426, %v381
        %v1463 = vadd.f32 %v1427, %v381
        %v1464 = vadd.f32 %v1428, %v381
        %v1465 = vadd.f32 %v1429, %v381
        %v1466 = vadd.f32 %v1430, %v381
        %v1467 = vadd.f32 %v1431, %v381
        %v1468 = vadd.f32 %v1432, %v381
        %v1469 = vadd.f32 %v1433, %v381
        %v1470 = vadd.f32 %v1434, %v381
        %v1471 = vadd.f32 %v1435, %v381
        %v1472 = vadd.f32 %v1436, %v381
        %v1473 = vadd.f32 %v1437, %v381
        %v1474 = vadd.f32 %v1438, %v381
        %v1475 = vadd.f32 %v1439, %v381
        %v1476 = vadd.f32 %v1440, %v381
        %v1477 = vadd.f32 %v1441, %v381
        %v1478 = vadd.f32 %v1442, %v381
        %v1479 = vadd.f32 %v1443, %v381
        %v1480 = vadd.f32 %v1444, %v381
        %v1481 = vadd.f32 %v1445, %v381
        %v1482 = vadd.f32 %v1446, %v381
        %v1483 = vadd.f32 %v1447, %v381
        %v1484 = vadd.f32 %v1448, %v381
        %v1485 = vadd.f32 %v1449, %v381
        %v1486 = vadd.f32 %v1450, %v381
        %v1487 = vadd.f32 %v1451, %v381
        %v1488 = vadd.f32 %v1452, %v381
        %v1489 = vadd.f32 %v1453, %v381
        %v1490 = vadd.f32 %v1454, %v381
        %v1491 = vadd.f32 %v1455, %v381
        %v1492 = vld [vmem:[%s4 + $0xc] sm:$0xf]
        %v1494 = vsel %vm529, %v1456, 0
        %v1497 = vsel %vm529, %v1457, 0
        %v1500 = vsel %vm529, %v1458, 0
        %v1503 = vsel %vm529, %v1459, 0
        %v1506 = vsel %vm529, %v1460, 0
        %v1509 = vsel %vm529, %v1461, 0
        %v1512 = vsel %vm529, %v1462, 0
        %v1515 = vsel %vm529, %v1463, 0
        %v1518 = vsel %vm529, %v1464, 0
        %v1521 = vsel %vm529, %v1465, 0
        %v1524 = vsel %vm529, %v1466, 0
        %v1527 = vsel %vm529, %v1467, 0
        %v1530 = vsel %vm529, %v1468, 0
        %v1533 = vsel %vm529, %v1469, 0
        %v1536 = vsel %vm529, %v1470, 0
        %v1539 = vsel %vm529, %v1471, 0
        %v1542 = vsel %vm529, %v1472, 0
        %v1545 = vsel %vm529, %v1473, 0
        %v1548 = vsel %vm529, %v1474, 0
        %v1551 = vsel %vm529, %v1475, 0
        %v1554 = vsel %vm529, %v1476, 0
        %v1557 = vsel %vm529, %v1477, 0
        %v1560 = vsel %vm529, %v1478, 0
        %v1563 = vsel %vm529, %v1479, 0
        %v1566 = vsel %vm529, %v1480, 0
        %v1569 = vsel %vm529, %v1481, 0
        %v1572 = vsel %vm529, %v1482, 0
        %v1575 = vsel %vm529, %v1483, 0
        %v1578 = vsel %vm529, %v1484, 0
        %v1581 = vsel %vm529, %v1485, 0
        %v1584 = vsel %vm529, %v1486, 0
        %v1587 = vsel %vm529, %v1487, 0
        %v1590 = vsel %vm529, %v1488, 0
        %v1593 = vsel %vm529, %v1489, 0
        %v1596 = vsel %vm529, %v1490, 0
        %v1599 = vsel %vm529, %v1491, 0
        %v1602 = vsel %vm638, %v1492, 0
        %1604 = vmatpush.msra.mxu0 0.0
        %1605 = vmatpush.msra.mxu0 0.0
        %1606 = vmatpush.msra.mxu0 0.0
        %1607 = vmatpush.msra.mxu0 0.0
        %1608 = vmatpush.msra.mxu0 0.0
        %1609 = vmatpush.msra.mxu0 0.0
        %1610 = vmatpush.msra.mxu0 0.0
        %1611 = vmatpush.msra.mxu0 0.0
        %1612 = vmatpush.msra.mxu0 0.0
        %1613 = vmatpush.msra.mxu0 0.0
        %1614 = vmatpush.msra.mxu0 0.0
        %1615 = vmatpush.msra.mxu0 0.0
        %1616 = vmatpush.msra.mxu0 0.0
        %1617 = vmatpush.msra.mxu0 0.0
        %1618 = vmatpush.msra.mxu0 0.0
        %1619 = vmatpush.msra.mxu0 %v1602
        %1620 = vmatmul.f32.gmra.mxu0 %v1494
        %v1621 = vpop.f32.mrf.mxu0
        %v1622 = vadd.f32 0.0, %v1621
        %1623 = vmatmul.f32.gmra.mxu0 %v1497
        %v1624 = vpop.f32.mrf.mxu0
        %v1625 = vadd.f32 0.0, %v1624
        %1626 = vmatmul.f32.gmra.mxu0 %v1500
        %v1627 = vpop.f32.mrf.mxu0
        %v1628 = vadd.f32 0.0, %v1627
        %1629 = vmatmul.f32.gmra.mxu0 %v1503
        %v1630 = vpop.f32.mrf.mxu0
        %v1631 = vadd.f32 0.0, %v1630
        %1632 = vmatmul.f32.gmra.mxu0 %v1506
        %v1633 = vpop.f32.mrf.mxu0
        %v1634 = vadd.f32 0.0, %v1633
        %1635 = vmatmul.f32.gmra.mxu0 %v1509
        %v1636 = vpop.f32.mrf.mxu0
        %v1637 = vadd.f32 0.0, %v1636
        %1638 = vmatmul.f32.gmra.mxu0 %v1512
        %v1639 = vpop.f32.mrf.mxu0
        %v1640 = vadd.f32 0.0, %v1639
        %1641 = vmatmul.f32.gmra.mxu0 %v1515
        %v1642 = vpop.f32.mrf.mxu0
        %v1643 = vadd.f32 0.0, %v1642
        %1644 = vmatmul.f32.gmra.mxu0 %v1518
        %v1645 = vpop.f32.mrf.mxu0
        %v1646 = vadd.f32 0.0, %v1645
        %1647 = vmatmul.f32.gmra.mxu0 %v1521
        %v1648 = vpop.f32.mrf.mxu0
        %v1649 = vadd.f32 0.0, %v1648
        %1650 = vmatmul.f32.gmra.mxu0 %v1524
        %v1651 = vpop.f32.mrf.mxu0
        %v1652 = vadd.f32 0.0, %v1651
        %1653 = vmatmul.f32.gmra.mxu0 %v1527
        %v1654 = vpop.f32.mrf.mxu0
        %v1655 = vadd.f32 0.0, %v1654
        %1656 = vmatmul.f32.gmra.mxu0 %v1530
        %v1657 = vpop.f32.mrf.mxu0
        %v1658 = vadd.f32 0.0, %v1657
        %1659 = vmatmul.f32.gmra.mxu0 %v1533
        %v1660 = vpop.f32.mrf.mxu0
        %v1661 = vadd.f32 0.0, %v1660
        %1662 = vmatmul.f32.gmra.mxu0 %v1536
        %v1663 = vpop.f32.mrf.mxu0
        %v1664 = vadd.f32 0.0, %v1663
        %1665 = vmatmul.f32.gmra.mxu0 %v1539
        %v1666 = vpop.f32.mrf.mxu0
        %v1667 = vadd.f32 0.0, %v1666
        %1668 = vmatmul.f32.gmra.mxu0 %v1542
        %v1669 = vpop.f32.mrf.mxu0
        %v1670 = vadd.f32 0.0, %v1669
        %1671 = vmatmul.f32.gmra.mxu0 %v1545
        %v1672 = vpop.f32.mrf.mxu0
        %v1673 = vadd.f32 0.0, %v1672
        %1674 = vmatmul.f32.gmra.mxu0 %v1548
        %v1675 = vpop.f32.mrf.mxu0
        %v1676 = vadd.f32 0.0, %v1675
        %1677 = vmatmul.f32.gmra.mxu0 %v1551
        %v1678 = vpop.f32.mrf.mxu0
        %v1679 = vadd.f32 0.0, %v1678
        %1680 = vmatmul.f32.gmra.mxu0 %v1554
        %v1681 = vpop.f32.mrf.mxu0
        %v1682 = vadd.f32 0.0, %v1681
        %1683 = vmatmul.f32.gmra.mxu0 %v1557
        %v1684 = vpop.f32.mrf.mxu0
        %v1685 = vadd.f32 0.0, %v1684
        %1686 = vmatmul.f32.gmra.mxu0 %v1560
        %v1687 = vpop.f32.mrf.mxu0
        %v1688 = vadd.f32 0.0, %v1687
        %1689 = vmatmul.f32.gmra.mxu0 %v1563
        %v1690 = vpop.f32.mrf.mxu0
        %v1691 = vadd.f32 0.0, %v1690
        %1692 = vmatmul.f32.gmra.mxu0 %v1566
        %v1693 = vpop.f32.mrf.mxu0
        %v1694 = vadd.f32 0.0, %v1693
        %1695 = vmatmul.f32.gmra.mxu0 %v1569
        %v1696 = vpop.f32.mrf.mxu0
        %v1697 = vadd.f32 0.0, %v1696
        %1698 = vmatmul.f32.gmra.mxu0 %v1572
        %v1699 = vpop.f32.mrf.mxu0
        %v1700 = vadd.f32 0.0, %v1699
        %1701 = vmatmul.f32.gmra.mxu0 %v1575
        %v1702 = vpop.f32.mrf.mxu0
        %v1703 = vadd.f32 0.0, %v1702
        %1704 = vmatmul.f32.gmra.mxu0 %v1578
        %v1705 = vpop.f32.mrf.mxu0
        %v1706 = vadd.f32 0.0, %v1705
        %1707 = vmatmul.f32.gmra.mxu0 %v1581
        %v1708 = vpop.f32.mrf.mxu0
        %v1709 = vadd.f32 0.0, %v1708
        %1710 = vmatmul.f32.gmra.mxu0 %v1584
        %v1711 = vpop.f32.mrf.mxu0
        %v1712 = vadd.f32 0.0, %v1711
        %1713 = vmatmul.f32.gmra.mxu0 %v1587
        %v1714 = vpop.f32.mrf.mxu0
        %v1715 = vadd.f32 0.0, %v1714
        %1716 = vmatmul.f32.gmra.mxu0 %v1590
        %v1717 = vpop.f32.mrf.mxu0
        %v1718 = vadd.f32 0.0, %v1717
        %1719 = vmatmul.f32.gmra.mxu0 %v1593
        %v1720 = vpop.f32.mrf.mxu0
        %v1721 = vadd.f32 0.0, %v1720
        %1722 = vmatmul.f32.gmra.mxu0 %v1596
        %v1723 = vpop.f32.mrf.mxu0
        %v1724 = vadd.f32 0.0, %v1723
        %1725 = vmatmul.f32.gmra.mxu0 %v1599
        %v1726 = vpop.f32.mrf.mxu0
        %v1727 = vadd.f32 0.0, %v1726
        %1728 = vdwg.mxu0
        %v1729 = vadd.f32 %v1348, %v1622
        %v1730 = vadd.f32 %v1349, %v1625
        %v1731 = vadd.f32 %v1350, %v1628
        %v1732 = vadd.f32 %v1351, %v1631
        %v1733 = vadd.f32 %v1352, %v1634
        %v1734 = vadd.f32 %v1353, %v1637
        %v1735 = vadd.f32 %v1354, %v1640
        %v1736 = vadd.f32 %v1355, %v1643
        %v1737 = vadd.f32 %v1356, %v1646
        %v1738 = vadd.f32 %v1357, %v1649
        %v1739 = vadd.f32 %v1358, %v1652
        %v1740 = vadd.f32 %v1359, %v1655
        %v1741 = vadd.f32 %v1360, %v1658
        %v1742 = vadd.f32 %v1361, %v1661
        %v1743 = vadd.f32 %v1362, %v1664
        %v1744 = vadd.f32 %v1363, %v1667
        %v1745 = vadd.f32 %v1364, %v1670
        %v1746 = vadd.f32 %v1365, %v1673
        %v1747 = vadd.f32 %v1366, %v1676
        %v1748 = vadd.f32 %v1367, %v1679
        %v1749 = vadd.f32 %v1368, %v1682
        %v1750 = vadd.f32 %v1369, %v1685
        %v1751 = vadd.f32 %v1370, %v1688
        %v1752 = vadd.f32 %v1371, %v1691
        %v1753 = vadd.f32 %v1372, %v1694
        %v1754 = vadd.f32 %v1373, %v1697
        %v1755 = vadd.f32 %v1374, %v1700
        %v1756 = vadd.f32 %v1375, %v1703
        %v1757 = vadd.f32 %v1376, %v1706
        %v1758 = vadd.f32 %v1377, %v1709
        %v1759 = vadd.f32 %v1378, %v1712
        %v1760 = vadd.f32 %v1379, %v1715
        %v1761 = vadd.f32 %v1380, %v1718
        %v1762 = vadd.f32 %v1381, %v1721
        %v1763 = vadd.f32 %v1382, %v1724
        %v1764 = vadd.f32 %v1383, %v1727
        %v1765 = vld [vmem:[%s302 + $0x13] sm:$0xff]
        %v1766 = vld [vmem:[%s302 + $0x1b] sm:$0xff]
        %v1767 = vld [vmem:[%s302 + $0x23] sm:$0xff]
        %v1768 = vld [vmem:[%s302 + $0x2b] sm:$0xff]
        %v1769 = vld [vmem:[%s302 + $0x33] sm:$0xff]
        %v1770 = vld [vmem:[%s302 + $0x3b] sm:$0xff]
        %v1771 = vld [vmem:[%s302 + $0x43] sm:$0xff]
        %v1772 = vld [vmem:[%s302 + $0x4b] sm:$0xff]
        %v1773 = vld [vmem:[%s302 + $0x53] sm:$0xff]
        %v1774 = vld [vmem:[%s302 + $0x5b] sm:$0xff]
        %v1775 = vld [vmem:[%s302 + $0x63] sm:$0xff]
        %v1776 = vld [vmem:[%s302 + $0x6b] sm:$0xff]
        %v1777 = vld [vmem:[%s302 + $0x73] sm:$0xff]
        %v1778 = vld [vmem:[%s302 + $0x7b] sm:$0xff]
        %v1779 = vld [vmem:[%s302 + $0x83] sm:$0xff]
        %v1780 = vld [vmem:[%s302 + $0x8b] sm:$0xff]
        %v1781 = vld [vmem:[%s302 + $0x93] sm:$0xff]
        %v1782 = vld [vmem:[%s302 + $0x9b] sm:$0xff]
        %v1783 = vld [vmem:[%s302 + $0xa3] sm:$0xff]
        %v1784 = vld [vmem:[%s302 + $0xab] sm:$0xff]
        %v1785 = vld [vmem:[%s302 + $0xb3] sm:$0xff]
        %v1786 = vld [vmem:[%s302 + $0xbb] sm:$0xff]
        %v1787 = vld [vmem:[%s302 + $0xc3] sm:$0xff]
        %v1788 = vld [vmem:[%s302 + $0xcb] sm:$0xff]
        %v1789 = vld [vmem:[%s302 + $0xd3] sm:$0xff]
        %v1790 = vld [vmem:[%s302 + $0xdb] sm:$0xff]
        %v1791 = vld [vmem:[%s302 + $0xe3] sm:$0xff]
        %v1792 = vld [vmem:[%s302 + $0xeb] sm:$0xff]
        %v1793 = vld [vmem:[%s302 + $0xf3] sm:$0xff]
        %v1794 = vld [vmem:[%s302 + $0xfb] sm:$0xff]
        %v1795 = vld [vmem:[%s302 + $0x103] sm:$0xff]
        %v1796 = vld [vmem:[%s302 + $0x10b] sm:$0xff]
        %v1797 = vld [vmem:[%s302 + $0x113] sm:$0xff]
        %v1798 = vld [vmem:[%s302 + $0x11b] sm:$0xff]
        %v1799 = vld [vmem:[%s302 + $0x123] sm:$0xff]
        %v1800 = vld [vmem:[%s302 + $0x12b] sm:$0xff]
        %v1801 = vmul.f32 %v1765, %v341
        %v1802 = vmul.f32 %v1766, %v341
        %v1803 = vmul.f32 %v1767, %v341
        %v1804 = vmul.f32 %v1768, %v341
        %v1805 = vmul.f32 %v1769, %v341
        %v1806 = vmul.f32 %v1770, %v341
        %v1807 = vmul.f32 %v1771, %v341
        %v1808 = vmul.f32 %v1772, %v341
        %v1809 = vmul.f32 %v1773, %v341
        %v1810 = vmul.f32 %v1774, %v341
        %v1811 = vmul.f32 %v1775, %v341
        %v1812 = vmul.f32 %v1776, %v341
        %v1813 = vmul.f32 %v1777, %v341
        %v1814 = vmul.f32 %v1778, %v341
        %v1815 = vmul.f32 %v1779, %v341
        %v1816 = vmul.f32 %v1780, %v341
        %v1817 = vmul.f32 %v1781, %v341
        %v1818 = vmul.f32 %v1782, %v341
        %v1819 = vmul.f32 %v1783, %v341
        %v1820 = vmul.f32 %v1784, %v341
        %v1821 = vmul.f32 %v1785, %v341
        %v1822 = vmul.f32 %v1786, %v341
        %v1823 = vmul.f32 %v1787, %v341
        %v1824 = vmul.f32 %v1788, %v341
        %v1825 = vmul.f32 %v1789, %v341
        %v1826 = vmul.f32 %v1790, %v341
        %v1827 = vmul.f32 %v1791, %v341
        %v1828 = vmul.f32 %v1792, %v341
        %v1829 = vmul.f32 %v1793, %v341
        %v1830 = vmul.f32 %v1794, %v341
        %v1831 = vmul.f32 %v1795, %v341
        %v1832 = vmul.f32 %v1796, %v341
        %v1833 = vmul.f32 %v1797, %v341
        %v1834 = vmul.f32 %v1798, %v341
        %v1835 = vmul.f32 %v1799, %v341
        %v1836 = vmul.f32 %v1800, %v341
        %v1837 = vadd.f32 %v1801, %v381
        %v1838 = vadd.f32 %v1802, %v381
        %v1839 = vadd.f32 %v1803, %v381
        %v1840 = vadd.f32 %v1804, %v381
        %v1841 = vadd.f32 %v1805, %v381
        %v1842 = vadd.f32 %v1806, %v381
        %v1843 = vadd.f32 %v1807, %v381
        %v1844 = vadd.f32 %v1808, %v381
        %v1845 = vadd.f32 %v1809, %v381
        %v1846 = vadd.f32 %v1810, %v381
        %v1847 = vadd.f32 %v1811, %v381
        %v1848 = vadd.f32 %v1812, %v381
        %v1849 = vadd.f32 %v1813, %v381
        %v1850 = vadd.f32 %v1814, %v381
        %v1851 = vadd.f32 %v1815, %v381
        %v1852 = vadd.f32 %v1816, %v381
        %v1853 = vadd.f32 %v1817, %v381
        %v1854 = vadd.f32 %v1818, %v381
        %v1855 = vadd.f32 %v1819, %v381
        %v1856 = vadd.f32 %v1820, %v381
        %v1857 = vadd.f32 %v1821, %v381
        %v1858 = vadd.f32 %v1822, %v381
        %v1859 = vadd.f32 %v1823, %v381
        %v1860 = vadd.f32 %v1824, %v381
        %v1861 = vadd.f32 %v1825, %v381
        %v1862 = vadd.f32 %v1826, %v381
        %v1863 = vadd.f32 %v1827, %v381
        %v1864 = vadd.f32 %v1828, %v381
        %v1865 = vadd.f32 %v1829, %v381
        %v1866 = vadd.f32 %v1830, %v381
        %v1867 = vadd.f32 %v1831, %v381
        %v1868 = vadd.f32 %v1832, %v381
        %v1869 = vadd.f32 %v1833, %v381
        %v1870 = vadd.f32 %v1834, %v381
        %v1871 = vadd.f32 %v1835, %v381
        %v1872 = vadd.f32 %v1836, %v381
        %v1873 = vld [vmem:[%s4 + $0x10] sm:$0xf]
        %v1875 = vsel %vm529, %v1837, 0
        %v1878 = vsel %vm529, %v1838, 0
        %v1881 = vsel %vm529, %v1839, 0
        %v1884 = vsel %vm529, %v1840, 0
        %v1887 = vsel %vm529, %v1841, 0
        %v1890 = vsel %vm529, %v1842, 0
        %v1893 = vsel %vm529, %v1843, 0
        %v1896 = vsel %vm529, %v1844, 0
        %v1899 = vsel %vm529, %v1845, 0
        %v1902 = vsel %vm529, %v1846, 0
        %v1905 = vsel %vm529, %v1847, 0
        %v1908 = vsel %vm529, %v1848, 0
        %v1911 = vsel %vm529, %v1849, 0
        %v1914 = vsel %vm529, %v1850, 0
        %v1917 = vsel %vm529, %v1851, 0
        %v1920 = vsel %vm529, %v1852, 0
        %v1923 = vsel %vm529, %v1853, 0
        %v1926 = vsel %vm529, %v1854, 0
        %v1929 = vsel %vm529, %v1855, 0
        %v1932 = vsel %vm529, %v1856, 0
        %v1935 = vsel %vm529, %v1857, 0
        %v1938 = vsel %vm529, %v1858, 0
        %v1941 = vsel %vm529, %v1859, 0
        %v1944 = vsel %vm529, %v1860, 0
        %v1947 = vsel %vm529, %v1861, 0
        %v1950 = vsel %vm529, %v1862, 0
        %v1953 = vsel %vm529, %v1863, 0
        %v1956 = vsel %vm529, %v1864, 0
        %v1959 = vsel %vm529, %v1865, 0
        %v1962 = vsel %vm529, %v1866, 0
        %v1965 = vsel %vm529, %v1867, 0
        %v1968 = vsel %vm529, %v1868, 0
        %v1971 = vsel %vm529, %v1869, 0
        %v1974 = vsel %vm529, %v1870, 0
        %v1977 = vsel %vm529, %v1871, 0
        %v1980 = vsel %vm529, %v1872, 0
        %v1983 = vsel %vm638, %v1873, 0
        %1985 = vmatpush.msra.mxu0 0.0
        %1986 = vmatpush.msra.mxu0 0.0
        %1987 = vmatpush.msra.mxu0 0.0
        %1988 = vmatpush.msra.mxu0 0.0
        %1989 = vmatpush.msra.mxu0 0.0
        %1990 = vmatpush.msra.mxu0 0.0
        %1991 = vmatpush.msra.mxu0 0.0
        %1992 = vmatpush.msra.mxu0 0.0
        %1993 = vmatpush.msra.mxu0 0.0
        %1994 = vmatpush.msra.mxu0 0.0
        %1995 = vmatpush.msra.mxu0 0.0
        %1996 = vmatpush.msra.mxu0 0.0
        %1997 = vmatpush.msra.mxu0 0.0
        %1998 = vmatpush.msra.mxu0 0.0
        %1999 = vmatpush.msra.mxu0 0.0
        %2000 = vmatpush.msra.mxu0 %v1983
        %2001 = vmatmul.f32.gmra.mxu0 %v1875
        %v2002 = vpop.f32.mrf.mxu0
        %v2003 = vadd.f32 0.0, %v2002
        %2004 = vmatmul.f32.gmra.mxu0 %v1878
        %v2005 = vpop.f32.mrf.mxu0
        %v2006 = vadd.f32 0.0, %v2005
        %2007 = vmatmul.f32.gmra.mxu0 %v1881
        %v2008 = vpop.f32.mrf.mxu0
        %v2009 = vadd.f32 0.0, %v2008
        %2010 = vmatmul.f32.gmra.mxu0 %v1884
        %v2011 = vpop.f32.mrf.mxu0
        %v2012 = vadd.f32 0.0, %v2011
        %2013 = vmatmul.f32.gmra.mxu0 %v1887
        %v2014 = vpop.f32.mrf.mxu0
        %v2015 = vadd.f32 0.0, %v2014
        %2016 = vmatmul.f32.gmra.mxu0 %v1890
        %v2017 = vpop.f32.mrf.mxu0
        %v2018 = vadd.f32 0.0, %v2017
        %2019 = vmatmul.f32.gmra.mxu0 %v1893
        %v2020 = vpop.f32.mrf.mxu0
        %v2021 = vadd.f32 0.0, %v2020
        %2022 = vmatmul.f32.gmra.mxu0 %v1896
        %v2023 = vpop.f32.mrf.mxu0
        %v2024 = vadd.f32 0.0, %v2023
        %2025 = vmatmul.f32.gmra.mxu0 %v1899
        %v2026 = vpop.f32.mrf.mxu0
        %v2027 = vadd.f32 0.0, %v2026
        %2028 = vmatmul.f32.gmra.mxu0 %v1902
        %v2029 = vpop.f32.mrf.mxu0
        %v2030 = vadd.f32 0.0, %v2029
        %2031 = vmatmul.f32.gmra.mxu0 %v1905
        %v2032 = vpop.f32.mrf.mxu0
        %v2033 = vadd.f32 0.0, %v2032
        %2034 = vmatmul.f32.gmra.mxu0 %v1908
        %v2035 = vpop.f32.mrf.mxu0
        %v2036 = vadd.f32 0.0, %v2035
        %2037 = vmatmul.f32.gmra.mxu0 %v1911
        %v2038 = vpop.f32.mrf.mxu0
        %v2039 = vadd.f32 0.0, %v2038
        %2040 = vmatmul.f32.gmra.mxu0 %v1914
        %v2041 = vpop.f32.mrf.mxu0
        %v2042 = vadd.f32 0.0, %v2041
        %2043 = vmatmul.f32.gmra.mxu0 %v1917
        %v2044 = vpop.f32.mrf.mxu0
        %v2045 = vadd.f32 0.0, %v2044
        %2046 = vmatmul.f32.gmra.mxu0 %v1920
        %v2047 = vpop.f32.mrf.mxu0
        %v2048 = vadd.f32 0.0, %v2047
        %2049 = vmatmul.f32.gmra.mxu0 %v1923
        %v2050 = vpop.f32.mrf.mxu0
        %v2051 = vadd.f32 0.0, %v2050
        %2052 = vmatmul.f32.gmra.mxu0 %v1926
        %v2053 = vpop.f32.mrf.mxu0
        %v2054 = vadd.f32 0.0, %v2053
        %2055 = vmatmul.f32.gmra.mxu0 %v1929
        %v2056 = vpop.f32.mrf.mxu0
        %v2057 = vadd.f32 0.0, %v2056
        %2058 = vmatmul.f32.gmra.mxu0 %v1932
        %v2059 = vpop.f32.mrf.mxu0
        %v2060 = vadd.f32 0.0, %v2059
        %2061 = vmatmul.f32.gmra.mxu0 %v1935
        %v2062 = vpop.f32.mrf.mxu0
        %v2063 = vadd.f32 0.0, %v2062
        %2064 = vmatmul.f32.gmra.mxu0 %v1938
        %v2065 = vpop.f32.mrf.mxu0
        %v2066 = vadd.f32 0.0, %v2065
        %2067 = vmatmul.f32.gmra.mxu0 %v1941
        %v2068 = vpop.f32.mrf.mxu0
        %v2069 = vadd.f32 0.0, %v2068
        %2070 = vmatmul.f32.gmra.mxu0 %v1944
        %v2071 = vpop.f32.mrf.mxu0
        %v2072 = vadd.f32 0.0, %v2071
        %2073 = vmatmul.f32.gmra.mxu0 %v1947
        %v2074 = vpop.f32.mrf.mxu0
        %v2075 = vadd.f32 0.0, %v2074
        %2076 = vmatmul.f32.gmra.mxu0 %v1950
        %v2077 = vpop.f32.mrf.mxu0
        %v2078 = vadd.f32 0.0, %v2077
        %2079 = vmatmul.f32.gmra.mxu0 %v1953
        %v2080 = vpop.f32.mrf.mxu0
        %v2081 = vadd.f32 0.0, %v2080
        %2082 = vmatmul.f32.gmra.mxu0 %v1956
        %v2083 = vpop.f32.mrf.mxu0
        %v2084 = vadd.f32 0.0, %v2083
        %2085 = vmatmul.f32.gmra.mxu0 %v1959
        %v2086 = vpop.f32.mrf.mxu0
        %v2087 = vadd.f32 0.0, %v2086
        %2088 = vmatmul.f32.gmra.mxu0 %v1962
        %v2089 = vpop.f32.mrf.mxu0
        %v2090 = vadd.f32 0.0, %v2089
        %2091 = vmatmul.f32.gmra.mxu0 %v1965
        %v2092 = vpop.f32.mrf.mxu0
        %v2093 = vadd.f32 0.0, %v2092
        %2094 = vmatmul.f32.gmra.mxu0 %v1968
        %v2095 = vpop.f32.mrf.mxu0
        %v2096 = vadd.f32 0.0, %v2095
        %2097 = vmatmul.f32.gmra.mxu0 %v1971
        %v2098 = vpop.f32.mrf.mxu0
        %v2099 = vadd.f32 0.0, %v2098
        %2100 = vmatmul.f32.gmra.mxu0 %v1974
        %v2101 = vpop.f32.mrf.mxu0
        %v2102 = vadd.f32 0.0, %v2101
        %2103 = vmatmul.f32.gmra.mxu0 %v1977
        %v2104 = vpop.f32.mrf.mxu0
        %v2105 = vadd.f32 0.0, %v2104
        %2106 = vmatmul.f32.gmra.mxu0 %v1980
        %v2107 = vpop.f32.mrf.mxu0
        %v2108 = vadd.f32 0.0, %v2107
        %2109 = vdwg.mxu0
        %v2110 = vadd.f32 %v1729, %v2003
        %v2111 = vadd.f32 %v1730, %v2006
        %v2112 = vadd.f32 %v1731, %v2009
        %v2113 = vadd.f32 %v1732, %v2012
        %v2114 = vadd.f32 %v1733, %v2015
        %v2115 = vadd.f32 %v1734, %v2018
        %v2116 = vadd.f32 %v1735, %v2021
        %v2117 = vadd.f32 %v1736, %v2024
        %v2118 = vadd.f32 %v1737, %v2027
        %v2119 = vadd.f32 %v1738, %v2030
        %v2120 = vadd.f32 %v1739, %v2033
        %v2121 = vadd.f32 %v1740, %v2036
        %v2122 = vadd.f32 %v1741, %v2039
        %v2123 = vadd.f32 %v1742, %v2042
        %v2124 = vadd.f32 %v1743, %v2045
        %v2125 = vadd.f32 %v1744, %v2048
        %v2126 = vadd.f32 %v1745, %v2051
        %v2127 = vadd.f32 %v1746, %v2054
        %v2128 = vadd.f32 %v1747, %v2057
        %v2129 = vadd.f32 %v1748, %v2060
        %v2130 = vadd.f32 %v1749, %v2063
        %v2131 = vadd.f32 %v1750, %v2066
        %v2132 = vadd.f32 %v1751, %v2069
        %v2133 = vadd.f32 %v1752, %v2072
        %v2134 = vadd.f32 %v1753, %v2075
        %v2135 = vadd.f32 %v1754, %v2078
        %v2136 = vadd.f32 %v1755, %v2081
        %v2137 = vadd.f32 %v1756, %v2084
        %v2138 = vadd.f32 %v1757, %v2087
        %v2139 = vadd.f32 %v1758, %v2090
        %v2140 = vadd.f32 %v1759, %v2093
        %v2141 = vadd.f32 %v1760, %v2096
        %v2142 = vadd.f32 %v1761, %v2099
        %v2143 = vadd.f32 %v1762, %v2102
        %v2144 = vadd.f32 %v1763, %v2105
        %v2145 = vadd.f32 %v1764, %v2108
        %v2146 = vld [vmem:[%s302 + $0x14] sm:$0xff]
        %v2147 = vld [vmem:[%s302 + $0x1c] sm:$0xff]
        %v2148 = vld [vmem:[%s302 + $0x24] sm:$0xff]
        %v2149 = vld [vmem:[%s302 + $0x2c] sm:$0xff]
        %v2150 = vld [vmem:[%s302 + $0x34] sm:$0xff]
        %v2151 = vld [vmem:[%s302 + $0x3c] sm:$0xff]
        %v2152 = vld [vmem:[%s302 + $0x44] sm:$0xff]
        %v2153 = vld [vmem:[%s302 + $0x4c] sm:$0xff]
        %v2154 = vld [vmem:[%s302 + $0x54] sm:$0xff]
        %v2155 = vld [vmem:[%s302 + $0x5c] sm:$0xff]
        %v2156 = vld [vmem:[%s302 + $0x64] sm:$0xff]
        %v2157 = vld [vmem:[%s302 + $0x6c] sm:$0xff]
        %v2158 = vld [vmem:[%s302 + $0x74] sm:$0xff]
        %v2159 = vld [vmem:[%s302 + $0x7c] sm:$0xff]
        %v2160 = vld [vmem:[%s302 + $0x84] sm:$0xff]
        %v2161 = vld [vmem:[%s302 + $0x8c] sm:$0xff]
        %v2162 = vld [vmem:[%s302 + $0x94] sm:$0xff]
        %v2163 = vld [vmem:[%s302 + $0x9c] sm:$0xff]
        %v2164 = vld [vmem:[%s302 + $0xa4] sm:$0xff]
        %v2165 = vld [vmem:[%s302 + $0xac] sm:$0xff]
        %v2166 = vld [vmem:[%s302 + $0xb4] sm:$0xff]
        %v2167 = vld [vmem:[%s302 + $0xbc] sm:$0xff]
        %v2168 = vld [vmem:[%s302 + $0xc4] sm:$0xff]
        %v2169 = vld [vmem:[%s302 + $0xcc] sm:$0xff]
        %v2170 = vld [vmem:[%s302 + $0xd4] sm:$0xff]
        %v2171 = vld [vmem:[%s302 + $0xdc] sm:$0xff]
        %v2172 = vld [vmem:[%s302 + $0xe4] sm:$0xff]
        %v2173 = vld [vmem:[%s302 + $0xec] sm:$0xff]
        %v2174 = vld [vmem:[%s302 + $0xf4] sm:$0xff]
        %v2175 = vld [vmem:[%s302 + $0xfc] sm:$0xff]
        %v2176 = vld [vmem:[%s302 + $0x104] sm:$0xff]
        %v2177 = vld [vmem:[%s302 + $0x10c] sm:$0xff]
        %v2178 = vld [vmem:[%s302 + $0x114] sm:$0xff]
        %v2179 = vld [vmem:[%s302 + $0x11c] sm:$0xff]
        %v2180 = vld [vmem:[%s302 + $0x124] sm:$0xff]
        %v2181 = vld [vmem:[%s302 + $0x12c] sm:$0xff]
        %v2182 = vmul.f32 %v2146, %v341
        %v2183 = vmul.f32 %v2147, %v341
        %v2184 = vmul.f32 %v2148, %v341
        %v2185 = vmul.f32 %v2149, %v341
        %v2186 = vmul.f32 %v2150, %v341
        %v2187 = vmul.f32 %v2151, %v341
        %v2188 = vmul.f32 %v2152, %v341
        %v2189 = vmul.f32 %v2153, %v341
        %v2190 = vmul.f32 %v2154, %v341
        %v2191 = vmul.f32 %v2155, %v341
        %v2192 = vmul.f32 %v2156, %v341
        %v2193 = vmul.f32 %v2157, %v341
        %v2194 = vmul.f32 %v2158, %v341
        %v2195 = vmul.f32 %v2159, %v341
        %v2196 = vmul.f32 %v2160, %v341
        %v2197 = vmul.f32 %v2161, %v341
        %v2198 = vmul.f32 %v2162, %v341
        %v2199 = vmul.f32 %v2163, %v341
        %v2200 = vmul.f32 %v2164, %v341
        %v2201 = vmul.f32 %v2165, %v341
        %v2202 = vmul.f32 %v2166, %v341
        %v2203 = vmul.f32 %v2167, %v341
        %v2204 = vmul.f32 %v2168, %v341
        %v2205 = vmul.f32 %v2169, %v341
        %v2206 = vmul.f32 %v2170, %v341
        %v2207 = vmul.f32 %v2171, %v341
        %v2208 = vmul.f32 %v2172, %v341
        %v2209 = vmul.f32 %v2173, %v341
        %v2210 = vmul.f32 %v2174, %v341
        %v2211 = vmul.f32 %v2175, %v341
        %v2212 = vmul.f32 %v2176, %v341
        %v2213 = vmul.f32 %v2177, %v341
        %v2214 = vmul.f32 %v2178, %v341
        %v2215 = vmul.f32 %v2179, %v341
        %v2216 = vmul.f32 %v2180, %v341
        %v2217 = vmul.f32 %v2181, %v341
        %v2218 = vadd.f32 %v2182, %v381
        %v2219 = vadd.f32 %v2183, %v381
        %v2220 = vadd.f32 %v2184, %v381
        %v2221 = vadd.f32 %v2185, %v381
        %v2222 = vadd.f32 %v2186, %v381
        %v2223 = vadd.f32 %v2187, %v381
        %v2224 = vadd.f32 %v2188, %v381
        %v2225 = vadd.f32 %v2189, %v381
        %v2226 = vadd.f32 %v2190, %v381
        %v2227 = vadd.f32 %v2191, %v381
        %v2228 = vadd.f32 %v2192, %v381
        %v2229 = vadd.f32 %v2193, %v381
        %v2230 = vadd.f32 %v2194, %v381
        %v2231 = vadd.f32 %v2195, %v381
        %v2232 = vadd.f32 %v2196, %v381
        %v2233 = vadd.f32 %v2197, %v381
        %v2234 = vadd.f32 %v2198, %v381
        %v2235 = vadd.f32 %v2199, %v381
        %v2236 = vadd.f32 %v2200, %v381
        %v2237 = vadd.f32 %v2201, %v381
        %v2238 = vadd.f32 %v2202, %v381
        %v2239 = vadd.f32 %v2203, %v381
        %v2240 = vadd.f32 %v2204, %v381
        %v2241 = vadd.f32 %v2205, %v381
        %v2242 = vadd.f32 %v2206, %v381
        %v2243 = vadd.f32 %v2207, %v381
        %v2244 = vadd.f32 %v2208, %v381
        %v2245 = vadd.f32 %v2209, %v381
        %v2246 = vadd.f32 %v2210, %v381
        %v2247 = vadd.f32 %v2211, %v381
        %v2248 = vadd.f32 %v2212, %v381
        %v2249 = vadd.f32 %v2213, %v381
        %v2250 = vadd.f32 %v2214, %v381
        %v2251 = vadd.f32 %v2215, %v381
        %v2252 = vadd.f32 %v2216, %v381
        %v2253 = vadd.f32 %v2217, %v381
        %v2254 = vld [vmem:[%s4 + $0x14] sm:$0xf]
        %v2256 = vsel %vm529, %v2218, 0
        %v2259 = vsel %vm529, %v2219, 0
        %v2262 = vsel %vm529, %v2220, 0
        %v2265 = vsel %vm529, %v2221, 0
        %v2268 = vsel %vm529, %v2222, 0
        %v2271 = vsel %vm529, %v2223, 0
        %v2274 = vsel %vm529, %v2224, 0
        %v2277 = vsel %vm529, %v2225, 0
        %v2280 = vsel %vm529, %v2226, 0
        %v2283 = vsel %vm529, %v2227, 0
        %v2286 = vsel %vm529, %v2228, 0
        %v2289 = vsel %vm529, %v2229, 0
        %v2292 = vsel %vm529, %v2230, 0
        %v2295 = vsel %vm529, %v2231, 0
        %v2298 = vsel %vm529, %v2232, 0
        %v2301 = vsel %vm529, %v2233, 0
        %v2304 = vsel %vm529, %v2234, 0
        %v2307 = vsel %vm529, %v2235, 0
        %v2310 = vsel %vm529, %v2236, 0
        %v2313 = vsel %vm529, %v2237, 0
        %v2316 = vsel %vm529, %v2238, 0
        %v2319 = vsel %vm529, %v2239, 0
        %v2322 = vsel %vm529, %v2240, 0
        %v2325 = vsel %vm529, %v2241, 0
        %v2328 = vsel %vm529, %v2242, 0
        %v2331 = vsel %vm529, %v2243, 0
        %v2334 = vsel %vm529, %v2244, 0
        %v2337 = vsel %vm529, %v2245, 0
        %v2340 = vsel %vm529, %v2246, 0
        %v2343 = vsel %vm529, %v2247, 0
        %v2346 = vsel %vm529, %v2248, 0
        %v2349 = vsel %vm529, %v2249, 0
        %v2352 = vsel %vm529, %v2250, 0
        %v2355 = vsel %vm529, %v2251, 0
        %v2358 = vsel %vm529, %v2252, 0
        %v2361 = vsel %vm529, %v2253, 0
        %v2364 = vsel %vm638, %v2254, 0
        %2366 = vmatpush.msra.mxu0 0.0
        %2367 = vmatpush.msra.mxu0 0.0
        %2368 = vmatpush.msra.mxu0 0.0
        %2369 = vmatpush.msra.mxu0 0.0
        %2370 = vmatpush.msra.mxu0 0.0
        %2371 = vmatpush.msra.mxu0 0.0
        %2372 = vmatpush.msra.mxu0 0.0
        %2373 = vmatpush.msra.mxu0 0.0
        %2374 = vmatpush.msra.mxu0 0.0
        %2375 = vmatpush.msra.mxu0 0.0
        %2376 = vmatpush.msra.mxu0 0.0
        %2377 = vmatpush.msra.mxu0 0.0
        %2378 = vmatpush.msra.mxu0 0.0
        %2379 = vmatpush.msra.mxu0 0.0
        %2380 = vmatpush.msra.mxu0 0.0
        %2381 = vmatpush.msra.mxu0 %v2364
        %2382 = vmatmul.f32.gmra.mxu0 %v2256
        %v2383 = vpop.f32.mrf.mxu0
        %v2384 = vadd.f32 0.0, %v2383
        %2385 = vmatmul.f32.gmra.mxu0 %v2259
        %v2386 = vpop.f32.mrf.mxu0
        %v2387 = vadd.f32 0.0, %v2386
        %2388 = vmatmul.f32.gmra.mxu0 %v2262
        %v2389 = vpop.f32.mrf.mxu0
        %v2390 = vadd.f32 0.0, %v2389
        %2391 = vmatmul.f32.gmra.mxu0 %v2265
        %v2392 = vpop.f32.mrf.mxu0
        %v2393 = vadd.f32 0.0, %v2392
        %2394 = vmatmul.f32.gmra.mxu0 %v2268
        %v2395 = vpop.f32.mrf.mxu0
        %v2396 = vadd.f32 0.0, %v2395
        %2397 = vmatmul.f32.gmra.mxu0 %v2271
        %v2398 = vpop.f32.mrf.mxu0
        %v2399 = vadd.f32 0.0, %v2398
        %2400 = vmatmul.f32.gmra.mxu0 %v2274
        %v2401 = vpop.f32.mrf.mxu0
        %v2402 = vadd.f32 0.0, %v2401
        %2403 = vmatmul.f32.gmra.mxu0 %v2277
        %v2404 = vpop.f32.mrf.mxu0
        %v2405 = vadd.f32 0.0, %v2404
        %2406 = vmatmul.f32.gmra.mxu0 %v2280
        %v2407 = vpop.f32.mrf.mxu0
        %v2408 = vadd.f32 0.0, %v2407
        %2409 = vmatmul.f32.gmra.mxu0 %v2283
        %v2410 = vpop.f32.mrf.mxu0
        %v2411 = vadd.f32 0.0, %v2410
        %2412 = vmatmul.f32.gmra.mxu0 %v2286
        %v2413 = vpop.f32.mrf.mxu0
        %v2414 = vadd.f32 0.0, %v2413
        %2415 = vmatmul.f32.gmra.mxu0 %v2289
        %v2416 = vpop.f32.mrf.mxu0
        %v2417 = vadd.f32 0.0, %v2416
        %2418 = vmatmul.f32.gmra.mxu0 %v2292
        %v2419 = vpop.f32.mrf.mxu0
        %v2420 = vadd.f32 0.0, %v2419
        %2421 = vmatmul.f32.gmra.mxu0 %v2295
        %v2422 = vpop.f32.mrf.mxu0
        %v2423 = vadd.f32 0.0, %v2422
        %2424 = vmatmul.f32.gmra.mxu0 %v2298
        %v2425 = vpop.f32.mrf.mxu0
        %v2426 = vadd.f32 0.0, %v2425
        %2427 = vmatmul.f32.gmra.mxu0 %v2301
        %v2428 = vpop.f32.mrf.mxu0
        %v2429 = vadd.f32 0.0, %v2428
        %2430 = vmatmul.f32.gmra.mxu0 %v2304
        %v2431 = vpop.f32.mrf.mxu0
        %v2432 = vadd.f32 0.0, %v2431
        %2433 = vmatmul.f32.gmra.mxu0 %v2307
        %v2434 = vpop.f32.mrf.mxu0
        %v2435 = vadd.f32 0.0, %v2434
        %2436 = vmatmul.f32.gmra.mxu0 %v2310
        %v2437 = vpop.f32.mrf.mxu0
        %v2438 = vadd.f32 0.0, %v2437
        %2439 = vmatmul.f32.gmra.mxu0 %v2313
        %v2440 = vpop.f32.mrf.mxu0
        %v2441 = vadd.f32 0.0, %v2440
        %2442 = vmatmul.f32.gmra.mxu0 %v2316
        %v2443 = vpop.f32.mrf.mxu0
        %v2444 = vadd.f32 0.0, %v2443
        %2445 = vmatmul.f32.gmra.mxu0 %v2319
        %v2446 = vpop.f32.mrf.mxu0
        %v2447 = vadd.f32 0.0, %v2446
        %2448 = vmatmul.f32.gmra.mxu0 %v2322
        %v2449 = vpop.f32.mrf.mxu0
        %v2450 = vadd.f32 0.0, %v2449
        %2451 = vmatmul.f32.gmra.mxu0 %v2325
        %v2452 = vpop.f32.mrf.mxu0
        %v2453 = vadd.f32 0.0, %v2452
        %2454 = vmatmul.f32.gmra.mxu0 %v2328
        %v2455 = vpop.f32.mrf.mxu0
        %v2456 = vadd.f32 0.0, %v2455
        %2457 = vmatmul.f32.gmra.mxu0 %v2331
        %v2458 = vpop.f32.mrf.mxu0
        %v2459 = vadd.f32 0.0, %v2458
        %2460 = vmatmul.f32.gmra.mxu0 %v2334
        %v2461 = vpop.f32.mrf.mxu0
        %v2462 = vadd.f32 0.0, %v2461
        %2463 = vmatmul.f32.gmra.mxu0 %v2337
        %v2464 = vpop.f32.mrf.mxu0
        %v2465 = vadd.f32 0.0, %v2464
        %2466 = vmatmul.f32.gmra.mxu0 %v2340
        %v2467 = vpop.f32.mrf.mxu0
        %v2468 = vadd.f32 0.0, %v2467
        %2469 = vmatmul.f32.gmra.mxu0 %v2343
        %v2470 = vpop.f32.mrf.mxu0
        %v2471 = vadd.f32 0.0, %v2470
        %2472 = vmatmul.f32.gmra.mxu0 %v2346
        %v2473 = vpop.f32.mrf.mxu0
        %v2474 = vadd.f32 0.0, %v2473
        %2475 = vmatmul.f32.gmra.mxu0 %v2349
        %v2476 = vpop.f32.mrf.mxu0
        %v2477 = vadd.f32 0.0, %v2476
        %2478 = vmatmul.f32.gmra.mxu0 %v2352
        %v2479 = vpop.f32.mrf.mxu0
        %v2480 = vadd.f32 0.0, %v2479
        %2481 = vmatmul.f32.gmra.mxu0 %v2355
        %v2482 = vpop.f32.mrf.mxu0
        %v2483 = vadd.f32 0.0, %v2482
        %2484 = vmatmul.f32.gmra.mxu0 %v2358
        %v2485 = vpop.f32.mrf.mxu0
        %v2486 = vadd.f32 0.0, %v2485
        %2487 = vmatmul.f32.gmra.mxu0 %v2361
        %v2488 = vpop.f32.mrf.mxu0
        %v2489 = vadd.f32 0.0, %v2488
        %2490 = vdwg.mxu0
        %v2491 = vadd.f32 %v2110, %v2384
        %v2492 = vadd.f32 %v2111, %v2387
        %v2493 = vadd.f32 %v2112, %v2390
        %v2494 = vadd.f32 %v2113, %v2393
        %v2495 = vadd.f32 %v2114, %v2396
        %v2496 = vadd.f32 %v2115, %v2399
        %v2497 = vadd.f32 %v2116, %v2402
        %v2498 = vadd.f32 %v2117, %v2405
        %v2499 = vadd.f32 %v2118, %v2408
        %v2500 = vadd.f32 %v2119, %v2411
        %v2501 = vadd.f32 %v2120, %v2414
        %v2502 = vadd.f32 %v2121, %v2417
        %v2503 = vadd.f32 %v2122, %v2420
        %v2504 = vadd.f32 %v2123, %v2423
        %v2505 = vadd.f32 %v2124, %v2426
        %v2506 = vadd.f32 %v2125, %v2429
        %v2507 = vadd.f32 %v2126, %v2432
        %v2508 = vadd.f32 %v2127, %v2435
        %v2509 = vadd.f32 %v2128, %v2438
        %v2510 = vadd.f32 %v2129, %v2441
        %v2511 = vadd.f32 %v2130, %v2444
        %v2512 = vadd.f32 %v2131, %v2447
        %v2513 = vadd.f32 %v2132, %v2450
        %v2514 = vadd.f32 %v2133, %v2453
        %v2515 = vadd.f32 %v2134, %v2456
        %v2516 = vadd.f32 %v2135, %v2459
        %v2517 = vadd.f32 %v2136, %v2462
        %v2518 = vadd.f32 %v2137, %v2465
        %v2519 = vadd.f32 %v2138, %v2468
        %v2520 = vadd.f32 %v2139, %v2471
        %v2521 = vadd.f32 %v2140, %v2474
        %v2522 = vadd.f32 %v2141, %v2477
        %v2523 = vadd.f32 %v2142, %v2480
        %v2524 = vadd.f32 %v2143, %v2483
        %v2525 = vadd.f32 %v2144, %v2486
        %v2526 = vadd.f32 %v2145, %v2489
        %v2527 = vld [vmem:[%s302 + $0x24] sm:$0xff]
        %v2528 = vld [vmem:[%s302 + $0x2c] sm:$0xff]
        %v2529 = vld [vmem:[%s302 + $0x34] sm:$0xff]
        %v2530 = vld [vmem:[%s302 + $0x3c] sm:$0xff]
        %v2531 = vld [vmem:[%s302 + $0x44] sm:$0xff]
        %v2532 = vld [vmem:[%s302 + $0x4c] sm:$0xff]
        %v2533 = vld [vmem:[%s302 + $0x54] sm:$0xff]
        %v2534 = vld [vmem:[%s302 + $0x5c] sm:$0xff]
        %v2535 = vld [vmem:[%s302 + $0x64] sm:$0xff]
        %v2536 = vld [vmem:[%s302 + $0x6c] sm:$0xff]
        %v2537 = vld [vmem:[%s302 + $0x74] sm:$0xff]
        %v2538 = vld [vmem:[%s302 + $0x7c] sm:$0xff]
        %v2539 = vld [vmem:[%s302 + $0x84] sm:$0xff]
        %v2540 = vld [vmem:[%s302 + $0x8c] sm:$0xff]
        %v2541 = vld [vmem:[%s302 + $0x94] sm:$0xff]
        %v2542 = vld [vmem:[%s302 + $0x9c] sm:$0xff]
        %v2543 = vld [vmem:[%s302 + $0xa4] sm:$0xff]
        %v2544 = vld [vmem:[%s302 + $0xac] sm:$0xff]
        %v2545 = vld [vmem:[%s302 + $0xb4] sm:$0xff]
        %v2546 = vld [vmem:[%s302 + $0xbc] sm:$0xff]
        %v2547 = vld [vmem:[%s302 + $0xc4] sm:$0xff]
        %v2548 = vld [vmem:[%s302 + $0xcc] sm:$0xff]
        %v2549 = vld [vmem:[%s302 + $0xd4] sm:$0xff]
        %v2550 = vld [vmem:[%s302 + $0xdc] sm:$0xff]
        %v2551 = vld [vmem:[%s302 + $0xe4] sm:$0xff]
        %v2552 = vld [vmem:[%s302 + $0xec] sm:$0xff]
        %v2553 = vld [vmem:[%s302 + $0xf4] sm:$0xff]
        %v2554 = vld [vmem:[%s302 + $0xfc] sm:$0xff]
        %v2555 = vld [vmem:[%s302 + $0x104] sm:$0xff]
        %v2556 = vld [vmem:[%s302 + $0x10c] sm:$0xff]
        %v2557 = vld [vmem:[%s302 + $0x114] sm:$0xff]
        %v2558 = vld [vmem:[%s302 + $0x11c] sm:$0xff]
        %v2559 = vld [vmem:[%s302 + $0x124] sm:$0xff]
        %v2560 = vld [vmem:[%s302 + $0x12c] sm:$0xff]
        %v2561 = vld [vmem:[%s302 + $0x134] sm:$0xff]
        %v2562 = vld [vmem:[%s302 + $0x13c] sm:$0xff]
        %v2563 = vmul.f32 %v2527, %v341
        %v2564 = vmul.f32 %v2528, %v341
        %v2565 = vmul.f32 %v2529, %v341
        %v2566 = vmul.f32 %v2530, %v341
        %v2567 = vmul.f32 %v2531, %v341
        %v2568 = vmul.f32 %v2532, %v341
        %v2569 = vmul.f32 %v2533, %v341
        %v2570 = vmul.f32 %v2534, %v341
        %v2571 = vmul.f32 %v2535, %v341
        %v2572 = vmul.f32 %v2536, %v341
        %v2573 = vmul.f32 %v2537, %v341
        %v2574 = vmul.f32 %v2538, %v341
        %v2575 = vmul.f32 %v2539, %v341
        %v2576 = vmul.f32 %v2540, %v341
        %v2577 = vmul.f32 %v2541, %v341
        %v2578 = vmul.f32 %v2542, %v341
        %v2579 = vmul.f32 %v2543, %v341
        %v2580 = vmul.f32 %v2544, %v341
        %v2581 = vmul.f32 %v2545, %v341
        %v2582 = vmul.f32 %v2546, %v341
        %v2583 = vmul.f32 %v2547, %v341
        %v2584 = vmul.f32 %v2548, %v341
        %v2585 = vmul.f32 %v2549, %v341
        %v2586 = vmul.f32 %v2550, %v341
        %v2587 = vmul.f32 %v2551, %v341
        %v2588 = vmul.f32 %v2552, %v341
        %v2589 = vmul.f32 %v2553, %v341
        %v2590 = vmul.f32 %v2554, %v341
        %v2591 = vmul.f32 %v2555, %v341
        %v2592 = vmul.f32 %v2556, %v341
        %v2593 = vmul.f32 %v2557, %v341
        %v2594 = vmul.f32 %v2558, %v341
        %v2595 = vmul.f32 %v2559, %v341
        %v2596 = vmul.f32 %v2560, %v341
        %v2597 = vmul.f32 %v2561, %v341
        %v2598 = vmul.f32 %v2562, %v341
        %v2599 = vadd.f32 %v2563, %v381
        %v2600 = vadd.f32 %v2564, %v381
        %v2601 = vadd.f32 %v2565, %v381
        %v2602 = vadd.f32 %v2566, %v381
        %v2603 = vadd.f32 %v2567, %v381
        %v2604 = vadd.f32 %v2568, %v381
        %v2605 = vadd.f32 %v2569, %v381
        %v2606 = vadd.f32 %v2570, %v381
        %v2607 = vadd.f32 %v2571, %v381
        %v2608 = vadd.f32 %v2572, %v381
        %v2609 = vadd.f32 %v2573, %v381
        %v2610 = vadd.f32 %v2574, %v381
        %v2611 = vadd.f32 %v2575, %v381
        %v2612 = vadd.f32 %v2576, %v381
        %v2613 = vadd.f32 %v2577, %v381
        %v2614 = vadd.f32 %v2578, %v381
        %v2615 = vadd.f32 %v2579, %v381
        %v2616 = vadd.f32 %v2580, %v381
        %v2617 = vadd.f32 %v2581, %v381
        %v2618 = vadd.f32 %v2582, %v381
        %v2619 = vadd.f32 %v2583, %v381
        %v2620 = vadd.f32 %v2584, %v381
        %v2621 = vadd.f32 %v2585, %v381
        %v2622 = vadd.f32 %v2586, %v381
        %v2623 = vadd.f32 %v2587, %v381
        %v2624 = vadd.f32 %v2588, %v381
        %v2625 = vadd.f32 %v2589, %v381
        %v2626 = vadd.f32 %v2590, %v381
        %v2627 = vadd.f32 %v2591, %v381
        %v2628 = vadd.f32 %v2592, %v381
        %v2629 = vadd.f32 %v2593, %v381
        %v2630 = vadd.f32 %v2594, %v381
        %v2631 = vadd.f32 %v2595, %v381
        %v2632 = vadd.f32 %v2596, %v381
        %v2633 = vadd.f32 %v2597, %v381
        %v2634 = vadd.f32 %v2598, %v381
        %v2635 = vld [vmem:[%s4 + $0x18] sm:$0xf]
        %v2637 = vsel %vm529, %v2599, 0
        %v2640 = vsel %vm529, %v2600, 0
        %v2643 = vsel %vm529, %v2601, 0
        %v2646 = vsel %vm529, %v2602, 0
        %v2649 = vsel %vm529, %v2603, 0
        %v2652 = vsel %vm529, %v2604, 0
        %v2655 = vsel %vm529, %v2605, 0
        %v2658 = vsel %vm529, %v2606, 0
        %v2661 = vsel %vm529, %v2607, 0
        %v2664 = vsel %vm529, %v2608, 0
        %v2667 = vsel %vm529, %v2609, 0
        %v2670 = vsel %vm529, %v2610, 0
        %v2673 = vsel %vm529, %v2611, 0
        %v2676 = vsel %vm529, %v2612, 0
        %v2679 = vsel %vm529, %v2613, 0
        %v2682 = vsel %vm529, %v2614, 0
        %v2685 = vsel %vm529, %v2615, 0
        %v2688 = vsel %vm529, %v2616, 0
        %v2691 = vsel %vm529, %v2617, 0
        %v2694 = vsel %vm529, %v2618, 0
        %v2697 = vsel %vm529, %v2619, 0
        %v2700 = vsel %vm529, %v2620, 0
        %v2703 = vsel %vm529, %v2621, 0
        %v2706 = vsel %vm529, %v2622, 0
        %v2709 = vsel %vm529, %v2623, 0
        %v2712 = vsel %vm529, %v2624, 0
        %v2715 = vsel %vm529, %v2625, 0
        %v2718 = vsel %vm529, %v2626, 0
        %v2721 = vsel %vm529, %v2627, 0
        %v2724 = vsel %vm529, %v2628, 0
        %v2727 = vsel %vm529, %v2629, 0
        %v2730 = vsel %vm529, %v2630, 0
        %v2733 = vsel %vm529, %v2631, 0
        %v2736 = vsel %vm529, %v2632, 0
        %v2739 = vsel %vm529, %v2633, 0
        %v2742 = vsel %vm529, %v2634, 0
        %v2745 = vsel %vm638, %v2635, 0
        %2747 = vmatpush.msra.mxu0 0.0
        %2748 = vmatpush.msra.mxu0 0.0
        %2749 = vmatpush.msra.mxu0 0.0
        %2750 = vmatpush.msra.mxu0 0.0
        %2751 = vmatpush.msra.mxu0 0.0
        %2752 = vmatpush.msra.mxu0 0.0
        %2753 = vmatpush.msra.mxu0 0.0
        %2754 = vmatpush.msra.mxu0 0.0
        %2755 = vmatpush.msra.mxu0 0.0
        %2756 = vmatpush.msra.mxu0 0.0
        %2757 = vmatpush.msra.mxu0 0.0
        %2758 = vmatpush.msra.mxu0 0.0
        %2759 = vmatpush.msra.mxu0 0.0
        %2760 = vmatpush.msra.mxu0 0.0
        %2761 = vmatpush.msra.mxu0 0.0
        %2762 = vmatpush.msra.mxu0 %v2745
        %2763 = vmatmul.f32.gmra.mxu0 %v2637
        %v2764 = vpop.f32.mrf.mxu0
        %v2765 = vadd.f32 0.0, %v2764
        %2766 = vmatmul.f32.gmra.mxu0 %v2640
        %v2767 = vpop.f32.mrf.mxu0
        %v2768 = vadd.f32 0.0, %v2767
        %2769 = vmatmul.f32.gmra.mxu0 %v2643
        %v2770 = vpop.f32.mrf.mxu0
        %v2771 = vadd.f32 0.0, %v2770
        %2772 = vmatmul.f32.gmra.mxu0 %v2646
        %v2773 = vpop.f32.mrf.mxu0
        %v2774 = vadd.f32 0.0, %v2773
        %2775 = vmatmul.f32.gmra.mxu0 %v2649
        %v2776 = vpop.f32.mrf.mxu0
        %v2777 = vadd.f32 0.0, %v2776
        %2778 = vmatmul.f32.gmra.mxu0 %v2652
        %v2779 = vpop.f32.mrf.mxu0
        %v2780 = vadd.f32 0.0, %v2779
        %2781 = vmatmul.f32.gmra.mxu0 %v2655
        %v2782 = vpop.f32.mrf.mxu0
        %v2783 = vadd.f32 0.0, %v2782
        %2784 = vmatmul.f32.gmra.mxu0 %v2658
        %v2785 = vpop.f32.mrf.mxu0
        %v2786 = vadd.f32 0.0, %v2785
        %2787 = vmatmul.f32.gmra.mxu0 %v2661
        %v2788 = vpop.f32.mrf.mxu0
        %v2789 = vadd.f32 0.0, %v2788
        %2790 = vmatmul.f32.gmra.mxu0 %v2664
        %v2791 = vpop.f32.mrf.mxu0
        %v2792 = vadd.f32 0.0, %v2791
        %2793 = vmatmul.f32.gmra.mxu0 %v2667
        %v2794 = vpop.f32.mrf.mxu0
        %v2795 = vadd.f32 0.0, %v2794
        %2796 = vmatmul.f32.gmra.mxu0 %v2670
        %v2797 = vpop.f32.mrf.mxu0
        %v2798 = vadd.f32 0.0, %v2797
        %2799 = vmatmul.f32.gmra.mxu0 %v2673
        %v2800 = vpop.f32.mrf.mxu0
        %v2801 = vadd.f32 0.0, %v2800
        %2802 = vmatmul.f32.gmra.mxu0 %v2676
        %v2803 = vpop.f32.mrf.mxu0
        %v2804 = vadd.f32 0.0, %v2803
        %2805 = vmatmul.f32.gmra.mxu0 %v2679
        %v2806 = vpop.f32.mrf.mxu0
        %v2807 = vadd.f32 0.0, %v2806
        %2808 = vmatmul.f32.gmra.mxu0 %v2682
        %v2809 = vpop.f32.mrf.mxu0
        %v2810 = vadd.f32 0.0, %v2809
        %2811 = vmatmul.f32.gmra.mxu0 %v2685
        %v2812 = vpop.f32.mrf.mxu0
        %v2813 = vadd.f32 0.0, %v2812
        %2814 = vmatmul.f32.gmra.mxu0 %v2688
        %v2815 = vpop.f32.mrf.mxu0
        %v2816 = vadd.f32 0.0, %v2815
        %2817 = vmatmul.f32.gmra.mxu0 %v2691
        %v2818 = vpop.f32.mrf.mxu0
        %v2819 = vadd.f32 0.0, %v2818
        %2820 = vmatmul.f32.gmra.mxu0 %v2694
        %v2821 = vpop.f32.mrf.mxu0
        %v2822 = vadd.f32 0.0, %v2821
        %2823 = vmatmul.f32.gmra.mxu0 %v2697
        %v2824 = vpop.f32.mrf.mxu0
        %v2825 = vadd.f32 0.0, %v2824
        %2826 = vmatmul.f32.gmra.mxu0 %v2700
        %v2827 = vpop.f32.mrf.mxu0
        %v2828 = vadd.f32 0.0, %v2827
        %2829 = vmatmul.f32.gmra.mxu0 %v2703
        %v2830 = vpop.f32.mrf.mxu0
        %v2831 = vadd.f32 0.0, %v2830
        %2832 = vmatmul.f32.gmra.mxu0 %v2706
        %v2833 = vpop.f32.mrf.mxu0
        %v2834 = vadd.f32 0.0, %v2833
        %2835 = vmatmul.f32.gmra.mxu0 %v2709
        %v2836 = vpop.f32.mrf.mxu0
        %v2837 = vadd.f32 0.0, %v2836
        %2838 = vmatmul.f32.gmra.mxu0 %v2712
        %v2839 = vpop.f32.mrf.mxu0
        %v2840 = vadd.f32 0.0, %v2839
        %2841 = vmatmul.f32.gmra.mxu0 %v2715
        %v2842 = vpop.f32.mrf.mxu0
        %v2843 = vadd.f32 0.0, %v2842
        %2844 = vmatmul.f32.gmra.mxu0 %v2718
        %v2845 = vpop.f32.mrf.mxu0
        %v2846 = vadd.f32 0.0, %v2845
        %2847 = vmatmul.f32.gmra.mxu0 %v2721
        %v2848 = vpop.f32.mrf.mxu0
        %v2849 = vadd.f32 0.0, %v2848
        %2850 = vmatmul.f32.gmra.mxu0 %v2724
        %v2851 = vpop.f32.mrf.mxu0
        %v2852 = vadd.f32 0.0, %v2851
        %2853 = vmatmul.f32.gmra.mxu0 %v2727
        %v2854 = vpop.f32.mrf.mxu0
        %v2855 = vadd.f32 0.0, %v2854
        %2856 = vmatmul.f32.gmra.mxu0 %v2730
        %v2857 = vpop.f32.mrf.mxu0
        %v2858 = vadd.f32 0.0, %v2857
        %2859 = vmatmul.f32.gmra.mxu0 %v2733
        %v2860 = vpop.f32.mrf.mxu0
        %v2861 = vadd.f32 0.0, %v2860
        %2862 = vmatmul.f32.gmra.mxu0 %v2736
        %v2863 = vpop.f32.mrf.mxu0
        %v2864 = vadd.f32 0.0, %v2863
        %2865 = vmatmul.f32.gmra.mxu0 %v2739
        %v2866 = vpop.f32.mrf.mxu0
        %v2867 = vadd.f32 0.0, %v2866
        %2868 = vmatmul.f32.gmra.mxu0 %v2742
        %v2869 = vpop.f32.mrf.mxu0
        %v2870 = vadd.f32 0.0, %v2869
        %2871 = vdwg.mxu0
        %v2872 = vadd.f32 %v2491, %v2765
        %v2873 = vadd.f32 %v2492, %v2768
        %v2874 = vadd.f32 %v2493, %v2771
        %v2875 = vadd.f32 %v2494, %v2774
        %v2876 = vadd.f32 %v2495, %v2777
        %v2877 = vadd.f32 %v2496, %v2780
        %v2878 = vadd.f32 %v2497, %v2783
        %v2879 = vadd.f32 %v2498, %v2786
        %v2880 = vadd.f32 %v2499, %v2789
        %v2881 = vadd.f32 %v2500, %v2792
        %v2882 = vadd.f32 %v2501, %v2795
        %v2883 = vadd.f32 %v2502, %v2798
        %v2884 = vadd.f32 %v2503, %v2801
        %v2885 = vadd.f32 %v2504, %v2804
        %v2886 = vadd.f32 %v2505, %v2807
        %v2887 = vadd.f32 %v2506, %v2810
        %v2888 = vadd.f32 %v2507, %v2813
        %v2889 = vadd.f32 %v2508, %v2816
        %v2890 = vadd.f32 %v2509, %v2819
        %v2891 = vadd.f32 %v2510, %v2822
        %v2892 = vadd.f32 %v2511, %v2825
        %v2893 = vadd.f32 %v2512, %v2828
        %v2894 = vadd.f32 %v2513, %v2831
        %v2895 = vadd.f32 %v2514, %v2834
        %v2896 = vadd.f32 %v2515, %v2837
        %v2897 = vadd.f32 %v2516, %v2840
        %v2898 = vadd.f32 %v2517, %v2843
        %v2899 = vadd.f32 %v2518, %v2846
        %v2900 = vadd.f32 %v2519, %v2849
        %v2901 = vadd.f32 %v2520, %v2852
        %v2902 = vadd.f32 %v2521, %v2855
        %v2903 = vadd.f32 %v2522, %v2858
        %v2904 = vadd.f32 %v2523, %v2861
        %v2905 = vadd.f32 %v2524, %v2864
        %v2906 = vadd.f32 %v2525, %v2867
        %v2907 = vadd.f32 %v2526, %v2870
        %v2908 = vld [vmem:[%s302 + $0x25] sm:$0xff]
        %v2909 = vld [vmem:[%s302 + $0x2d] sm:$0xff]
        %v2910 = vld [vmem:[%s302 + $0x35] sm:$0xff]
        %v2911 = vld [vmem:[%s302 + $0x3d] sm:$0xff]
        %v2912 = vld [vmem:[%s302 + $0x45] sm:$0xff]
        %v2913 = vld [vmem:[%s302 + $0x4d] sm:$0xff]
        %v2914 = vld [vmem:[%s302 + $0x55] sm:$0xff]
        %v2915 = vld [vmem:[%s302 + $0x5d] sm:$0xff]
        %v2916 = vld [vmem:[%s302 + $0x65] sm:$0xff]
        %v2917 = vld [vmem:[%s302 + $0x6d] sm:$0xff]
        %v2918 = vld [vmem:[%s302 + $0x75] sm:$0xff]
        %v2919 = vld [vmem:[%s302 + $0x7d] sm:$0xff]
        %v2920 = vld [vmem:[%s302 + $0x85] sm:$0xff]
        %v2921 = vld [vmem:[%s302 + $0x8d] sm:$0xff]
        %v2922 = vld [vmem:[%s302 + $0x95] sm:$0xff]
        %v2923 = vld [vmem:[%s302 + $0x9d] sm:$0xff]
        %v2924 = vld [vmem:[%s302 + $0xa5] sm:$0xff]
        %v2925 = vld [vmem:[%s302 + $0xad] sm:$0xff]
        %v2926 = vld [vmem:[%s302 + $0xb5] sm:$0xff]
        %v2927 = vld [vmem:[%s302 + $0xbd] sm:$0xff]
        %v2928 = vld [vmem:[%s302 + $0xc5] sm:$0xff]
        %v2929 = vld [vmem:[%s302 + $0xcd] sm:$0xff]
        %v2930 = vld [vmem:[%s302 + $0xd5] sm:$0xff]
        %v2931 = vld [vmem:[%s302 + $0xdd] sm:$0xff]
        %v2932 = vld [vmem:[%s302 + $0xe5] sm:$0xff]
        %v2933 = vld [vmem:[%s302 + $0xed] sm:$0xff]
        %v2934 = vld [vmem:[%s302 + $0xf5] sm:$0xff]
        %v2935 = vld [vmem:[%s302 + $0xfd] sm:$0xff]
        %v2936 = vld [vmem:[%s302 + $0x105] sm:$0xff]
        %v2937 = vld [vmem:[%s302 + $0x10d] sm:$0xff]
        %v2938 = vld [vmem:[%s302 + $0x115] sm:$0xff]
        %v2939 = vld [vmem:[%s302 + $0x11d] sm:$0xff]
        %v2940 = vld [vmem:[%s302 + $0x125] sm:$0xff]
        %v2941 = vld [vmem:[%s302 + $0x12d] sm:$0xff]
        %v2942 = vld [vmem:[%s302 + $0x135] sm:$0xff]
        %v2943 = vld [vmem:[%s302 + $0x13d] sm:$0xff]
        %v2944 = vmul.f32 %v2908, %v341
        %v2945 = vmul.f32 %v2909, %v341
        %v2946 = vmul.f32 %v2910, %v341
        %v2947 = vmul.f32 %v2911, %v341
        %v2948 = vmul.f32 %v2912, %v341
        %v2949 = vmul.f32 %v2913, %v341
        %v2950 = vmul.f32 %v2914, %v341
        %v2951 = vmul.f32 %v2915, %v341
        %v2952 = vmul.f32 %v2916, %v341
        %v2953 = vmul.f32 %v2917, %v341
        %v2954 = vmul.f32 %v2918, %v341
        %v2955 = vmul.f32 %v2919, %v341
        %v2956 = vmul.f32 %v2920, %v341
        %v2957 = vmul.f32 %v2921, %v341
        %v2958 = vmul.f32 %v2922, %v341
        %v2959 = vmul.f32 %v2923, %v341
        %v2960 = vmul.f32 %v2924, %v341
        %v2961 = vmul.f32 %v2925, %v341
        %v2962 = vmul.f32 %v2926, %v341
        %v2963 = vmul.f32 %v2927, %v341
        %v2964 = vmul.f32 %v2928, %v341
        %v2965 = vmul.f32 %v2929, %v341
        %v2966 = vmul.f32 %v2930, %v341
        %v2967 = vmul.f32 %v2931, %v341
        %v2968 = vmul.f32 %v2932, %v341
        %v2969 = vmul.f32 %v2933, %v341
        %v2970 = vmul.f32 %v2934, %v341
        %v2971 = vmul.f32 %v2935, %v341
        %v2972 = vmul.f32 %v2936, %v341
        %v2973 = vmul.f32 %v2937, %v341
        %v2974 = vmul.f32 %v2938, %v341
        %v2975 = vmul.f32 %v2939, %v341
        %v2976 = vmul.f32 %v2940, %v341
        %v2977 = vmul.f32 %v2941, %v341
        %v2978 = vmul.f32 %v2942, %v341
        %v2979 = vmul.f32 %v2943, %v341
        %v2980 = vadd.f32 %v2944, %v381
        %v2981 = vadd.f32 %v2945, %v381
        %v2982 = vadd.f32 %v2946, %v381
        %v2983 = vadd.f32 %v2947, %v381
        %v2984 = vadd.f32 %v2948, %v381
        %v2985 = vadd.f32 %v2949, %v381
        %v2986 = vadd.f32 %v2950, %v381
        %v2987 = vadd.f32 %v2951, %v381
        %v2988 = vadd.f32 %v2952, %v381
        %v2989 = vadd.f32 %v2953, %v381
        %v2990 = vadd.f32 %v2954, %v381
        %v2991 = vadd.f32 %v2955, %v381
        %v2992 = vadd.f32 %v2956, %v381
        %v2993 = vadd.f32 %v2957, %v381
        %v2994 = vadd.f32 %v2958, %v381
        %v2995 = vadd.f32 %v2959, %v381
        %v2996 = vadd.f32 %v2960, %v381
        %v2997 = vadd.f32 %v2961, %v381
        %v2998 = vadd.f32 %v2962, %v381
        %v2999 = vadd.f32 %v2963, %v381
        %v3000 = vadd.f32 %v2964, %v381
        %v3001 = vadd.f32 %v2965, %v381
        %v3002 = vadd.f32 %v2966, %v381
        %v3003 = vadd.f32 %v2967, %v381
        %v3004 = vadd.f32 %v2968, %v381
        %v3005 = vadd.f32 %v2969, %v381
        %v3006 = vadd.f32 %v2970, %v381
        %v3007 = vadd.f32 %v2971, %v381
        %v3008 = vadd.f32 %v2972, %v381
        %v3009 = vadd.f32 %v2973, %v381
        %v3010 = vadd.f32 %v2974, %v381
        %v3011 = vadd.f32 %v2975, %v381
        %v3012 = vadd.f32 %v2976, %v381
        %v3013 = vadd.f32 %v2977, %v381
        %v3014 = vadd.f32 %v2978, %v381
        %v3015 = vadd.f32 %v2979, %v381
        %v3016 = vld [vmem:[%s4 + $0x1c] sm:$0xf]
        %v3018 = vsel %vm529, %v2980, 0
        %v3021 = vsel %vm529, %v2981, 0
        %v3024 = vsel %vm529, %v2982, 0
        %v3027 = vsel %vm529, %v2983, 0
        %v3030 = vsel %vm529, %v2984, 0
        %v3033 = vsel %vm529, %v2985, 0
        %v3036 = vsel %vm529, %v2986, 0
        %v3039 = vsel %vm529, %v2987, 0
        %v3042 = vsel %vm529, %v2988, 0
        %v3045 = vsel %vm529, %v2989, 0
        %v3048 = vsel %vm529, %v2990, 0
        %v3051 = vsel %vm529, %v2991, 0
        %v3054 = vsel %vm529, %v2992, 0
        %v3057 = vsel %vm529, %v2993, 0
        %v3060 = vsel %vm529, %v2994, 0
        %v3063 = vsel %vm529, %v2995, 0
        %v3066 = vsel %vm529, %v2996, 0
        %v3069 = vsel %vm529, %v2997, 0
        %v3072 = vsel %vm529, %v2998, 0
        %v3075 = vsel %vm529, %v2999, 0
        %v3078 = vsel %vm529, %v3000, 0
        %v3081 = vsel %vm529, %v3001, 0
        %v3084 = vsel %vm529, %v3002, 0
        %v3087 = vsel %vm529, %v3003, 0
        %v3090 = vsel %vm529, %v3004, 0
        %v3093 = vsel %vm529, %v3005, 0
        %v3096 = vsel %vm529, %v3006, 0
        %v3099 = vsel %vm529, %v3007, 0
        %v3102 = vsel %vm529, %v3008, 0
        %v3105 = vsel %vm529, %v3009, 0
        %v3108 = vsel %vm529, %v3010, 0
        %v3111 = vsel %vm529, %v3011, 0
        %v3114 = vsel %vm529, %v3012, 0
        %v3117 = vsel %vm529, %v3013, 0
        %v3120 = vsel %vm529, %v3014, 0
        %v3123 = vsel %vm529, %v3015, 0
        %v3126 = vsel %vm638, %v3016, 0
        %3128 = vmatpush.msra.mxu0 0.0
        %3129 = vmatpush.msra.mxu0 0.0
        %3130 = vmatpush.msra.mxu0 0.0
        %3131 = vmatpush.msra.mxu0 0.0
        %3132 = vmatpush.msra.mxu0 0.0
        %3133 = vmatpush.msra.mxu0 0.0
        %3134 = vmatpush.msra.mxu0 0.0
        %3135 = vmatpush.msra.mxu0 0.0
        %3136 = vmatpush.msra.mxu0 0.0
        %3137 = vmatpush.msra.mxu0 0.0
        %3138 = vmatpush.msra.mxu0 0.0
        %3139 = vmatpush.msra.mxu0 0.0
        %3140 = vmatpush.msra.mxu0 0.0
        %3141 = vmatpush.msra.mxu0 0.0
        %3142 = vmatpush.msra.mxu0 0.0
        %3143 = vmatpush.msra.mxu0 %v3126
        %3144 = vmatmul.f32.gmra.mxu0 %v3018
        %v3145 = vpop.f32.mrf.mxu0
        %v3146 = vadd.f32 0.0, %v3145
        %3147 = vmatmul.f32.gmra.mxu0 %v3021
        %v3148 = vpop.f32.mrf.mxu0
        %v3149 = vadd.f32 0.0, %v3148
        %3150 = vmatmul.f32.gmra.mxu0 %v3024
        %v3151 = vpop.f32.mrf.mxu0
        %v3152 = vadd.f32 0.0, %v3151
        %3153 = vmatmul.f32.gmra.mxu0 %v3027
        %v3154 = vpop.f32.mrf.mxu0
        %v3155 = vadd.f32 0.0, %v3154
        %3156 = vmatmul.f32.gmra.mxu0 %v3030
        %v3157 = vpop.f32.mrf.mxu0
        %v3158 = vadd.f32 0.0, %v3157
        %3159 = vmatmul.f32.gmra.mxu0 %v3033
        %v3160 = vpop.f32.mrf.mxu0
        %v3161 = vadd.f32 0.0, %v3160
        %3162 = vmatmul.f32.gmra.mxu0 %v3036
        %v3163 = vpop.f32.mrf.mxu0
        %v3164 = vadd.f32 0.0, %v3163
        %3165 = vmatmul.f32.gmra.mxu0 %v3039
        %v3166 = vpop.f32.mrf.mxu0
        %v3167 = vadd.f32 0.0, %v3166
        %3168 = vmatmul.f32.gmra.mxu0 %v3042
        %v3169 = vpop.f32.mrf.mxu0
        %v3170 = vadd.f32 0.0, %v3169
        %3171 = vmatmul.f32.gmra.mxu0 %v3045
        %v3172 = vpop.f32.mrf.mxu0
        %v3173 = vadd.f32 0.0, %v3172
        %3174 = vmatmul.f32.gmra.mxu0 %v3048
        %v3175 = vpop.f32.mrf.mxu0
        %v3176 = vadd.f32 0.0, %v3175
        %3177 = vmatmul.f32.gmra.mxu0 %v3051
        %v3178 = vpop.f32.mrf.mxu0
        %v3179 = vadd.f32 0.0, %v3178
        %3180 = vmatmul.f32.gmra.mxu0 %v3054
        %v3181 = vpop.f32.mrf.mxu0
        %v3182 = vadd.f32 0.0, %v3181
        %3183 = vmatmul.f32.gmra.mxu0 %v3057
        %v3184 = vpop.f32.mrf.mxu0
        %v3185 = vadd.f32 0.0, %v3184
        %3186 = vmatmul.f32.gmra.mxu0 %v3060
        %v3187 = vpop.f32.mrf.mxu0
        %v3188 = vadd.f32 0.0, %v3187
        %3189 = vmatmul.f32.gmra.mxu0 %v3063
        %v3190 = vpop.f32.mrf.mxu0
        %v3191 = vadd.f32 0.0, %v3190
        %3192 = vmatmul.f32.gmra.mxu0 %v3066
        %v3193 = vpop.f32.mrf.mxu0
        %v3194 = vadd.f32 0.0, %v3193
        %3195 = vmatmul.f32.gmra.mxu0 %v3069
        %v3196 = vpop.f32.mrf.mxu0
        %v3197 = vadd.f32 0.0, %v3196
        %3198 = vmatmul.f32.gmra.mxu0 %v3072
        %v3199 = vpop.f32.mrf.mxu0
        %v3200 = vadd.f32 0.0, %v3199
        %3201 = vmatmul.f32.gmra.mxu0 %v3075
        %v3202 = vpop.f32.mrf.mxu0
        %v3203 = vadd.f32 0.0, %v3202
        %3204 = vmatmul.f32.gmra.mxu0 %v3078
        %v3205 = vpop.f32.mrf.mxu0
        %v3206 = vadd.f32 0.0, %v3205
        %3207 = vmatmul.f32.gmra.mxu0 %v3081
        %v3208 = vpop.f32.mrf.mxu0
        %v3209 = vadd.f32 0.0, %v3208
        %3210 = vmatmul.f32.gmra.mxu0 %v3084
        %v3211 = vpop.f32.mrf.mxu0
        %v3212 = vadd.f32 0.0, %v3211
        %3213 = vmatmul.f32.gmra.mxu0 %v3087
        %v3214 = vpop.f32.mrf.mxu0
        %v3215 = vadd.f32 0.0, %v3214
        %3216 = vmatmul.f32.gmra.mxu0 %v3090
        %v3217 = vpop.f32.mrf.mxu0
        %v3218 = vadd.f32 0.0, %v3217
        %3219 = vmatmul.f32.gmra.mxu0 %v3093
        %v3220 = vpop.f32.mrf.mxu0
        %v3221 = vadd.f32 0.0, %v3220
        %3222 = vmatmul.f32.gmra.mxu0 %v3096
        %v3223 = vpop.f32.mrf.mxu0
        %v3224 = vadd.f32 0.0, %v3223
        %3225 = vmatmul.f32.gmra.mxu0 %v3099
        %v3226 = vpop.f32.mrf.mxu0
        %v3227 = vadd.f32 0.0, %v3226
        %3228 = vmatmul.f32.gmra.mxu0 %v3102
        %v3229 = vpop.f32.mrf.mxu0
        %v3230 = vadd.f32 0.0, %v3229
        %3231 = vmatmul.f32.gmra.mxu0 %v3105
        %v3232 = vpop.f32.mrf.mxu0
        %v3233 = vadd.f32 0.0, %v3232
        %3234 = vmatmul.f32.gmra.mxu0 %v3108
        %v3235 = vpop.f32.mrf.mxu0
        %v3236 = vadd.f32 0.0, %v3235
        %3237 = vmatmul.f32.gmra.mxu0 %v3111
        %v3238 = vpop.f32.mrf.mxu0
        %v3239 = vadd.f32 0.0, %v3238
        %3240 = vmatmul.f32.gmra.mxu0 %v3114
        %v3241 = vpop.f32.mrf.mxu0
        %v3242 = vadd.f32 0.0, %v3241
        %3243 = vmatmul.f32.gmra.mxu0 %v3117
        %v3244 = vpop.f32.mrf.mxu0
        %v3245 = vadd.f32 0.0, %v3244
        %3246 = vmatmul.f32.gmra.mxu0 %v3120
        %v3247 = vpop.f32.mrf.mxu0
        %v3248 = vadd.f32 0.0, %v3247
        %3249 = vmatmul.f32.gmra.mxu0 %v3123
        %v3250 = vpop.f32.mrf.mxu0
        %v3251 = vadd.f32 0.0, %v3250
        %3252 = vdwg.mxu0
        %v3253 = vadd.f32 %v2872, %v3146
        %v3254 = vadd.f32 %v2873, %v3149
        %v3255 = vadd.f32 %v2874, %v3152
        %v3256 = vadd.f32 %v2875, %v3155
        %v3257 = vadd.f32 %v2876, %v3158
        %v3258 = vadd.f32 %v2877, %v3161
        %v3259 = vadd.f32 %v2878, %v3164
        %v3260 = vadd.f32 %v2879, %v3167
        %v3261 = vadd.f32 %v2880, %v3170
        %v3262 = vadd.f32 %v2881, %v3173
        %v3263 = vadd.f32 %v2882, %v3176
        %v3264 = vadd.f32 %v2883, %v3179
        %v3265 = vadd.f32 %v2884, %v3182
        %v3266 = vadd.f32 %v2885, %v3185
        %v3267 = vadd.f32 %v2886, %v3188
        %v3268 = vadd.f32 %v2887, %v3191
        %v3269 = vadd.f32 %v2888, %v3194
        %v3270 = vadd.f32 %v2889, %v3197
        %v3271 = vadd.f32 %v2890, %v3200
        %v3272 = vadd.f32 %v2891, %v3203
        %v3273 = vadd.f32 %v2892, %v3206
        %v3274 = vadd.f32 %v2893, %v3209
        %v3275 = vadd.f32 %v2894, %v3212
        %v3276 = vadd.f32 %v2895, %v3215
        %v3277 = vadd.f32 %v2896, %v3218
        %v3278 = vadd.f32 %v2897, %v3221
        %v3279 = vadd.f32 %v2898, %v3224
        %v3280 = vadd.f32 %v2899, %v3227
        %v3281 = vadd.f32 %v2900, %v3230
        %v3282 = vadd.f32 %v2901, %v3233
        %v3283 = vadd.f32 %v2902, %v3236
        %v3284 = vadd.f32 %v2903, %v3239
        %v3285 = vadd.f32 %v2904, %v3242
        %v3286 = vadd.f32 %v2905, %v3245
        %v3287 = vadd.f32 %v2906, %v3248
        %v3288 = vadd.f32 %v2907, %v3251
        %v3289 = vld [vmem:[%s302 + $0x26] sm:$0xff]
        %v3290 = vld [vmem:[%s302 + $0x2e] sm:$0xff]
        %v3291 = vld [vmem:[%s302 + $0x36] sm:$0xff]
        %v3292 = vld [vmem:[%s302 + $0x3e] sm:$0xff]
        %v3293 = vld [vmem:[%s302 + $0x46] sm:$0xff]
        %v3294 = vld [vmem:[%s302 + $0x4e] sm:$0xff]
        %v3295 = vld [vmem:[%s302 + $0x56] sm:$0xff]
        %v3296 = vld [vmem:[%s302 + $0x5e] sm:$0xff]
        %v3297 = vld [vmem:[%s302 + $0x66] sm:$0xff]
        %v3298 = vld [vmem:[%s302 + $0x6e] sm:$0xff]
        %v3299 = vld [vmem:[%s302 + $0x76] sm:$0xff]
        %v3300 = vld [vmem:[%s302 + $0x7e] sm:$0xff]
        %v3301 = vld [vmem:[%s302 + $0x86] sm:$0xff]
        %v3302 = vld [vmem:[%s302 + $0x8e] sm:$0xff]
        %v3303 = vld [vmem:[%s302 + $0x96] sm:$0xff]
        %v3304 = vld [vmem:[%s302 + $0x9e] sm:$0xff]
        %v3305 = vld [vmem:[%s302 + $0xa6] sm:$0xff]
        %v3306 = vld [vmem:[%s302 + $0xae] sm:$0xff]
        %v3307 = vld [vmem:[%s302 + $0xb6] sm:$0xff]
        %v3308 = vld [vmem:[%s302 + $0xbe] sm:$0xff]
        %v3309 = vld [vmem:[%s302 + $0xc6] sm:$0xff]
        %v3310 = vld [vmem:[%s302 + $0xce] sm:$0xff]
        %v3311 = vld [vmem:[%s302 + $0xd6] sm:$0xff]
        %v3312 = vld [vmem:[%s302 + $0xde] sm:$0xff]
        %v3313 = vld [vmem:[%s302 + $0xe6] sm:$0xff]
        %v3314 = vld [vmem:[%s302 + $0xee] sm:$0xff]
        %v3315 = vld [vmem:[%s302 + $0xf6] sm:$0xff]
        %v3316 = vld [vmem:[%s302 + $0xfe] sm:$0xff]
        %v3317 = vld [vmem:[%s302 + $0x106] sm:$0xff]
        %v3318 = vld [vmem:[%s302 + $0x10e] sm:$0xff]
        %v3319 = vld [vmem:[%s302 + $0x116] sm:$0xff]
        %v3320 = vld [vmem:[%s302 + $0x11e] sm:$0xff]
        %v3321 = vld [vmem:[%s302 + $0x126] sm:$0xff]
        %v3322 = vld [vmem:[%s302 + $0x12e] sm:$0xff]
        %v3323 = vld [vmem:[%s302 + $0x136] sm:$0xff]
        %v3324 = vld [vmem:[%s302 + $0x13e] sm:$0xff]
        %v3325 = vmul.f32 %v3289, %v341
        %v3326 = vmul.f32 %v3290, %v341
        %v3327 = vmul.f32 %v3291, %v341
        %v3328 = vmul.f32 %v3292, %v341
        %v3329 = vmul.f32 %v3293, %v341
        %v3330 = vmul.f32 %v3294, %v341
        %v3331 = vmul.f32 %v3295, %v341
        %v3332 = vmul.f32 %v3296, %v341
        %v3333 = vmul.f32 %v3297, %v341
        %v3334 = vmul.f32 %v3298, %v341
        %v3335 = vmul.f32 %v3299, %v341
        %v3336 = vmul.f32 %v3300, %v341
        %v3337 = vmul.f32 %v3301, %v341
        %v3338 = vmul.f32 %v3302, %v341
        %v3339 = vmul.f32 %v3303, %v341
        %v3340 = vmul.f32 %v3304, %v341
        %v3341 = vmul.f32 %v3305, %v341
        %v3342 = vmul.f32 %v3306, %v341
        %v3343 = vmul.f32 %v3307, %v341
        %v3344 = vmul.f32 %v3308, %v341
        %v3345 = vmul.f32 %v3309, %v341
        %v3346 = vmul.f32 %v3310, %v341
        %v3347 = vmul.f32 %v3311, %v341
        %v3348 = vmul.f32 %v3312, %v341
        %v3349 = vmul.f32 %v3313, %v341
        %v3350 = vmul.f32 %v3314, %v341
        %v3351 = vmul.f32 %v3315, %v341
        %v3352 = vmul.f32 %v3316, %v341
        %v3353 = vmul.f32 %v3317, %v341
        %v3354 = vmul.f32 %v3318, %v341
        %v3355 = vmul.f32 %v3319, %v341
        %v3356 = vmul.f32 %v3320, %v341
        %v3357 = vmul.f32 %v3321, %v341
        %v3358 = vmul.f32 %v3322, %v341
        %v3359 = vmul.f32 %v3323, %v341
        %v3360 = vmul.f32 %v3324, %v341
        %v3361 = vadd.f32 %v3325, %v381
        %v3362 = vadd.f32 %v3326, %v381
        %v3363 = vadd.f32 %v3327, %v381
        %v3364 = vadd.f32 %v3328, %v381
        %v3365 = vadd.f32 %v3329, %v381
        %v3366 = vadd.f32 %v3330, %v381
        %v3367 = vadd.f32 %v3331, %v381
        %v3368 = vadd.f32 %v3332, %v381
        %v3369 = vadd.f32 %v3333, %v381
        %v3370 = vadd.f32 %v3334, %v381
        %v3371 = vadd.f32 %v3335, %v381
        %v3372 = vadd.f32 %v3336, %v381
        %v3373 = vadd.f32 %v3337, %v381
        %v3374 = vadd.f32 %v3338, %v381
        %v3375 = vadd.f32 %v3339, %v381
        %v3376 = vadd.f32 %v3340, %v381
        %v3377 = vadd.f32 %v3341, %v381
        %v3378 = vadd.f32 %v3342, %v381
        %v3379 = vadd.f32 %v3343, %v381
        %v3380 = vadd.f32 %v3344, %v381
        %v3381 = vadd.f32 %v3345, %v381
        %v3382 = vadd.f32 %v3346, %v381
        %v3383 = vadd.f32 %v3347, %v381
        %v3384 = vadd.f32 %v3348, %v381
        %v3385 = vadd.f32 %v3349, %v381
        %v3386 = vadd.f32 %v3350, %v381
        %v3387 = vadd.f32 %v3351, %v381
        %v3388 = vadd.f32 %v3352, %v381
        %v3389 = vadd.f32 %v3353, %v381
        %v3390 = vadd.f32 %v3354, %v381
        %v3391 = vadd.f32 %v3355, %v381
        %v3392 = vadd.f32 %v3356, %v381
        %v3393 = vadd.f32 %v3357, %v381
        %v3394 = vadd.f32 %v3358, %v381
        %v3395 = vadd.f32 %v3359, %v381
        %v3396 = vadd.f32 %v3360, %v381
        %v3397 = vld [vmem:[%s4 + $0x20] sm:$0xf]
        %v3399 = vsel %vm529, %v3361, 0
        %v3402 = vsel %vm529, %v3362, 0
        %v3405 = vsel %vm529, %v3363, 0
        %v3408 = vsel %vm529, %v3364, 0
        %v3411 = vsel %vm529, %v3365, 0
        %v3414 = vsel %vm529, %v3366, 0
        %v3417 = vsel %vm529, %v3367, 0
        %v3420 = vsel %vm529, %v3368, 0
        %v3423 = vsel %vm529, %v3369, 0
        %v3426 = vsel %vm529, %v3370, 0
        %v3429 = vsel %vm529, %v3371, 0
        %v3432 = vsel %vm529, %v3372, 0
        %v3435 = vsel %vm529, %v3373, 0
        %v3438 = vsel %vm529, %v3374, 0
        %v3441 = vsel %vm529, %v3375, 0
        %v3444 = vsel %vm529, %v3376, 0
        %v3447 = vsel %vm529, %v3377, 0
        %v3450 = vsel %vm529, %v3378, 0
        %v3453 = vsel %vm529, %v3379, 0
        %v3456 = vsel %vm529, %v3380, 0
        %v3459 = vsel %vm529, %v3381, 0
        %v3462 = vsel %vm529, %v3382, 0
        %v3465 = vsel %vm529, %v3383, 0
        %v3468 = vsel %vm529, %v3384, 0
        %v3471 = vsel %vm529, %v3385, 0
        %v3474 = vsel %vm529, %v3386, 0
        %v3477 = vsel %vm529, %v3387, 0
        %v3480 = vsel %vm529, %v3388, 0
        %v3483 = vsel %vm529, %v3389, 0
        %v3486 = vsel %vm529, %v3390, 0
        %v3489 = vsel %vm529, %v3391, 0
        %v3492 = vsel %vm529, %v3392, 0
        %v3495 = vsel %vm529, %v3393, 0
        %v3498 = vsel %vm529, %v3394, 0
        %v3501 = vsel %vm529, %v3395, 0
        %v3504 = vsel %vm529, %v3396, 0
        %v3507 = vsel %vm638, %v3397, 0
        %3509 = vmatpush.msra.mxu0 0.0
        %3510 = vmatpush.msra.mxu0 0.0
        %3511 = vmatpush.msra.mxu0 0.0
        %3512 = vmatpush.msra.mxu0 0.0
        %3513 = vmatpush.msra.mxu0 0.0
        %3514 = vmatpush.msra.mxu0 0.0
        %3515 = vmatpush.msra.mxu0 0.0
        %3516 = vmatpush.msra.mxu0 0.0
        %3517 = vmatpush.msra.mxu0 0.0
        %3518 = vmatpush.msra.mxu0 0.0
        %3519 = vmatpush.msra.mxu0 0.0
        %3520 = vmatpush.msra.mxu0 0.0
        %3521 = vmatpush.msra.mxu0 0.0
        %3522 = vmatpush.msra.mxu0 0.0
        %3523 = vmatpush.msra.mxu0 0.0
        %3524 = vmatpush.msra.mxu0 %v3507
        %3525 = vmatmul.f32.gmra.mxu0 %v3399
        %v3526 = vpop.f32.mrf.mxu0
        %v3527 = vadd.f32 0.0, %v3526
        %3528 = vmatmul.f32.gmra.mxu0 %v3402
        %v3529 = vpop.f32.mrf.mxu0
        %v3530 = vadd.f32 0.0, %v3529
        %3531 = vmatmul.f32.gmra.mxu0 %v3405
        %v3532 = vpop.f32.mrf.mxu0
        %v3533 = vadd.f32 0.0, %v3532
        %3534 = vmatmul.f32.gmra.mxu0 %v3408
        %v3535 = vpop.f32.mrf.mxu0
        %v3536 = vadd.f32 0.0, %v3535
        %3537 = vmatmul.f32.gmra.mxu0 %v3411
        %v3538 = vpop.f32.mrf.mxu0
        %v3539 = vadd.f32 0.0, %v3538
        %3540 = vmatmul.f32.gmra.mxu0 %v3414
        %v3541 = vpop.f32.mrf.mxu0
        %v3542 = vadd.f32 0.0, %v3541
        %3543 = vmatmul.f32.gmra.mxu0 %v3417
        %v3544 = vpop.f32.mrf.mxu0
        %v3545 = vadd.f32 0.0, %v3544
        %3546 = vmatmul.f32.gmra.mxu0 %v3420
        %v3547 = vpop.f32.mrf.mxu0
        %v3548 = vadd.f32 0.0, %v3547
        %3549 = vmatmul.f32.gmra.mxu0 %v3423
        %v3550 = vpop.f32.mrf.mxu0
        %v3551 = vadd.f32 0.0, %v3550
        %3552 = vmatmul.f32.gmra.mxu0 %v3426
        %v3553 = vpop.f32.mrf.mxu0
        %v3554 = vadd.f32 0.0, %v3553
        %3555 = vmatmul.f32.gmra.mxu0 %v3429
        %v3556 = vpop.f32.mrf.mxu0
        %v3557 = vadd.f32 0.0, %v3556
        %3558 = vmatmul.f32.gmra.mxu0 %v3432
        %v3559 = vpop.f32.mrf.mxu0
        %v3560 = vadd.f32 0.0, %v3559
        %3561 = vmatmul.f32.gmra.mxu0 %v3435
        %v3562 = vpop.f32.mrf.mxu0
        %v3563 = vadd.f32 0.0, %v3562
        %3564 = vmatmul.f32.gmra.mxu0 %v3438
        %v3565 = vpop.f32.mrf.mxu0
        %v3566 = vadd.f32 0.0, %v3565
        %3567 = vmatmul.f32.gmra.mxu0 %v3441
        %v3568 = vpop.f32.mrf.mxu0
        %v3569 = vadd.f32 0.0, %v3568
        %3570 = vmatmul.f32.gmra.mxu0 %v3444
        %v3571 = vpop.f32.mrf.mxu0
        %v3572 = vadd.f32 0.0, %v3571
        %3573 = vmatmul.f32.gmra.mxu0 %v3447
        %v3574 = vpop.f32.mrf.mxu0
        %v3575 = vadd.f32 0.0, %v3574
        %3576 = vmatmul.f32.gmra.mxu0 %v3450
        %v3577 = vpop.f32.mrf.mxu0
        %v3578 = vadd.f32 0.0, %v3577
        %3579 = vmatmul.f32.gmra.mxu0 %v3453
        %v3580 = vpop.f32.mrf.mxu0
        %v3581 = vadd.f32 0.0, %v3580
        %3582 = vmatmul.f32.gmra.mxu0 %v3456
        %v3583 = vpop.f32.mrf.mxu0
        %v3584 = vadd.f32 0.0, %v3583
        %3585 = vmatmul.f32.gmra.mxu0 %v3459
        %v3586 = vpop.f32.mrf.mxu0
        %v3587 = vadd.f32 0.0, %v3586
        %3588 = vmatmul.f32.gmra.mxu0 %v3462
        %v3589 = vpop.f32.mrf.mxu0
        %v3590 = vadd.f32 0.0, %v3589
        %3591 = vmatmul.f32.gmra.mxu0 %v3465
        %v3592 = vpop.f32.mrf.mxu0
        %v3593 = vadd.f32 0.0, %v3592
        %3594 = vmatmul.f32.gmra.mxu0 %v3468
        %v3595 = vpop.f32.mrf.mxu0
        %v3596 = vadd.f32 0.0, %v3595
        %3597 = vmatmul.f32.gmra.mxu0 %v3471
        %v3598 = vpop.f32.mrf.mxu0
        %v3599 = vadd.f32 0.0, %v3598
        %3600 = vmatmul.f32.gmra.mxu0 %v3474
        %v3601 = vpop.f32.mrf.mxu0
        %v3602 = vadd.f32 0.0, %v3601
        %3603 = vmatmul.f32.gmra.mxu0 %v3477
        %v3604 = vpop.f32.mrf.mxu0
        %v3605 = vadd.f32 0.0, %v3604
        %3606 = vmatmul.f32.gmra.mxu0 %v3480
        %v3607 = vpop.f32.mrf.mxu0
        %v3608 = vadd.f32 0.0, %v3607
        %3609 = vmatmul.f32.gmra.mxu0 %v3483
        %v3610 = vpop.f32.mrf.mxu0
        %v3611 = vadd.f32 0.0, %v3610
        %3612 = vmatmul.f32.gmra.mxu0 %v3486
        %v3613 = vpop.f32.mrf.mxu0
        %v3614 = vadd.f32 0.0, %v3613
        %3615 = vmatmul.f32.gmra.mxu0 %v3489
        %v3616 = vpop.f32.mrf.mxu0
        %v3617 = vadd.f32 0.0, %v3616
        %3618 = vmatmul.f32.gmra.mxu0 %v3492
        %v3619 = vpop.f32.mrf.mxu0
        %v3620 = vadd.f32 0.0, %v3619
        %3621 = vmatmul.f32.gmra.mxu0 %v3495
        %v3622 = vpop.f32.mrf.mxu0
        %v3623 = vadd.f32 0.0, %v3622
        %3624 = vmatmul.f32.gmra.mxu0 %v3498
        %v3625 = vpop.f32.mrf.mxu0
        %v3626 = vadd.f32 0.0, %v3625
        %3627 = vmatmul.f32.gmra.mxu0 %v3501
        %v3628 = vpop.f32.mrf.mxu0
        %v3629 = vadd.f32 0.0, %v3628
        %3630 = vmatmul.f32.gmra.mxu0 %v3504
        %v3631 = vpop.f32.mrf.mxu0
        %v3632 = vadd.f32 0.0, %v3631
        %3633 = vdwg.mxu0
        %v3634 = vadd.f32 %v3253, %v3527
        %v3635 = vadd.f32 %v3254, %v3530
        %v3636 = vadd.f32 %v3255, %v3533
        %v3637 = vadd.f32 %v3256, %v3536
        %v3638 = vadd.f32 %v3257, %v3539
        %v3639 = vadd.f32 %v3258, %v3542
        %v3640 = vadd.f32 %v3259, %v3545
        %v3641 = vadd.f32 %v3260, %v3548
        %v3642 = vadd.f32 %v3261, %v3551
        %v3643 = vadd.f32 %v3262, %v3554
        %v3644 = vadd.f32 %v3263, %v3557
        %v3645 = vadd.f32 %v3264, %v3560
        %v3646 = vadd.f32 %v3265, %v3563
        %v3647 = vadd.f32 %v3266, %v3566
        %v3648 = vadd.f32 %v3267, %v3569
        %v3649 = vadd.f32 %v3268, %v3572
        %v3650 = vadd.f32 %v3269, %v3575
        %v3651 = vadd.f32 %v3270, %v3578
        %v3652 = vadd.f32 %v3271, %v3581
        %v3653 = vadd.f32 %v3272, %v3584
        %v3654 = vadd.f32 %v3273, %v3587
        %v3655 = vadd.f32 %v3274, %v3590
        %v3656 = vadd.f32 %v3275, %v3593
        %v3657 = vadd.f32 %v3276, %v3596
        %v3658 = vadd.f32 %v3277, %v3599
        %v3659 = vadd.f32 %v3278, %v3602
        %v3660 = vadd.f32 %v3279, %v3605
        %v3661 = vadd.f32 %v3280, %v3608
        %v3662 = vadd.f32 %v3281, %v3611
        %v3663 = vadd.f32 %v3282, %v3614
        %v3664 = vadd.f32 %v3283, %v3617
        %v3665 = vadd.f32 %v3284, %v3620
        %v3666 = vadd.f32 %v3285, %v3623
        %v3667 = vadd.f32 %v3286, %v3626
        %v3668 = vadd.f32 %v3287, %v3629
        %v3669 = vadd.f32 %v3288, %v3632
        %v3670 = vld [vmem:[%s5] sm:$0x1]
        %v3672 = vperm.slane %v3670, 0
        %v3674 = vadd.f32 %v3634, %v3672
        %v3675 = vadd.f32 %v3635, %v3672
        %v3676 = vadd.f32 %v3636, %v3672
        %v3677 = vadd.f32 %v3637, %v3672
        %v3678 = vadd.f32 %v3638, %v3672
        %v3679 = vadd.f32 %v3639, %v3672
        %v3680 = vadd.f32 %v3640, %v3672
        %v3681 = vadd.f32 %v3641, %v3672
        %v3682 = vadd.f32 %v3642, %v3672
        %v3683 = vadd.f32 %v3643, %v3672
        %v3684 = vadd.f32 %v3644, %v3672
        %v3685 = vadd.f32 %v3645, %v3672
        %v3686 = vadd.f32 %v3646, %v3672
        %v3687 = vadd.f32 %v3647, %v3672
        %v3688 = vadd.f32 %v3648, %v3672
        %v3689 = vadd.f32 %v3649, %v3672
        %v3690 = vadd.f32 %v3650, %v3672
        %v3691 = vadd.f32 %v3651, %v3672
        %v3692 = vadd.f32 %v3652, %v3672
        %v3693 = vadd.f32 %v3653, %v3672
        %v3694 = vadd.f32 %v3654, %v3672
        %v3695 = vadd.f32 %v3655, %v3672
        %v3696 = vadd.f32 %v3656, %v3672
        %v3697 = vadd.f32 %v3657, %v3672
        %v3698 = vadd.f32 %v3658, %v3672
        %v3699 = vadd.f32 %v3659, %v3672
        %v3700 = vadd.f32 %v3660, %v3672
        %v3701 = vadd.f32 %v3661, %v3672
        %v3702 = vadd.f32 %v3662, %v3672
        %v3703 = vadd.f32 %v3663, %v3672
        %v3704 = vadd.f32 %v3664, %v3672
        %v3705 = vadd.f32 %v3665, %v3672
        %v3706 = vadd.f32 %v3666, %v3672
        %v3707 = vadd.f32 %v3667, %v3672
        %v3708 = vadd.f32 %v3668, %v3672
        %v3709 = vadd.f32 %v3669, %v3672
        %v3710 = vmax.f32 %v3674, 0.0
        %v3711 = vmax.f32 %v3675, 0.0
        %v3712 = vmax.f32 %v3676, 0.0
        %v3713 = vmax.f32 %v3677, 0.0
        %v3714 = vmax.f32 %v3678, 0.0
        %v3715 = vmax.f32 %v3679, 0.0
        %v3716 = vmax.f32 %v3680, 0.0
        %v3717 = vmax.f32 %v3681, 0.0
        %v3718 = vmax.f32 %v3682, 0.0
        %v3719 = vmax.f32 %v3683, 0.0
        %v3720 = vmax.f32 %v3684, 0.0
        %v3721 = vmax.f32 %v3685, 0.0
        %v3722 = vmax.f32 %v3686, 0.0
        %v3723 = vmax.f32 %v3687, 0.0
        %v3724 = vmax.f32 %v3688, 0.0
        %v3725 = vmax.f32 %v3689, 0.0
        %v3726 = vmax.f32 %v3690, 0.0
        %v3727 = vmax.f32 %v3691, 0.0
        %v3728 = vmax.f32 %v3692, 0.0
        %v3729 = vmax.f32 %v3693, 0.0
        %v3730 = vmax.f32 %v3694, 0.0
        %v3731 = vmax.f32 %v3695, 0.0
        %v3732 = vmax.f32 %v3696, 0.0
        %v3733 = vmax.f32 %v3697, 0.0
        %v3734 = vmax.f32 %v3698, 0.0
        %v3735 = vmax.f32 %v3699, 0.0
        %v3736 = vmax.f32 %v3700, 0.0
        %v3737 = vmax.f32 %v3701, 0.0
        %v3738 = vmax.f32 %v3702, 0.0
        %v3739 = vmax.f32 %v3703, 0.0
        %v3740 = vmax.f32 %v3704, 0.0
        %v3741 = vmax.f32 %v3705, 0.0
        %v3742 = vmax.f32 %v3706, 0.0
        %v3743 = vmax.f32 %v3707, 0.0
        %v3744 = vmax.f32 %v3708, 0.0
        %v3745 = vmax.f32 %v3709, 0.0
        %v3746 = vld [vmem:[%s3] sm:$0xff]
        %v3747 = vld [vmem:[%s3 + $0x8] sm:$0xff]
        %v3748 = vld [vmem:[%s3 + $0x10] sm:$0xff]
        %v3749 = vld [vmem:[%s3 + $0x18] sm:$0xff]
        %v3750 = vld [vmem:[%s3 + $0x20] sm:$0xff]
        %v3751 = vld [vmem:[%s3 + $0x28] sm:$0xff]
        %v3752 = vld [vmem:[%s3 + $0x30] sm:$0xff]
        %v3753 = vld [vmem:[%s3 + $0x38] sm:$0xff]
        %v3754 = vld [vmem:[%s3 + $0x40] sm:$0xff]
        %v3755 = vld [vmem:[%s3 + $0x48] sm:$0xff]
        %v3756 = vld [vmem:[%s3 + $0x50] sm:$0xff]
        %v3757 = vld [vmem:[%s3 + $0x58] sm:$0xff]
        %v3758 = vld [vmem:[%s3 + $0x60] sm:$0xff]
        %v3759 = vld [vmem:[%s3 + $0x68] sm:$0xff]
        %v3760 = vld [vmem:[%s3 + $0x70] sm:$0xff]
        %v3761 = vld [vmem:[%s3 + $0x78] sm:$0xff]
        %v3762 = vld [vmem:[%s3 + $0x80] sm:$0xff]
        %v3763 = vld [vmem:[%s3 + $0x88] sm:$0xff]
        %v3764 = vld [vmem:[%s3 + $0x90] sm:$0xff]
        %v3765 = vld [vmem:[%s3 + $0x98] sm:$0xff]
        %v3766 = vld [vmem:[%s3 + $0xa0] sm:$0xff]
        %v3767 = vld [vmem:[%s3 + $0xa8] sm:$0xff]
        %v3768 = vld [vmem:[%s3 + $0xb0] sm:$0xff]
        %v3769 = vld [vmem:[%s3 + $0xb8] sm:$0xff]
        %v3770 = vld [vmem:[%s3 + $0xc0] sm:$0xff]
        %v3771 = vld [vmem:[%s3 + $0xc8] sm:$0xff]
        %v3772 = vld [vmem:[%s3 + $0xd0] sm:$0xff]
        %v3773 = vld [vmem:[%s3 + $0xd8] sm:$0xff]
        %v3774 = vld [vmem:[%s3 + $0xe0] sm:$0xff]
        %v3775 = vld [vmem:[%s3 + $0xe8] sm:$0xff]
        %v3776 = vld [vmem:[%s3 + $0xf0] sm:$0xff]
        %v3777 = vld [vmem:[%s3 + $0xf8] sm:$0xff]
        %v3778 = vld [vmem:[%s3 + $0x100] sm:$0xff]
        %v3779 = vld [vmem:[%s3 + $0x108] sm:$0xff]
        %v3780 = vld [vmem:[%s3 + $0x110] sm:$0xff]
        %v3781 = vld [vmem:[%s3 + $0x118] sm:$0xff]
        %3783 = vset.pattern.permute.xlu0 0
        %3784 = vperm.xlu0 %3783, %v3746
        %v3785 = vpop.permute.xlu0 %3784
        %3788 = vset.pattern.permute.xlu0 0
        %3789 = vperm.xlu0 %3788, %v3747
        %v3790 = vpop.permute.xlu0 %3789
        %3793 = vset.pattern.permute.xlu0 0
        %3794 = vperm.xlu0 %3793, %v3748
        %v3795 = vpop.permute.xlu0 %3794
        %3798 = vset.pattern.permute.xlu0 0
        %3799 = vperm.xlu0 %3798, %v3749
        %v3800 = vpop.permute.xlu0 %3799
        %3803 = vset.pattern.permute.xlu0 0
        %3804 = vperm.xlu0 %3803, %v3750
        %v3805 = vpop.permute.xlu0 %3804
        %3808 = vset.pattern.permute.xlu0 0
        %3809 = vperm.xlu0 %3808, %v3751
        %v3810 = vpop.permute.xlu0 %3809
        %3813 = vset.pattern.permute.xlu0 0
        %3814 = vperm.xlu0 %3813, %v3752
        %v3815 = vpop.permute.xlu0 %3814
        %3818 = vset.pattern.permute.xlu0 0
        %3819 = vperm.xlu0 %3818, %v3753
        %v3820 = vpop.permute.xlu0 %3819
        %3823 = vset.pattern.permute.xlu0 0
        %3824 = vperm.xlu0 %3823, %v3754
        %v3825 = vpop.permute.xlu0 %3824
        %3828 = vset.pattern.permute.xlu0 0
        %3829 = vperm.xlu0 %3828, %v3755
        %v3830 = vpop.permute.xlu0 %3829
        %3833 = vset.pattern.permute.xlu0 0
        %3834 = vperm.xlu0 %3833, %v3756
        %v3835 = vpop.permute.xlu0 %3834
        %3838 = vset.pattern.permute.xlu0 0
        %3839 = vperm.xlu0 %3838, %v3757
        %v3840 = vpop.permute.xlu0 %3839
        %3843 = vset.pattern.permute.xlu0 0
        %3844 = vperm.xlu0 %3843, %v3758
        %v3845 = vpop.permute.xlu0 %3844
        %3848 = vset.pattern.permute.xlu0 0
        %3849 = vperm.xlu0 %3848, %v3759
        %v3850 = vpop.permute.xlu0 %3849
        %3853 = vset.pattern.permute.xlu0 0
        %3854 = vperm.xlu0 %3853, %v3760
        %v3855 = vpop.permute.xlu0 %3854
        %3858 = vset.pattern.permute.xlu0 0
        %3859 = vperm.xlu0 %3858, %v3761
        %v3860 = vpop.permute.xlu0 %3859
        %3863 = vset.pattern.permute.xlu0 0
        %3864 = vperm.xlu0 %3863, %v3762
        %v3865 = vpop.permute.xlu0 %3864
        %3868 = vset.pattern.permute.xlu0 0
        %3869 = vperm.xlu0 %3868, %v3763
        %v3870 = vpop.permute.xlu0 %3869
        %3873 = vset.pattern.permute.xlu0 0
        %3874 = vperm.xlu0 %3873, %v3764
        %v3875 = vpop.permute.xlu0 %3874
        %3878 = vset.pattern.permute.xlu0 0
        %3879 = vperm.xlu0 %3878, %v3765
        %v3880 = vpop.permute.xlu0 %3879
        %3883 = vset.pattern.permute.xlu0 0
        %3884 = vperm.xlu0 %3883, %v3766
        %v3885 = vpop.permute.xlu0 %3884
        %3888 = vset.pattern.permute.xlu0 0
        %3889 = vperm.xlu0 %3888, %v3767
        %v3890 = vpop.permute.xlu0 %3889
        %3893 = vset.pattern.permute.xlu0 0
        %3894 = vperm.xlu0 %3893, %v3768
        %v3895 = vpop.permute.xlu0 %3894
        %3898 = vset.pattern.permute.xlu0 0
        %3899 = vperm.xlu0 %3898, %v3769
        %v3900 = vpop.permute.xlu0 %3899
        %3903 = vset.pattern.permute.xlu0 0
        %3904 = vperm.xlu0 %3903, %v3770
        %v3905 = vpop.permute.xlu0 %3904
        %3908 = vset.pattern.permute.xlu0 0
        %3909 = vperm.xlu0 %3908, %v3771
        %v3910 = vpop.permute.xlu0 %3909
        %3913 = vset.pattern.permute.xlu0 0
        %3914 = vperm.xlu0 %3913, %v3772
        %v3915 = vpop.permute.xlu0 %3914
        %3918 = vset.pattern.permute.xlu0 0
        %3919 = vperm.xlu0 %3918, %v3773
        %v3920 = vpop.permute.xlu0 %3919
        %3923 = vset.pattern.permute.xlu0 0
        %3924 = vperm.xlu0 %3923, %v3774
        %v3925 = vpop.permute.xlu0 %3924
        %3928 = vset.pattern.permute.xlu0 0
        %3929 = vperm.xlu0 %3928, %v3775
        %v3930 = vpop.permute.xlu0 %3929
        %3933 = vset.pattern.permute.xlu0 0
        %3934 = vperm.xlu0 %3933, %v3776
        %v3935 = vpop.permute.xlu0 %3934
        %3938 = vset.pattern.permute.xlu0 0
        %3939 = vperm.xlu0 %3938, %v3777
        %v3940 = vpop.permute.xlu0 %3939
        %3943 = vset.pattern.permute.xlu0 0
        %3944 = vperm.xlu0 %3943, %v3778
        %v3945 = vpop.permute.xlu0 %3944
        %3948 = vset.pattern.permute.xlu0 0
        %3949 = vperm.xlu0 %3948, %v3779
        %v3950 = vpop.permute.xlu0 %3949
        %3953 = vset.pattern.permute.xlu0 0
        %3954 = vperm.xlu0 %3953, %v3780
        %v3955 = vpop.permute.xlu0 %3954
        %3958 = vset.pattern.permute.xlu0 0
        %3959 = vperm.xlu0 %3958, %v3781
        %v3960 = vpop.permute.xlu0 %3959
        %v3962 = vmul.f32 %v3710, %v3785
        %v3963 = vmul.f32 %v3711, %v3790
        %v3964 = vmul.f32 %v3712, %v3795
        %v3965 = vmul.f32 %v3713, %v3800
        %v3966 = vmul.f32 %v3714, %v3805
        %v3967 = vmul.f32 %v3715, %v3810
        %v3968 = vmul.f32 %v3716, %v3815
        %v3969 = vmul.f32 %v3717, %v3820
        %v3970 = vmul.f32 %v3718, %v3825
        %v3971 = vmul.f32 %v3719, %v3830
        %v3972 = vmul.f32 %v3720, %v3835
        %v3973 = vmul.f32 %v3721, %v3840
        %v3974 = vmul.f32 %v3722, %v3845
        %v3975 = vmul.f32 %v3723, %v3850
        %v3976 = vmul.f32 %v3724, %v3855
        %v3977 = vmul.f32 %v3725, %v3860
        %v3978 = vmul.f32 %v3726, %v3865
        %v3979 = vmul.f32 %v3727, %v3870
        %v3980 = vmul.f32 %v3728, %v3875
        %v3981 = vmul.f32 %v3729, %v3880
        %v3982 = vmul.f32 %v3730, %v3885
        %v3983 = vmul.f32 %v3731, %v3890
        %v3984 = vmul.f32 %v3732, %v3895
        %v3985 = vmul.f32 %v3733, %v3900
        %v3986 = vmul.f32 %v3734, %v3905
        %v3987 = vmul.f32 %v3735, %v3910
        %v3988 = vmul.f32 %v3736, %v3915
        %v3989 = vmul.f32 %v3737, %v3920
        %v3990 = vmul.f32 %v3738, %v3925
        %v3991 = vmul.f32 %v3739, %v3930
        %v3992 = vmul.f32 %v3740, %v3935
        %v3993 = vmul.f32 %v3741, %v3940
        %v3994 = vmul.f32 %v3742, %v3945
        %v3995 = vmul.f32 %v3743, %v3950
        %v3996 = vmul.f32 %v3744, %v3955
        %v3997 = vmul.f32 %v3745, %v3960
        %v3998 = vadd.f32 %v3962, %v3963
        %v3999 = vadd.f32 %v3998, %v3964
        %v4000 = vadd.f32 %v3999, %v3965
        %v4001 = vadd.f32 %v4000, %v3966
        %v4002 = vadd.f32 %v4001, %v3967
        %v4003 = vadd.f32 %v4002, %v3968
        %v4004 = vadd.f32 %v4003, %v3969
        %v4005 = vadd.f32 %v4004, %v3970
        %v4006 = vadd.f32 %v4005, %v3971
        %v4007 = vadd.f32 %v4006, %v3972
        %v4008 = vadd.f32 %v4007, %v3973
        %v4009 = vadd.f32 %v4008, %v3974
        %v4010 = vadd.f32 %v4009, %v3975
        %v4011 = vadd.f32 %v4010, %v3976
        %v4012 = vadd.f32 %v4011, %v3977
        %v4013 = vadd.f32 %v4012, %v3978
        %v4014 = vadd.f32 %v4013, %v3979
        %v4015 = vadd.f32 %v4014, %v3980
        %v4016 = vadd.f32 %v4015, %v3981
        %v4017 = vadd.f32 %v4016, %v3982
        %v4018 = vadd.f32 %v4017, %v3983
        %v4019 = vadd.f32 %v4018, %v3984
        %v4020 = vadd.f32 %v4019, %v3985
        %v4021 = vadd.f32 %v4020, %v3986
        %v4022 = vadd.f32 %v4021, %v3987
        %v4023 = vadd.f32 %v4022, %v3988
        %v4024 = vadd.f32 %v4023, %v3989
        %v4025 = vadd.f32 %v4024, %v3990
        %v4026 = vadd.f32 %v4025, %v3991
        %v4027 = vadd.f32 %v4026, %v3992
        %v4028 = vadd.f32 %v4027, %v3993
        %v4029 = vadd.f32 %v4028, %v3994
        %v4030 = vadd.f32 %v4029, %v3995
        %v4031 = vadd.f32 %v4030, %v3996
        %v4032 = vadd.f32 %v4031, %v3997
        %v4033 = vrot.slane %v4032, 4
        %v4034 = vadd.f32 %v4032, %v4033
        %v4035 = vrot.slane %v4034, 2
        %v4036 = vadd.f32 %v4034, %v4035
        %v4037 = vrot.slane %v4036, 1
        %v4038 = vadd.f32 %v4036, %v4037
        %v4039 = vmul.f32 %v4038, 0.00390625
        %v4040 = vld [vmem:[%s6] sm:$0xff]
        %v4041 = vld [vmem:[%s6 + $0x8] sm:$0xff]
        %v4042 = vld [vmem:[%s6 + $0x10] sm:$0xff]
        %v4043 = vld [vmem:[%s6 + $0x18] sm:$0xff]
        %v4044 = vld [vmem:[%s6 + $0x20] sm:$0xff]
        %v4045 = vld [vmem:[%s6 + $0x28] sm:$0xff]
        %v4046 = vld [vmem:[%s6 + $0x30] sm:$0xff]
        %v4047 = vld [vmem:[%s6 + $0x38] sm:$0xff]
        %v4048 = vld [vmem:[%s6 + $0x40] sm:$0xff]
        %v4049 = vld [vmem:[%s6 + $0x48] sm:$0xff]
        %v4050 = vld [vmem:[%s6 + $0x50] sm:$0xff]
        %v4051 = vld [vmem:[%s6 + $0x58] sm:$0xff]
        %v4052 = vld [vmem:[%s6 + $0x60] sm:$0xff]
        %v4053 = vld [vmem:[%s6 + $0x68] sm:$0xff]
        %v4054 = vld [vmem:[%s6 + $0x70] sm:$0xff]
        %v4055 = vld [vmem:[%s6 + $0x78] sm:$0xff]
        %v4056 = vld [vmem:[%s7] sm:$0x1]
        %4057 = vmatpush.msra.mxu0 %v4055
        %4058 = vmatpush.msra.mxu0 %v4054
        %4059 = vmatpush.msra.mxu0 %v4053
        %4060 = vmatpush.msra.mxu0 %v4052
        %4061 = vmatpush.msra.mxu0 %v4051
        %4062 = vmatpush.msra.mxu0 %v4050
        %4063 = vmatpush.msra.mxu0 %v4049
        %4064 = vmatpush.msra.mxu0 %v4048
        %4065 = vmatpush.msra.mxu0 %v4047
        %4066 = vmatpush.msra.mxu0 %v4046
        %4067 = vmatpush.msra.mxu0 %v4045
        %4068 = vmatpush.msra.mxu0 %v4044
        %4069 = vmatpush.msra.mxu0 %v4043
        %4070 = vmatpush.msra.mxu0 %v4042
        %4071 = vmatpush.msra.mxu0 %v4041
        %4072 = vmatpush.msra.mxu0 %v4040
        %4073 = vmatmul.f32.gmra.mxu0 %v4039
        %v4074 = vpop.f32.mrf.mxu0
        %v4075 = vadd.f32 %v4056, %v4074
        %4076 = vdwg.mxu0
        %4077 = vst [vmem:[%s297] sm:$0x1] %v4075
        %s4078 = sand.u32 %s203, 1
        %s4079 = scalar_lea.sflag [#allocation3], %s4078
        %s4080 = sand.u32 %s203, 1
        %s4081 = scalar_lea.vmem [#allocation2], %s4080
        // Predicated region
        $region53: #{tpu_custom_call.1} parent=51 // pred_check
          %p4082 = pneg %p213
        $region54: #{tpu_custom_call.1} parent=51 // pred_check_branch
          %4084 = sbr.rel (%p4082) target = $region56
        $region55: #{tpu_custom_call.1} parent=51 // pred_region
          %4086 = vsyncadd %s4079, 0
          %s4087 = scalar_lea.hbm %s8, %s22
          %s4089 = sshll.u32 %s4081, 4
          %s4090 = int_to_ptr.vmem [resolvable:$true] %s4089
          %s4091 = sshll.u32 %s4087, 4
          %s4092 = int_to_ptr.hbm [resolvable:$true] %s4091
          %4094 = dma.vmem_to_hbm [thread:$0]  %s4090, 16, %s4092, %s4079
        $region56: #{tpu_custom_call.1} parent=51 // pred_fallthru
          _
      $region52: #{tpu_custom_call.1} parent=5 // pred_fallthru
        _
      %p4095 = scmp.le.s32.totalorder 2, %s17
      // Predicated region
      $region57: #{tpu_custom_call.1} parent=5 // pred_check
        %p4096 = pneg %p4095
      $region58: #{tpu_custom_call.1} parent=5 // pred_check_branch
        %4098 = sbr.rel (%p4096) target = $region60
      $region59: #{tpu_custom_call.1} parent=5 // pred_region
        %s4099 = ssub.s32 %s17, 2
        // Predicated region
        $region61: #{tpu_custom_call.1} parent=59 // pred_check
          %p4100 = pneg %p219
        $region62: #{tpu_custom_call.1} parent=59 // pred_check_branch
          %4102 = sbr.rel (%p4100) target = $region64
        $region63: #{tpu_custom_call.1} parent=59 // pred_region
          %s4103 = sand.u32 %s204, 1
          %s4104 = scalar_lea.sflag [#allocation3], %s4103
          %s4105 = sand.u32 %s204, 1
          %s4106 = scalar_lea.vmem [#allocation2], %s4105
          %4108 = dma.done %s4104, 16
        $region64: #{tpu_custom_call.1} parent=59 // pred_fallthru
          _
      $region60: #{tpu_custom_call.1} parent=5 // pred_fallthru
        _
    $region6: #{tpu_custom_call.1} parent=1 // loop_footer
      %s21 = sadd.s32 1, %s17
    $region7: #{tpu_custom_call.1} parent=1 // loop_footer_branch
      %16 = sbr.rel target = $region3
    $region8: #{tpu_custom_call.1} parent=1 // loop_exit
      _
    %4109 = vsyncpa [#allocation3], 1
    %s4110 = scalar_lea.sflag [#allocation3], 1
    %4111 = vsyncpa %s4110, 1

</llo_original>
